<compile_context>
chip_gen: v7x
topology: tpu7x:2x2x1
jax: 0.10.0
libtpu: 0.0.40
codegen_flags: <defaults>
</compile_context>

<pallas_src>
import functools

import jax
import jax.numpy as jnp
from jax.experimental import pallas as pl
from jax.experimental.pallas import tpu as pltpu

FEATURES = 16            # latent dim
IN_DIM = 3072            # 3 * 32 * 32 flattened image
HID = 128
MULV_COLS = 128          # mu|log_var slab padded to one full 128-lane tile


def _round_up(x, m):
    return (x + m - 1) // m * m


def _choose_tile_b(B, max_tile=256):
    """Adaptive batch tile: bounds padding waste (no fixed round-up-to-256) and keeps
    >= 2 (even) grid steps when the batch allows it, so input/output DMAs overlap with
    compute of adjacent tiles and both v7x TensorCores are used."""
    if _round_up(B, 8) <= 8:
        return 8
    steps = max(2, -(-B // max_tile))      # cdiv, at least 2 steps
    if steps % 2:
        steps += 1                         # even step count -> balanced megacore
    tile = _round_up(-(-B // steps), 8)
    return min(tile, max_tile)


def vae_kernel(x_ref, w1_ref, b1_ref, w2_ref, b2_ref,
               w3_ref, b3_ref, w4_ref, b4_ref, eps_ref,
               recon_ref, mulv_ref):
    # enc1 + ReLU   (bf16 operands -> f32 MXU accumulation; astype is a no-op for bf16 x)
    x = x_ref[...].astype(jnp.bfloat16)                      # (tB, 3072)
    h1 = jnp.dot(x, w1_ref[...], preferred_element_type=jnp.float32) + b1_ref[...]
    h1 = jnp.maximum(h1, 0.0)                                # (tB, 128)

    # enc2 -> (tB, 128) lane-dense slab; cols [:F] = mu, [F:2F] = log_var, rest zero
    h2 = jnp.dot(h1.astype(jnp.bfloat16), w2_ref[...],
                 preferred_element_type=jnp.float32) + b2_ref[...]
    mu = h2[:, :FEATURES]
    log_var = h2[:, FEATURES:2 * FEATURES]

    # reparameterize: z = mu + eps * exp(0.5 * log_var)   (exp on EUP, f32)
    z = mu + eps_ref[...] * jnp.exp(0.5 * log_var)           # (tB, F)

    # dec1 + ReLU
    h3 = jnp.dot(z.astype(jnp.bfloat16), w3_ref[...],
                 preferred_element_type=jnp.float32) + b3_ref[...]
    h3 = jnp.maximum(h3, 0.0)                                # (tB, 128)

    # dec2 + sigmoid: exp + approx reciprocal use the EUP slot; f32 math (v5e-safe),
    # clip keeps [0,1], store as bf16 (halves the dominant HBM write stream).
    logits = jnp.dot(h3.astype(jnp.bfloat16), w4_ref[...],
                     preferred_element_type=jnp.float32) + b4_ref[...]
    sig = pl.reciprocal(1.0 + jnp.exp(-logits), approx=True)
    recon_ref[...] = jnp.clip(sig, 0.0, 1.0).astype(recon_ref.dtype)   # (tB, 3072) bf16

    # single lane-dense f32 output slab for (mu | log_var | zero-pad); split in wrapper
    mulv_ref[...] = h2                                       # (tB, 128)


def prepare_params(params):
    """One-time parameter preprocessing — call OUTSIDE the hot path.
    Casts weights to bf16 (halves HBM weight traffic, no per-call convert ops) and
    zero-pads the enc2 output dimension to 128 lanes for an unmasked mu|log_var store."""
    w1, b1, w2, b2, w3, b3, w4, b4 = params
    pad = MULV_COLS - 2 * FEATURES
    w2 = jnp.pad(w2, ((0, 0), (0, pad)))
    b2 = jnp.pad(b2, ((0, 0), (0, pad)))
    bf = jnp.bfloat16
    f32 = jnp.float32
    return (w1.astype(bf), b1.astype(f32),
            w2.astype(bf), b2.astype(f32),
            w3.astype(bf), b3.astype(f32),
            w4.astype(bf), b4.astype(f32))


@functools.partial(jax.jit, static_argnames=("max_tile_b",))
def vae_forward(x, prepared_params, eps, *, max_tile_b=256):
    """x: (B, 3072) f32 or bf16; prepared_params from prepare_params(); eps: (B, 16) f32."""
    B = x.shape[0]
    w1, b1, w2, b2, w3, b3, w4, b4 = prepared_params

    tile_b = _choose_tile_b(B, max_tile_b)
    b_pad = _round_up(B, tile_b)
    if b_pad != B:
        x = jnp.pad(x, ((0, b_pad - B), (0, 0)))
        eps = jnp.pad(eps, ((0, b_pad - B), (0, 0)))

    grid = (b_pad // tile_b,)

    def batch_spec(cols):
        return pl.BlockSpec((tile_b, cols), lambda i: (i, 0))

    def const_spec(shape):
        # Same block index every grid step -> weights/biases stay VMEM-resident.
        return pl.BlockSpec(shape, lambda i: (0, 0))

    recon, mulv = pl.pallas_call(
        vae_kernel,
        grid=grid,
        in_specs=[
            batch_spec(IN_DIM),               # x
            const_spec((IN_DIM, HID)),        # w1  (bf16)
            const_spec((1, HID)),             # b1
            const_spec((HID, MULV_COLS)),     # w2  (bf16, padded to 128 cols)
            const_spec((1, MULV_COLS)),       # b2
            const_spec((FEATURES, HID)),      # w3  (bf16)
            const_spec((1, HID)),             # b3
            const_spec((HID, IN_DIM)),        # w4  (bf16)
            const_spec((1, IN_DIM)),          # b4
            batch_spec(FEATURES),             # eps
        ],
        out_specs=(
            batch_spec(IN_DIM),               # reconstruction (bf16)
            batch_spec(MULV_COLS),            # mu | log_var | pad (f32, lane-dense)
        ),
        out_shape=(
            jax.ShapeDtypeStruct((b_pad, IN_DIM), jnp.bfloat16),
            jax.ShapeDtypeStruct((b_pad, MULV_COLS), jnp.float32),
        ),
        compiler_params=pltpu.CompilerParams(
            dimension_semantics=("parallel",),
            vmem_limit_bytes=48 << 20,        # > v5e's 16 MiB scoped default, < v7x's 64 MiB physical
        ),
    )(x, w1, b1, w2, b2, w3, b3, w4, b4, eps)

    recon = recon[:B]                          # kept bf16 — cast up only if a consumer needs f32
    mu = mulv[:B, :FEATURES]
    log_var = mulv[:B, FEATURES:2 * FEATURES]
    return recon, mu, log_var


def vae_reference(x, prepared_params, eps):
    """Pure-JAX reference with the same bf16 matmul operands (f32 everything else)."""
    w1, b1, w2, b2, w3, b3, w4, b4 = prepared_params
    bf, f32 = jnp.bfloat16, jnp.float32
    h1 = jnp.maximum(jnp.dot(x.astype(bf), w1, preferred_element_type=f32) + b1, 0.0)
    h2 = jnp.dot(h1.astype(bf), w2, preferred_element_type=f32) + b2
    mu, log_var = h2[:, :FEATURES], h2[:, FEATURES:2 * FEATURES]
    z = mu + eps * jnp.exp(0.5 * log_var)
    h3 = jnp.maximum(jnp.dot(z.astype(bf), w3, preferred_element_type=f32) + b3, 0.0)
    logits = jnp.dot(h3.astype(bf), w4, preferred_element_type=f32) + b4
    return jax.nn.sigmoid(logits), mu, log_var


def init_params(key):
    ks = jax.random.split(key, 8)

    def lin(kw, kb, fan_in, fan_out):
        # deterministic small init; weight stored as (in, out)
        w = jax.random.normal(kw, (fan_in, fan_out), jnp.float32) * 0.02
        b = jax.random.normal(kb, (1, fan_out), jnp.float32) * 0.01
        return w, b

    w1, b1 = lin(ks[0], ks[1], IN_DIM, HID)
    w2, b2 = lin(ks[2], ks[3], HID, 2 * FEATURES)
    w3, b3 = lin(ks[4], ks[5], FEATURES, HID)
    w4, b4 = lin(ks[6], ks[7], HID, IN_DIM)
    return (w1, b1, w2, b2, w3, b3, w4, b4)


if __name__ == "__main__":
    key = jax.random.PRNGKey(0)
    k_param, k_x, k_eps = jax.random.split(key, 3)

    B = 8
    raw_params = init_params(k_param)
    params = prepare_params(raw_params)        # one-time bf16 conversion + enc2 padding
    x = jax.random.uniform(k_x, (B, IN_DIM), jnp.float32)
    # eps ~ N(0,1); same role as torch.randn_like(std), drawn host-side so the kernel
    # is deterministic and checkable against the reference.
    # TODO(synk): in-kernel sampling via pltpu.prng_* would fuse the randn as well.
    eps = jax.random.normal(k_eps, (B, FEATURES), jnp.float32)

    recon, mu, log_var = vae_forward(x, params, eps)
    jax.block_until_ready((recon, mu, log_var))

    assert recon.shape == (B, IN_DIM) and recon.dtype == jnp.bfloat16
    assert mu.shape == (B, FEATURES)
    assert log_var.shape == (B, FEATURES)
    recon_f32 = recon.astype(jnp.float32)
    assert bool(jnp.all(jnp.isfinite(recon_f32)))
    assert bool(jnp.all((recon_f32 >= 0.0) & (recon_f32 <= 1.0)))

    r_ref, mu_ref, lv_ref = vae_reference(x, params, eps)
    assert bool(jnp.allclose(mu, mu_ref, atol=5e-3, rtol=1e-2))
    assert bool(jnp.allclose(log_var, lv_ref, atol=5e-3, rtol=1e-2))
    # tolerance covers the approx reciprocal (~1e-3) plus bf16 recon quantization (~4e-3)
    assert bool(jnp.allclose(recon_f32, r_ref, atol=2e-2, rtol=0.0))
    print("KERNEL_OK")
</pallas_src>

<mosaic_0001>
module attributes {stable_mosaic.version = 11 : i64} {
  func.func @vae_kernel(%arg0: i32, %arg1: memref<8x3072xf32, #tpu.memory_space<vmem>>, %arg2: memref<3072x128xbf16, #tpu.memory_space<vmem>>, %arg3: memref<1x128xf32, #tpu.memory_space<vmem>>, %arg4: memref<128x128xbf16, #tpu.memory_space<vmem>>, %arg5: memref<1x128xf32, #tpu.memory_space<vmem>>, %arg6: memref<16x128xbf16, #tpu.memory_space<vmem>>, %arg7: memref<1x128xf32, #tpu.memory_space<vmem>>, %arg8: memref<128x3072xbf16, #tpu.memory_space<vmem>>, %arg9: memref<1x3072xf32, #tpu.memory_space<vmem>>, %arg10: memref<8x16xf32, #tpu.memory_space<vmem>>, %arg11: memref<8x3072xbf16, #tpu.memory_space<vmem>>, %arg12: memref<8x128xf32, #tpu.memory_space<vmem>>) attributes {dimension_semantics = [#tpu.dimension_semantics<parallel>], iteration_bounds = array<i64: 1>, scalar_prefetch = 0 : i64, scratch_operands = 0 : i64, tpu.core_type = #tpu.core_type<tc>, window_params = [{transform_indices = @transform_0, window_bounds = array<i64: 8, 3072>}, {pipeline_mode = #tpu.pipeline_mode<synchronous>, transform_indices = @transform_1, window_bounds = array<i64: 3072, 128>}, {pipeline_mode = #tpu.pipeline_mode<synchronous>, transform_indices = @transform_2, window_bounds = array<i64: 1, 128>}, {pipeline_mode = #tpu.pipeline_mode<synchronous>, transform_indices = @transform_3, window_bounds = array<i64: 128, 128>}, {pipeline_mode = #tpu.pipeline_mode<synchronous>, transform_indices = @transform_4, window_bounds = array<i64: 1, 128>}, {pipeline_mode = #tpu.pipeline_mode<synchronous>, transform_indices = @transform_5, window_bounds = array<i64: 16, 128>}, {pipeline_mode = #tpu.pipeline_mode<synchronous>, transform_indices = @transform_6, window_bounds = array<i64: 1, 128>}, {pipeline_mode = #tpu.pipeline_mode<synchronous>, transform_indices = @transform_7, window_bounds = array<i64: 128, 3072>}, {pipeline_mode = #tpu.pipeline_mode<synchronous>, transform_indices = @transform_8, window_bounds = array<i64: 1, 3072>}, {transform_indices = @transform_9, window_bounds = array<i64: 8, 16>}, {transform_indices = @transform_10, window_bounds = array<i64: 8, 3072>}, {transform_indices = @transform_11, window_bounds = array<i64: 8, 128>}]} {
    %c0 = arith.constant 0 : index
    %c0_0 = arith.constant 0 : index
    %0 = vector.load %arg1[%c0, %c0_0] : memref<8x3072xf32, #tpu.memory_space<vmem>>, vector<8x3072xf32>
    %1 = arith.truncf %0 : vector<8x3072xf32> to vector<8x3072xbf16>
    %c0_1 = arith.constant 0 : index
    %c0_2 = arith.constant 0 : index
    %2 = vector.load %arg2[%c0_1, %c0_2] : memref<3072x128xbf16, #tpu.memory_space<vmem>>, vector<3072x128xbf16>
    %cst = arith.constant dense<0.000000e+00> : vector<8x128xf32>
    %3 = tpu.matmul %1, %2, %cst {dimension_numbers = #tpu.dot_dimension_numbers<[1], [0], [0], [1], [0, 0, 1, 1], [], []>} : vector<8x3072xbf16>, vector<3072x128xbf16>, vector<8x128xf32> -> vector<8x128xf32>
    %c0_3 = arith.constant 0 : index
    %c0_4 = arith.constant 0 : index
    %4 = vector.load %arg3[%c0_3, %c0_4] : memref<1x128xf32, #tpu.memory_space<vmem>>, vector<1x128xf32>
    %5 = vector.broadcast %4 : vector<1x128xf32> to vector<8x128xf32>
    %6 = arith.addf %3, %5 : vector<8x128xf32>
    %cst_5 = arith.constant 0.000000e+00 : f32
    %7 = vector.broadcast %cst_5 : f32 to vector<8x128xf32>
    %8 = arith.maximumf %6, %7 : vector<8x128xf32>
    %9 = arith.truncf %8 : vector<8x128xf32> to vector<8x128xbf16>
    %c0_6 = arith.constant 0 : index
    %c0_7 = arith.constant 0 : index
    %10 = vector.load %arg4[%c0_6, %c0_7] : memref<128x128xbf16, #tpu.memory_space<vmem>>, vector<128x128xbf16>
    %cst_8 = arith.constant dense<0.000000e+00> : vector<8x128xf32>
    %11 = tpu.matmul %9, %10, %cst_8 {dimension_numbers = #tpu.dot_dimension_numbers<[1], [0], [0], [1], [0, 0, 1, 1], [], []>} : vector<8x128xbf16>, vector<128x128xbf16>, vector<8x128xf32> -> vector<8x128xf32>
    %c0_9 = arith.constant 0 : index
    %c0_10 = arith.constant 0 : index
    %12 = vector.load %arg5[%c0_9, %c0_10] : memref<1x128xf32, #tpu.memory_space<vmem>>, vector<1x128xf32>
    %13 = vector.broadcast %12 : vector<1x128xf32> to vector<8x128xf32>
    %14 = arith.addf %11, %13 : vector<8x128xf32>
    %15 = vector.extract_strided_slice %14 {offsets = [0, 0], sizes = [8, 16], strides = [1, 1]} : vector<8x128xf32> to vector<8x16xf32>
    %16 = vector.extract_strided_slice %14 {offsets = [0, 16], sizes = [8, 16], strides = [1, 1]} : vector<8x128xf32> to vector<8x16xf32>
    %c0_11 = arith.constant 0 : index
    %c0_12 = arith.constant 0 : index
    %17 = vector.load %arg10[%c0_11, %c0_12] : memref<8x16xf32, #tpu.memory_space<vmem>>, vector<8x16xf32>
    %cst_13 = arith.constant 5.000000e-01 : f32
    %18 = vector.broadcast %cst_13 : f32 to vector<8x16xf32>
    %19 = arith.mulf %18, %16 : vector<8x16xf32>
    %20 = math.exp %19 : vector<8x16xf32>
    %21 = arith.mulf %17, %20 : vector<8x16xf32>
    %22 = arith.addf %15, %21 : vector<8x16xf32>
    %23 = arith.truncf %22 : vector<8x16xf32> to vector<8x16xbf16>
    %c0_14 = arith.constant 0 : index
    %c0_15 = arith.constant 0 : index
    %24 = vector.load %arg6[%c0_14, %c0_15] : memref<16x128xbf16, #tpu.memory_space<vmem>>, vector<16x128xbf16>
    %cst_16 = arith.constant dense<0.000000e+00> : vector<8x128xf32>
    %25 = tpu.matmul %23, %24, %cst_16 {dimension_numbers = #tpu.dot_dimension_numbers<[1], [0], [0], [1], [0, 0, 1, 1], [], []>} : vector<8x16xbf16>, vector<16x128xbf16>, vector<8x128xf32> -> vector<8x128xf32>
    %c0_17 = arith.constant 0 : index
    %c0_18 = arith.constant 0 : index
    %26 = vector.load %arg7[%c0_17, %c0_18] : memref<1x128xf32, #tpu.memory_space<vmem>>, vector<1x128xf32>
    %27 = vector.broadcast %26 : vector<1x128xf32> to vector<8x128xf32>
    %28 = arith.addf %25, %27 : vector<8x128xf32>
    %cst_19 = arith.constant 0.000000e+00 : f32
    %29 = vector.broadcast %cst_19 : f32 to vector<8x128xf32>
    %30 = arith.maximumf %28, %29 : vector<8x128xf32>
    %31 = arith.truncf %30 : vector<8x128xf32> to vector<8x128xbf16>
    %c0_20 = arith.constant 0 : index
    %c0_21 = arith.constant 0 : index
    %32 = vector.load %arg8[%c0_20, %c0_21] : memref<128x3072xbf16, #tpu.memory_space<vmem>>, vector<128x3072xbf16>
    %cst_22 = arith.constant dense<0.000000e+00> : vector<8x3072xf32>
    %33 = tpu.matmul %31, %32, %cst_22 {dimension_numbers = #tpu.dot_dimension_numbers<[1], [0], [0], [1], [0, 0, 1, 1], [], []>} : vector<8x128xbf16>, vector<128x3072xbf16>, vector<8x3072xf32> -> vector<8x3072xf32>
    %c0_23 = arith.constant 0 : index
    %c0_24 = arith.constant 0 : index
    %34 = vector.load %arg9[%c0_23, %c0_24] : memref<1x3072xf32, #tpu.memory_space<vmem>>, vector<1x3072xf32>
    %35 = vector.broadcast %34 : vector<1x3072xf32> to vector<8x3072xf32>
    %36 = arith.addf %33, %35 : vector<8x3072xf32>
    %cst_25 = arith.constant 0.000000e+00 : f32
    %37 = vector.broadcast %cst_25 : f32 to vector<8x3072xf32>
    %38 = arith.subf %37, %36 : vector<8x3072xf32>
    %39 = math.exp %38 : vector<8x3072xf32>
    %cst_26 = arith.constant 1.000000e+00 : f32
    %40 = vector.broadcast %cst_26 : f32 to vector<8x3072xf32>
    %41 = arith.addf %40, %39 : vector<8x3072xf32>
    %42 = tpu.reciprocal %41 {approx = true} : vector<8x3072xf32> -> vector<8x3072xf32>
    %cst_27 = arith.constant 0.000000e+00 : f32
    %cst_28 = arith.constant 1.000000e+00 : f32
    %43 = vector.broadcast %cst_27 : f32 to vector<8x3072xf32>
    %44 = arith.maximumf %43, %42 : vector<8x3072xf32>
    %45 = vector.broadcast %cst_28 : f32 to vector<8x3072xf32>
    %46 = arith.minimumf %45, %44 : vector<8x3072xf32>
    %47 = arith.truncf %46 : vector<8x3072xf32> to vector<8x3072xbf16>
    %c0_29 = arith.constant 0 : index
    %c0_30 = arith.constant 0 : index
    %48 = vector.load %arg11[%c0_29, %c0_30] : memref<8x3072xbf16, #tpu.memory_space<vmem>>, vector<8x3072xbf16>
    tpu.vector_store %arg11[%c0_29, %c0_30], %47 {strides = array<i32>} : memref<8x3072xbf16, #tpu.memory_space<vmem>>, vector<8x3072xbf16>,
    %c0_31 = arith.constant 0 : index
    %c0_32 = arith.constant 0 : index
    %49 = vector.load %arg12[%c0_31, %c0_32] : memref<8x128xf32, #tpu.memory_space<vmem>>, vector<8x128xf32>
    tpu.vector_store %arg12[%c0_31, %c0_32], %14 {strides = array<i32>} : memref<8x128xf32, #tpu.memory_space<vmem>>, vector<8x128xf32>,
    return
  }
  func.func @transform_0(%arg0: i32) -> (i32, i32) {
    %c0_i32 = arith.constant 0 : i32
    %c0_i32_0 = arith.constant 0 : i32
    return %arg0, %c0_i32 : i32, i32
  }
  func.func @transform_1(%arg0: i32) -> (i32, i32) {
    %c0_i32 = arith.constant 0 : i32
    %c0_i32_0 = arith.constant 0 : i32
    %c0_i32_1 = arith.constant 0 : i32
    return %c0_i32, %c0_i32_0 : i32, i32
  }
  func.func @transform_2(%arg0: i32) -> (i32, i32) {
    %c0_i32 = arith.constant 0 : i32
    %c0_i32_0 = arith.constant 0 : i32
    %c0_i32_1 = arith.constant 0 : i32
    return %c0_i32, %c0_i32_0 : i32, i32
  }
  func.func @transform_3(%arg0: i32) -> (i32, i32) {
    %c0_i32 = arith.constant 0 : i32
    %c0_i32_0 = arith.constant 0 : i32
    %c0_i32_1 = arith.constant 0 : i32
    return %c0_i32, %c0_i32_0 : i32, i32
  }
  func.func @transform_4(%arg0: i32) -> (i32, i32) {
    %c0_i32 = arith.constant 0 : i32
    %c0_i32_0 = arith.constant 0 : i32
    %c0_i32_1 = arith.constant 0 : i32
    return %c0_i32, %c0_i32_0 : i32, i32
  }
  func.func @transform_5(%arg0: i32) -> (i32, i32) {
    %c0_i32 = arith.constant 0 : i32
    %c0_i32_0 = arith.constant 0 : i32
    %c0_i32_1 = arith.constant 0 : i32
    return %c0_i32, %c0_i32_0 : i32, i32
  }
  func.func @transform_6(%arg0: i32) -> (i32, i32) {
    %c0_i32 = arith.constant 0 : i32
    %c0_i32_0 = arith.constant 0 : i32
    %c0_i32_1 = arith.constant 0 : i32
    return %c0_i32, %c0_i32_0 : i32, i32
  }
  func.func @transform_7(%arg0: i32) -> (i32, i32) {
    %c0_i32 = arith.constant 0 : i32
    %c0_i32_0 = arith.constant 0 : i32
    %c0_i32_1 = arith.constant 0 : i32
    return %c0_i32, %c0_i32_0 : i32, i32
  }
  func.func @transform_8(%arg0: i32) -> (i32, i32) {
    %c0_i32 = arith.constant 0 : i32
    %c0_i32_0 = arith.constant 0 : i32
    %c0_i32_1 = arith.constant 0 : i32
    return %c0_i32, %c0_i32_0 : i32, i32
  }
  func.func @transform_9(%arg0: i32) -> (i32, i32) {
    %c0_i32 = arith.constant 0 : i32
    %c0_i32_0 = arith.constant 0 : i32
    return %arg0, %c0_i32 : i32, i32
  }
  func.func @transform_10(%arg0: i32) -> (i32, i32) {
    %c0_i32 = arith.constant 0 : i32
    %c0_i32_0 = arith.constant 0 : i32
    return %arg0, %c0_i32 : i32, i32
  }
  func.func @transform_11(%arg0: i32) -> (i32, i32) {
    %c0_i32 = arith.constant 0 : i32
    %c0_i32_0 = arith.constant 0 : i32
    return %arg0, %c0_i32 : i32, i32
  }
}

</mosaic_0001>

<llo_original>
// kernel: vae_forward.1
$region0: #{vae_forward.1}
  #allocation0 [shape = 'u32[]', space=smem, size = 0x4, offset = 0x4, fixed_abs, tag = 'smem constant byte address 0x4 - core index']
  #allocation1 [shape = 'u32[144,128]{1,0:T(1,128)}', space=vmem, size = 0x12000, scoped, tag = 'internal scratch']
  %s0 = inlined_call_operand.hbm [shape: f32[8,3072], index: 0, kind: input, shape index: {}]
  %s1 = inlined_call_operand.hbm [shape: bf16[3072,128], index: 1, kind: input, shape index: {}]
  %s2 = inlined_call_operand.vmem [shape: f32[1,128], index: 2, kind: input, shape index: {}]
  %s3 = inlined_call_operand.hbm [shape: bf16[128,128], index: 3, kind: input, shape index: {}]
  %s4 = inlined_call_operand.vmem [shape: f32[1,128], index: 4, kind: input, shape index: {}]
  %s5 = inlined_call_operand.hbm [shape: bf16[16,128], index: 5, kind: input, shape index: {}]
  %s6 = inlined_call_operand.hbm [shape: f32[1,128], index: 6, kind: input, shape index: {}]
  %s7 = inlined_call_operand.hbm [shape: bf16[128,3072], index: 7, kind: input, shape index: {}]
  %s8 = inlined_call_operand.vmem [shape: f32[1,3072], index: 8, kind: input, shape index: {}]
  %s9 = inlined_call_operand.vmem [shape: f32[8,16], index: 9, kind: input, shape index: {}]
  %s10 = inlined_call_operand.hbm [shape: bf16[8,3072], index: 10, kind: output, shape index: {0}]
  %s11 = inlined_call_operand.vmem [shape: f32[8,128], index: 11, kind: output, shape index: {1}]
  %12 = xla_tuple %s10, %s11
  %s13 = sld [smem:[#allocation0]]
  $region82: #{vae_forward.1} parent=0
    _
  %s15 = ssub.s32 1, %s13
  %s16 = scalar_select 0, %s15, %s13
  $region1: #{vae_forward.1} parent=0
    #allocation2 [shape = 'u8[98304]{0}', space=vmem, size = 0x18000, scoped, tag = 'input window, operand 0, single buffered']
    #allocation3 [shape = 's32[1]{0}', space=sflag, size = 0x4, scoped, tag = 'scoped memory for vae_forward.1']
    #allocation4 [shape = 's32[1]{0}', space=sflag, size = 0x4, scoped, tag = 'scoped memory for vae_forward.1']
    #allocation5 [shape = 'u8[786432]{0}', space=vmem, size = 0xc0000, scoped, tag = 'input window, operand 1, single buffered']
    #allocation6 [shape = 's32[1]{0}', space=sflag, size = 0x4, scoped, tag = 'scoped memory for vae_forward.1']
    #allocation7 [shape = 'u8[32768]{0}', space=vmem, size = 0x8000, scoped, tag = 'input window, operand 3, single buffered']
    #allocation8 [shape = 'u8[4096]{0}', space=vmem, size = 0x1000, scoped, tag = 'input window, operand 5, single buffered']
    #allocation9 [shape = 's32[1]{0}', space=sflag, size = 0x4, scoped, tag = 'scoped memory for vae_forward.1']
    #allocation10 [shape = 'u8[512]{0}', space=vmem, size = 0x400, scoped, tag = 'input window, operand 6, single buffered']
    #allocation11 [shape = 'u8[786432]{0}', space=vmem, size = 0xc0000, scoped, tag = 'input window, operand 7, single buffered']
    #allocation12 [shape = 's32[1]{0}', space=sflag, size = 0x4, scoped, tag = 'scoped memory for vae_forward.1']
    #allocation13 [shape = 'u8[49152]{0}', space=vmem, size = 0xc000, scoped, tag = 'output window, operand 0, single buffered']
    %17 = vsyncpa [#allocation3], 0
    %18 = vsyncpa [#allocation6], 0
    %19 = vsyncpa [#allocation9], 0
    %20 = vsyncpa [#allocation12], 0
    %21 = vsyncpa [#allocation4], 0
    // Predicated region
    $region2: #{vae_forward.1} parent=1 // pred_check
      _
    $region3: #{vae_forward.1} parent=1 // pred_check_branch
      %23 = sbr.rel (0) target = $region5
    $region4: #{vae_forward.1} parent=1 // pred_region
      %s25 = ssub.s32 3072, 3072
      %26 = vsyncadd [#allocation3], %s25
      %s28 = sshll.u32 [#allocation2], 4
      %s29 = int_to_ptr.vmem [resolvable:$true] %s28
      %31 = dma.hbm_to_vmem [thread:$0]  %s0, 3072, %s29, [#allocation3]
    $region5: #{vae_forward.1} parent=1 // pred_fallthru
      _
    // Predicated region
    $region6: #{vae_forward.1} parent=1 // pred_check
      _
    $region7: #{vae_forward.1} parent=1 // pred_check_branch
      %33 = sbr.rel (0) target = $region9
    $region8: #{vae_forward.1} parent=1 // pred_region
      %s35 = ssub.s32 24576, 24576
      %36 = vsyncadd [#allocation6], %s35
      %s37 = sshll.u32 [#allocation5], 4
      %s38 = int_to_ptr.vmem [resolvable:$true] %s37
      %43 = dma.hbm_to_vmem [thread:$0]  %s1, 24576, %s38, [#allocation6], 64, 64, 4
    $region9: #{vae_forward.1} parent=1 // pred_fallthru
      _
    // Predicated region
    $region10: #{vae_forward.1} parent=1 // pred_check
      _
    $region11: #{vae_forward.1} parent=1 // pred_check_branch
      %45 = sbr.rel (0) target = $region13
    $region12: #{vae_forward.1} parent=1 // pred_region
      _
    $region13: #{vae_forward.1} parent=1 // pred_fallthru
      _
    // Predicated region
    $region14: #{vae_forward.1} parent=1 // pred_check
      _
    $region15: #{vae_forward.1} parent=1 // pred_check_branch
      %47 = sbr.rel (0) target = $region17
    $region16: #{vae_forward.1} parent=1 // pred_region
      %s49 = ssub.s32 1024, 1024
      %50 = vsyncadd [#allocation6], %s49
      %s51 = sshll.u32 [#allocation7], 4
      %s52 = int_to_ptr.vmem [resolvable:$true] %s51
      %57 = dma.hbm_to_vmem [thread:$0]  %s3, 1024, %s52, [#allocation6], 64, 64, 4
    $region17: #{vae_forward.1} parent=1 // pred_fallthru
      _
    // Predicated region
    $region18: #{vae_forward.1} parent=1 // pred_check
      _
    $region19: #{vae_forward.1} parent=1 // pred_check_branch
      %59 = sbr.rel (0) target = $region21
    $region20: #{vae_forward.1} parent=1 // pred_region
      _
    $region21: #{vae_forward.1} parent=1 // pred_fallthru
      _
    // Predicated region
    $region22: #{vae_forward.1} parent=1 // pred_check
      _
    $region23: #{vae_forward.1} parent=1 // pred_check_branch
      %61 = sbr.rel (0) target = $region25
    $region24: #{vae_forward.1} parent=1 // pred_region
      %s63 = ssub.s32 128, 128
      %64 = vsyncadd [#allocation9], %s63
      %s65 = sshll.u32 [#allocation8], 4
      %s66 = int_to_ptr.vmem [resolvable:$true] %s65
      %71 = dma.hbm_to_vmem [thread:$0]  %s5, 128, %s66, [#allocation9], 64, 64, 4
    $region25: #{vae_forward.1} parent=1 // pred_fallthru
      _
    // Predicated region
    $region26: #{vae_forward.1} parent=1 // pred_check
      _
    $region27: #{vae_forward.1} parent=1 // pred_check_branch
      %73 = sbr.rel (0) target = $region29
    $region28: #{vae_forward.1} parent=1 // pred_region
      %s75 = ssub.s32 16, 16
      %76 = vsyncadd [#allocation9], %s75
      %s78 = sshll.u32 [#allocation10], 4
      %s79 = int_to_ptr.vmem [resolvable:$true] %s78
      %81 = dma.hbm_to_vmem [thread:$0]  %s6, 16, %s79, [#allocation9]
    $region29: #{vae_forward.1} parent=1 // pred_fallthru
      _
    // Predicated region
    $region30: #{vae_forward.1} parent=1 // pred_check
      _
    $region31: #{vae_forward.1} parent=1 // pred_check_branch
      %83 = sbr.rel (0) target = $region33
    $region32: #{vae_forward.1} parent=1 // pred_region
      %s85 = ssub.s32 24576, 24576
      %86 = vsyncadd [#allocation12], %s85
      %s87 = sshll.u32 [#allocation11], 4
      %s88 = int_to_ptr.vmem [resolvable:$true] %s87
      %93 = dma.hbm_to_vmem [thread:$0]  %s7, 24576, %s88, [#allocation12], 1536, 1536, 96
    $region33: #{vae_forward.1} parent=1 // pred_fallthru
      _
    // Predicated region
    $region34: #{vae_forward.1} parent=1 // pred_check
      _
    $region35: #{vae_forward.1} parent=1 // pred_check_branch
      %95 = sbr.rel (0) target = $region37
    $region36: #{vae_forward.1} parent=1 // pred_region
      _
    $region37: #{vae_forward.1} parent=1 // pred_fallthru
      _
    // Predicated region
    $region38: #{vae_forward.1} parent=1 // pred_check
      _
    $region39: #{vae_forward.1} parent=1 // pred_check_branch
      %97 = sbr.rel (0) target = $region41
    $region40: #{vae_forward.1} parent=1 // pred_region
      _
    $region41: #{vae_forward.1} parent=1 // pred_fallthru
      _
    // Predicated region
    $region42: #{vae_forward.1} parent=1 // pred_check
      _
    $region43: #{vae_forward.1} parent=1 // pred_check_branch
      %99 = sbr.rel (0) target = $region45
    $region44: #{vae_forward.1} parent=1 // pred_region
      %100 = dma.done [#allocation3], 3072
    $region45: #{vae_forward.1} parent=1 // pred_fallthru
      _
    // Predicated region
    $region46: #{vae_forward.1} parent=1 // pred_check
      _
    $region47: #{vae_forward.1} parent=1 // pred_check_branch
      %102 = sbr.rel (0) target = $region49
    $region48: #{vae_forward.1} parent=1 // pred_region
      %103 = dma.done [#allocation6], 24576
    $region49: #{vae_forward.1} parent=1 // pred_fallthru
      _
    // Predicated region
    $region50: #{vae_forward.1} parent=1 // pred_check
      _
    $region51: #{vae_forward.1} parent=1 // pred_check_branch
      %105 = sbr.rel (0) target = $region53
    $region52: #{vae_forward.1} parent=1 // pred_region
      %106 = dma.done [#allocation6], 1024
    $region53: #{vae_forward.1} parent=1 // pred_fallthru
      _
    // Predicated region
    $region54: #{vae_forward.1} parent=1 // pred_check
      _
    $region55: #{vae_forward.1} parent=1 // pred_check_branch
      %108 = sbr.rel (0) target = $region57
    $region56: #{vae_forward.1} parent=1 // pred_region
      %109 = dma.done [#allocation9], 128
    $region57: #{vae_forward.1} parent=1 // pred_fallthru
      _
    // Predicated region
    $region58: #{vae_forward.1} parent=1 // pred_check
      _
    $region59: #{vae_forward.1} parent=1 // pred_check_branch
      %111 = sbr.rel (0) target = $region61
    $region60: #{vae_forward.1} parent=1 // pred_region
      %112 = dma.done [#allocation9], 16
    $region61: #{vae_forward.1} parent=1 // pred_fallthru
      _
    // Predicated region
    $region62: #{vae_forward.1} parent=1 // pred_check
      _
    $region63: #{vae_forward.1} parent=1 // pred_check_branch
      %114 = sbr.rel (0) target = $region65
    $region64: #{vae_forward.1} parent=1 // pred_region
      %115 = dma.done [#allocation12], 24576
    $region65: #{vae_forward.1} parent=1 // pred_fallthru
      _
    %v117 = vld [vmem:[#allocation2] sm:$0xff]
    %v118 = vld [vmem:[#allocation2 + $0x8] sm:$0xff]
    %v119 = vld [vmem:[#allocation2 + $0x10] sm:$0xff]
    %v120 = vld [vmem:[#allocation2 + $0x18] sm:$0xff]
    %v121 = vld [vmem:[#allocation2 + $0x20] sm:$0xff]
    %v122 = vld [vmem:[#allocation2 + $0x28] sm:$0xff]
    %v123 = vld [vmem:[#allocation2 + $0x30] sm:$0xff]
    %v124 = vld [vmem:[#allocation2 + $0x38] sm:$0xff]
    %v125 = vld [vmem:[#allocation2 + $0x40] sm:$0xff]
    %v126 = vld [vmem:[#allocation2 + $0x48] sm:$0xff]
    %v127 = vld [vmem:[#allocation2 + $0x50] sm:$0xff]
    %v128 = vld [vmem:[#allocation2 + $0x58] sm:$0xff]
    %v129 = vld [vmem:[#allocation2 + $0x60] sm:$0xff]
    %v130 = vld [vmem:[#allocation2 + $0x68] sm:$0xff]
    %v131 = vld [vmem:[#allocation2 + $0x70] sm:$0xff]
    %v132 = vld [vmem:[#allocation2 + $0x78] sm:$0xff]
    %v133 = vld [vmem:[#allocation2 + $0x80] sm:$0xff]
    %v134 = vld [vmem:[#allocation2 + $0x88] sm:$0xff]
    %v135 = vld [vmem:[#allocation2 + $0x90] sm:$0xff]
    %v136 = vld [vmem:[#allocation2 + $0x98] sm:$0xff]
    %v137 = vld [vmem:[#allocation2 + $0xa0] sm:$0xff]
    %v138 = vld [vmem:[#allocation2 + $0xa8] sm:$0xff]
    %v139 = vld [vmem:[#allocation2 + $0xb0] sm:$0xff]
    %v140 = vld [vmem:[#allocation2 + $0xb8] sm:$0xff]
    %v141 = vpack.c.bf16 %v117, %v117
    %v142 = vpack.c.bf16 %v118, %v118
    %v143 = vpack.c.bf16 %v119, %v119
    %v144 = vpack.c.bf16 %v120, %v120
    %v145 = vpack.c.bf16 %v121, %v121
    %v146 = vpack.c.bf16 %v122, %v122
    %v147 = vpack.c.bf16 %v123, %v123
    %v148 = vpack.c.bf16 %v124, %v124
    %v149 = vpack.c.bf16 %v125, %v125
    %v150 = vpack.c.bf16 %v126, %v126
    %v151 = vpack.c.bf16 %v127, %v127
    %v152 = vpack.c.bf16 %v128, %v128
    %v153 = vpack.c.bf16 %v129, %v129
    %v154 = vpack.c.bf16 %v130, %v130
    %v155 = vpack.c.bf16 %v131, %v131
    %v156 = vpack.c.bf16 %v132, %v132
    %v157 = vpack.c.bf16 %v133, %v133
    %v158 = vpack.c.bf16 %v134, %v134
    %v159 = vpack.c.bf16 %v135, %v135
    %v160 = vpack.c.bf16 %v136, %v136
    %v161 = vpack.c.bf16 %v137, %v137
    %v162 = vpack.c.bf16 %v138, %v138
    %v163 = vpack.c.bf16 %v139, %v139
    %v164 = vpack.c.bf16 %v140, %v140
    %v165 = vld [vmem:[#allocation5] sm:$0xf]
    %v166 = vld [vmem:[#allocation5 + $0x4] sm:$0xf]
    %v167 = vld [vmem:[#allocation5 + $0x8] sm:$0xf]
    %v168 = vld [vmem:[#allocation5 + $0xc] sm:$0xf]
    %v169 = vld [vmem:[#allocation5 + $0x10] sm:$0xf]
    %v170 = vld [vmem:[#allocation5 + $0x14] sm:$0xf]
    %v171 = vld [vmem:[#allocation5 + $0x18] sm:$0xf]
    %v172 = vld [vmem:[#allocation5 + $0x1c] sm:$0xf]
    %v173 = vld [vmem:[#allocation5 + $0x20] sm:$0xf]
    %v174 = vld [vmem:[#allocation5 + $0x24] sm:$0xf]
    %v175 = vld [vmem:[#allocation5 + $0x28] sm:$0xf]
    %v176 = vld [vmem:[#allocation5 + $0x2c] sm:$0xf]
    %v177 = vld [vmem:[#allocation5 + $0x30] sm:$0xf]
    %v178 = vld [vmem:[#allocation5 + $0x34] sm:$0xf]
    %v179 = vld [vmem:[#allocation5 + $0x38] sm:$0xf]
    %v180 = vld [vmem:[#allocation5 + $0x3c] sm:$0xf]
    %v181 = vld [vmem:[#allocation5 + $0x40] sm:$0xf]
    %v182 = vld [vmem:[#allocation5 + $0x44] sm:$0xf]
    %v183 = vld [vmem:[#allocation5 + $0x48] sm:$0xf]
    %v184 = vld [vmem:[#allocation5 + $0x4c] sm:$0xf]
    %v185 = vld [vmem:[#allocation5 + $0x50] sm:$0xf]
    %v186 = vld [vmem:[#allocation5 + $0x54] sm:$0xf]
    %v187 = vld [vmem:[#allocation5 + $0x58] sm:$0xf]
    %v188 = vld [vmem:[#allocation5 + $0x5c] sm:$0xf]
    %v189 = vld [vmem:[#allocation5 + $0x60] sm:$0xf]
    %v190 = vld [vmem:[#allocation5 + $0x64] sm:$0xf]
    %v191 = vld [vmem:[#allocation5 + $0x68] sm:$0xf]
    %v192 = vld [vmem:[#allocation5 + $0x6c] sm:$0xf]
    %v193 = vld [vmem:[#allocation5 + $0x70] sm:$0xf]
    %v194 = vld [vmem:[#allocation5 + $0x74] sm:$0xf]
    %v195 = vld [vmem:[#allocation5 + $0x78] sm:$0xf]
    %v196 = vld [vmem:[#allocation5 + $0x7c] sm:$0xf]
    %v197 = vld [vmem:[#allocation5 + $0x80] sm:$0xf]
    %v198 = vld [vmem:[#allocation5 + $0x84] sm:$0xf]
    %v199 = vld [vmem:[#allocation5 + $0x88] sm:$0xf]
    %v200 = vld [vmem:[#allocation5 + $0x8c] sm:$0xf]
    %v201 = vld [vmem:[#allocation5 + $0x90] sm:$0xf]
    %v202 = vld [vmem:[#allocation5 + $0x94] sm:$0xf]
    %v203 = vld [vmem:[#allocation5 + $0x98] sm:$0xf]
    %v204 = vld [vmem:[#allocation5 + $0x9c] sm:$0xf]
    %v205 = vld [vmem:[#allocation5 + $0xa0] sm:$0xf]
    %v206 = vld [vmem:[#allocation5 + $0xa4] sm:$0xf]
    %v207 = vld [vmem:[#allocation5 + $0xa8] sm:$0xf]
    %v208 = vld [vmem:[#allocation5 + $0xac] sm:$0xf]
    %v209 = vld [vmem:[#allocation5 + $0xb0] sm:$0xf]
    %v210 = vld [vmem:[#allocation5 + $0xb4] sm:$0xf]
    %v211 = vld [vmem:[#allocation5 + $0xb8] sm:$0xf]
    %v212 = vld [vmem:[#allocation5 + $0xbc] sm:$0xf]
    %v213 = vld [vmem:[#allocation5 + $0xc0] sm:$0xf]
    %v214 = vld [vmem:[#allocation5 + $0xc4] sm:$0xf]
    %v215 = vld [vmem:[#allocation5 + $0xc8] sm:$0xf]
    %v216 = vld [vmem:[#allocation5 + $0xcc] sm:$0xf]
    %v217 = vld [vmem:[#allocation5 + $0xd0] sm:$0xf]
    %v218 = vld [vmem:[#allocation5 + $0xd4] sm:$0xf]
    %v219 = vld [vmem:[#allocation5 + $0xd8] sm:$0xf]
    %v220 = vld [vmem:[#allocation5 + $0xdc] sm:$0xf]
    %v221 = vld [vmem:[#allocation5 + $0xe0] sm:$0xf]
    %v222 = vld [vmem:[#allocation5 + $0xe4] sm:$0xf]
    %v223 = vld [vmem:[#allocation5 + $0xe8] sm:$0xf]
    %v224 = vld [vmem:[#allocation5 + $0xec] sm:$0xf]
    %v225 = vld [vmem:[#allocation5 + $0xf0] sm:$0xf]
    %v226 = vld [vmem:[#allocation5 + $0xf4] sm:$0xf]
    %v227 = vld [vmem:[#allocation5 + $0xf8] sm:$0xf]
    %v228 = vld [vmem:[#allocation5 + $0xfc] sm:$0xf]
    %v229 = vld [vmem:[#allocation5 + $0x100] sm:$0xf]
    %v230 = vld [vmem:[#allocation5 + $0x104] sm:$0xf]
    %v231 = vld [vmem:[#allocation5 + $0x108] sm:$0xf]
    %v232 = vld [vmem:[#allocation5 + $0x10c] sm:$0xf]
    %v233 = vld [vmem:[#allocation5 + $0x110] sm:$0xf]
    %v234 = vld [vmem:[#allocation5 + $0x114] sm:$0xf]
    %v235 = vld [vmem:[#allocation5 + $0x118] sm:$0xf]
    %v236 = vld [vmem:[#allocation5 + $0x11c] sm:$0xf]
    %v237 = vld [vmem:[#allocation5 + $0x120] sm:$0xf]
    %v238 = vld [vmem:[#allocation5 + $0x124] sm:$0xf]
    %v239 = vld [vmem:[#allocation5 + $0x128] sm:$0xf]
    %v240 = vld [vmem:[#allocation5 + $0x12c] sm:$0xf]
    %v241 = vld [vmem:[#allocation5 + $0x130] sm:$0xf]
    %v242 = vld [vmem:[#allocation5 + $0x134] sm:$0xf]
    %v243 = vld [vmem:[#allocation5 + $0x138] sm:$0xf]
    %v244 = vld [vmem:[#allocation5 + $0x13c] sm:$0xf]
    %v245 = vld [vmem:[#allocation5 + $0x140] sm:$0xf]
    %v246 = vld [vmem:[#allocation5 + $0x144] sm:$0xf]
    %v247 = vld [vmem:[#allocation5 + $0x148] sm:$0xf]
    %v248 = vld [vmem:[#allocation5 + $0x14c] sm:$0xf]
    %v249 = vld [vmem:[#allocation5 + $0x150] sm:$0xf]
    %v250 = vld [vmem:[#allocation5 + $0x154] sm:$0xf]
    %v251 = vld [vmem:[#allocation5 + $0x158] sm:$0xf]
    %v252 = vld [vmem:[#allocation5 + $0x15c] sm:$0xf]
    %v253 = vld [vmem:[#allocation5 + $0x160] sm:$0xf]
    %v254 = vld [vmem:[#allocation5 + $0x164] sm:$0xf]
    %v255 = vld [vmem:[#allocation5 + $0x168] sm:$0xf]
    %v256 = vld [vmem:[#allocation5 + $0x16c] sm:$0xf]
    %v257 = vld [vmem:[#allocation5 + $0x170] sm:$0xf]
    %v258 = vld [vmem:[#allocation5 + $0x174] sm:$0xf]
    %v259 = vld [vmem:[#allocation5 + $0x178] sm:$0xf]
    %v260 = vld [vmem:[#allocation5 + $0x17c] sm:$0xf]
    %v261 = vld [vmem:[#allocation5 + $0x180] sm:$0xf]
    %v262 = vld [vmem:[#allocation5 + $0x184] sm:$0xf]
    %v263 = vld [vmem:[#allocation5 + $0x188] sm:$0xf]
    %v264 = vld [vmem:[#allocation5 + $0x18c] sm:$0xf]
    %v265 = vld [vmem:[#allocation5 + $0x190] sm:$0xf]
    %v266 = vld [vmem:[#allocation5 + $0x194] sm:$0xf]
    %v267 = vld [vmem:[#allocation5 + $0x198] sm:$0xf]
    %v268 = vld [vmem:[#allocation5 + $0x19c] sm:$0xf]
    %v269 = vld [vmem:[#allocation5 + $0x1a0] sm:$0xf]
    %v270 = vld [vmem:[#allocation5 + $0x1a4] sm:$0xf]
    %v271 = vld [vmem:[#allocation5 + $0x1a8] sm:$0xf]
    %v272 = vld [vmem:[#allocation5 + $0x1ac] sm:$0xf]
    %v273 = vld [vmem:[#allocation5 + $0x1b0] sm:$0xf]
    %v274 = vld [vmem:[#allocation5 + $0x1b4] sm:$0xf]
    %v275 = vld [vmem:[#allocation5 + $0x1b8] sm:$0xf]
    %v276 = vld [vmem:[#allocation5 + $0x1bc] sm:$0xf]
    %v277 = vld [vmem:[#allocation5 + $0x1c0] sm:$0xf]
    %v278 = vld [vmem:[#allocation5 + $0x1c4] sm:$0xf]
    %v279 = vld [vmem:[#allocation5 + $0x1c8] sm:$0xf]
    %v280 = vld [vmem:[#allocation5 + $0x1cc] sm:$0xf]
    %v281 = vld [vmem:[#allocation5 + $0x1d0] sm:$0xf]
    %v282 = vld [vmem:[#allocation5 + $0x1d4] sm:$0xf]
    %v283 = vld [vmem:[#allocation5 + $0x1d8] sm:$0xf]
    %v284 = vld [vmem:[#allocation5 + $0x1dc] sm:$0xf]
    %v285 = vld [vmem:[#allocation5 + $0x1e0] sm:$0xf]
    %v286 = vld [vmem:[#allocation5 + $0x1e4] sm:$0xf]
    %v287 = vld [vmem:[#allocation5 + $0x1e8] sm:$0xf]
    %v288 = vld [vmem:[#allocation5 + $0x1ec] sm:$0xf]
    %v289 = vld [vmem:[#allocation5 + $0x1f0] sm:$0xf]
    %v290 = vld [vmem:[#allocation5 + $0x1f4] sm:$0xf]
    %v291 = vld [vmem:[#allocation5 + $0x1f8] sm:$0xf]
    %v292 = vld [vmem:[#allocation5 + $0x1fc] sm:$0xf]
    %v293 = vld [vmem:[#allocation5 + $0x200] sm:$0xf]
    %v294 = vld [vmem:[#allocation5 + $0x204] sm:$0xf]
    %v295 = vld [vmem:[#allocation5 + $0x208] sm:$0xf]
    %v296 = vld [vmem:[#allocation5 + $0x20c] sm:$0xf]
    %v297 = vld [vmem:[#allocation5 + $0x210] sm:$0xf]
    %v298 = vld [vmem:[#allocation5 + $0x214] sm:$0xf]
    %v299 = vld [vmem:[#allocation5 + $0x218] sm:$0xf]
    %v300 = vld [vmem:[#allocation5 + $0x21c] sm:$0xf]
    %v301 = vld [vmem:[#allocation5 + $0x220] sm:$0xf]
    %v302 = vld [vmem:[#allocation5 + $0x224] sm:$0xf]
    %v303 = vld [vmem:[#allocation5 + $0x228] sm:$0xf]
    %v304 = vld [vmem:[#allocation5 + $0x22c] sm:$0xf]
    %v305 = vld [vmem:[#allocation5 + $0x230] sm:$0xf]
    %v306 = vld [vmem:[#allocation5 + $0x234] sm:$0xf]
    %v307 = vld [vmem:[#allocation5 + $0x238] sm:$0xf]
    %v308 = vld [vmem:[#allocation5 + $0x23c] sm:$0xf]
    %v309 = vld [vmem:[#allocation5 + $0x240] sm:$0xf]
    %v310 = vld [vmem:[#allocation5 + $0x244] sm:$0xf]
    %v311 = vld [vmem:[#allocation5 + $0x248] sm:$0xf]
    %v312 = vld [vmem:[#allocation5 + $0x24c] sm:$0xf]
    %v313 = vld [vmem:[#allocation5 + $0x250] sm:$0xf]
    %v314 = vld [vmem:[#allocation5 + $0x254] sm:$0xf]
    %v315 = vld [vmem:[#allocation5 + $0x258] sm:$0xf]
    %v316 = vld [vmem:[#allocation5 + $0x25c] sm:$0xf]
    %v317 = vld [vmem:[#allocation5 + $0x260] sm:$0xf]
    %v318 = vld [vmem:[#allocation5 + $0x264] sm:$0xf]
    %v319 = vld [vmem:[#allocation5 + $0x268] sm:$0xf]
    %v320 = vld [vmem:[#allocation5 + $0x26c] sm:$0xf]
    %v321 = vld [vmem:[#allocation5 + $0x270] sm:$0xf]
    %v322 = vld [vmem:[#allocation5 + $0x274] sm:$0xf]
    %v323 = vld [vmem:[#allocation5 + $0x278] sm:$0xf]
    %v324 = vld [vmem:[#allocation5 + $0x27c] sm:$0xf]
    %v325 = vld [vmem:[#allocation5 + $0x280] sm:$0xf]
    %v326 = vld [vmem:[#allocation5 + $0x284] sm:$0xf]
    %v327 = vld [vmem:[#allocation5 + $0x288] sm:$0xf]
    %v328 = vld [vmem:[#allocation5 + $0x28c] sm:$0xf]
    %v329 = vld [vmem:[#allocation5 + $0x290] sm:$0xf]
    %v330 = vld [vmem:[#allocation5 + $0x294] sm:$0xf]
    %v331 = vld [vmem:[#allocation5 + $0x298] sm:$0xf]
    %v332 = vld [vmem:[#allocation5 + $0x29c] sm:$0xf]
    %v333 = vld [vmem:[#allocation5 + $0x2a0] sm:$0xf]
    %v334 = vld [vmem:[#allocation5 + $0x2a4] sm:$0xf]
    %v335 = vld [vmem:[#allocation5 + $0x2a8] sm:$0xf]
    %v336 = vld [vmem:[#allocation5 + $0x2ac] sm:$0xf]
    %v337 = vld [vmem:[#allocation5 + $0x2b0] sm:$0xf]
    %v338 = vld [vmem:[#allocation5 + $0x2b4] sm:$0xf]
    %v339 = vld [vmem:[#allocation5 + $0x2b8] sm:$0xf]
    %v340 = vld [vmem:[#allocation5 + $0x2bc] sm:$0xf]
    %v341 = vld [vmem:[#allocation5 + $0x2c0] sm:$0xf]
    %v342 = vld [vmem:[#allocation5 + $0x2c4] sm:$0xf]
    %v343 = vld [vmem:[#allocation5 + $0x2c8] sm:$0xf]
    %v344 = vld [vmem:[#allocation5 + $0x2cc] sm:$0xf]
    %v345 = vld [vmem:[#allocation5 + $0x2d0] sm:$0xf]
    %v346 = vld [vmem:[#allocation5 + $0x2d4] sm:$0xf]
    %v347 = vld [vmem:[#allocation5 + $0x2d8] sm:$0xf]
    %v348 = vld [vmem:[#allocation5 + $0x2dc] sm:$0xf]
    %v349 = vld [vmem:[#allocation5 + $0x2e0] sm:$0xf]
    %v350 = vld [vmem:[#allocation5 + $0x2e4] sm:$0xf]
    %v351 = vld [vmem:[#allocation5 + $0x2e8] sm:$0xf]
    %v352 = vld [vmem:[#allocation5 + $0x2ec] sm:$0xf]
    %v353 = vld [vmem:[#allocation5 + $0x2f0] sm:$0xf]
    %v354 = vld [vmem:[#allocation5 + $0x2f4] sm:$0xf]
    %v355 = vld [vmem:[#allocation5 + $0x2f8] sm:$0xf]
    %v356 = vld [vmem:[#allocation5 + $0x2fc] sm:$0xf]
    %v357 = vld [vmem:[#allocation5 + $0x300] sm:$0xf]
    %v358 = vld [vmem:[#allocation5 + $0x304] sm:$0xf]
    %v359 = vld [vmem:[#allocation5 + $0x308] sm:$0xf]
    %v360 = vld [vmem:[#allocation5 + $0x30c] sm:$0xf]
    %v361 = vld [vmem:[#allocation5 + $0x310] sm:$0xf]
    %v362 = vld [vmem:[#allocation5 + $0x314] sm:$0xf]
    %v363 = vld [vmem:[#allocation5 + $0x318] sm:$0xf]
    %v364 = vld [vmem:[#allocation5 + $0x31c] sm:$0xf]
    %v365 = vld [vmem:[#allocation5 + $0x320] sm:$0xf]
    %v366 = vld [vmem:[#allocation5 + $0x324] sm:$0xf]
    %v367 = vld [vmem:[#allocation5 + $0x328] sm:$0xf]
    %v368 = vld [vmem:[#allocation5 + $0x32c] sm:$0xf]
    %v369 = vld [vmem:[#allocation5 + $0x330] sm:$0xf]
    %v370 = vld [vmem:[#allocation5 + $0x334] sm:$0xf]
    %v371 = vld [vmem:[#allocation5 + $0x338] sm:$0xf]
    %v372 = vld [vmem:[#allocation5 + $0x33c] sm:$0xf]
    %v373 = vld [vmem:[#allocation5 + $0x340] sm:$0xf]
    %v374 = vld [vmem:[#allocation5 + $0x344] sm:$0xf]
    %v375 = vld [vmem:[#allocation5 + $0x348] sm:$0xf]
    %v376 = vld [vmem:[#allocation5 + $0x34c] sm:$0xf]
    %v377 = vld [vmem:[#allocation5 + $0x350] sm:$0xf]
    %v378 = vld [vmem:[#allocation5 + $0x354] sm:$0xf]
    %v379 = vld [vmem:[#allocation5 + $0x358] sm:$0xf]
    %v380 = vld [vmem:[#allocation5 + $0x35c] sm:$0xf]
    %v381 = vld [vmem:[#allocation5 + $0x360] sm:$0xf]
    %v382 = vld [vmem:[#allocation5 + $0x364] sm:$0xf]
    %v383 = vld [vmem:[#allocation5 + $0x368] sm:$0xf]
    %v384 = vld [vmem:[#allocation5 + $0x36c] sm:$0xf]
    %v385 = vld [vmem:[#allocation5 + $0x370] sm:$0xf]
    %v386 = vld [vmem:[#allocation5 + $0x374] sm:$0xf]
    %v387 = vld [vmem:[#allocation5 + $0x378] sm:$0xf]
    %v388 = vld [vmem:[#allocation5 + $0x37c] sm:$0xf]
    %v389 = vld [vmem:[#allocation5 + $0x380] sm:$0xf]
    %v390 = vld [vmem:[#allocation5 + $0x384] sm:$0xf]
    %v391 = vld [vmem:[#allocation5 + $0x388] sm:$0xf]
    %v392 = vld [vmem:[#allocation5 + $0x38c] sm:$0xf]
    %v393 = vld [vmem:[#allocation5 + $0x390] sm:$0xf]
    %v394 = vld [vmem:[#allocation5 + $0x394] sm:$0xf]
    %v395 = vld [vmem:[#allocation5 + $0x398] sm:$0xf]
    %v396 = vld [vmem:[#allocation5 + $0x39c] sm:$0xf]
    %v397 = vld [vmem:[#allocation5 + $0x3a0] sm:$0xf]
    %v398 = vld [vmem:[#allocation5 + $0x3a4] sm:$0xf]
    %v399 = vld [vmem:[#allocation5 + $0x3a8] sm:$0xf]
    %v400 = vld [vmem:[#allocation5 + $0x3ac] sm:$0xf]
    %v401 = vld [vmem:[#allocation5 + $0x3b0] sm:$0xf]
    %v402 = vld [vmem:[#allocation5 + $0x3b4] sm:$0xf]
    %v403 = vld [vmem:[#allocation5 + $0x3b8] sm:$0xf]
    %v404 = vld [vmem:[#allocation5 + $0x3bc] sm:$0xf]
    %v405 = vld [vmem:[#allocation5 + $0x3c0] sm:$0xf]
    %v406 = vld [vmem:[#allocation5 + $0x3c4] sm:$0xf]
    %v407 = vld [vmem:[#allocation5 + $0x3c8] sm:$0xf]
    %v408 = vld [vmem:[#allocation5 + $0x3cc] sm:$0xf]
    %v409 = vld [vmem:[#allocation5 + $0x3d0] sm:$0xf]
    %v410 = vld [vmem:[#allocation5 + $0x3d4] sm:$0xf]
    %v411 = vld [vmem:[#allocation5 + $0x3d8] sm:$0xf]
    %v412 = vld [vmem:[#allocation5 + $0x3dc] sm:$0xf]
    %v413 = vld [vmem:[#allocation5 + $0x3e0] sm:$0xf]
    %v414 = vld [vmem:[#allocation5 + $0x3e4] sm:$0xf]
    %v415 = vld [vmem:[#allocation5 + $0x3e8] sm:$0xf]
    %v416 = vld [vmem:[#allocation5 + $0x3ec] sm:$0xf]
    %v417 = vld [vmem:[#allocation5 + $0x3f0] sm:$0xf]
    %v418 = vld [vmem:[#allocation5 + $0x3f4] sm:$0xf]
    %v419 = vld [vmem:[#allocation5 + $0x3f8] sm:$0xf]
    %v420 = vld [vmem:[#allocation5 + $0x3fc] sm:$0xf]
    %v421 = vld [vmem:[#allocation5 + $0x400] sm:$0xf]
    %v422 = vld [vmem:[#allocation5 + $0x404] sm:$0xf]
    %v423 = vld [vmem:[#allocation5 + $0x408] sm:$0xf]
    %v424 = vld [vmem:[#allocation5 + $0x40c] sm:$0xf]
    %v425 = vld [vmem:[#allocation5 + $0x410] sm:$0xf]
    %v426 = vld [vmem:[#allocation5 + $0x414] sm:$0xf]
    %v427 = vld [vmem:[#allocation5 + $0x418] sm:$0xf]
    %v428 = vld [vmem:[#allocation5 + $0x41c] sm:$0xf]
    %v429 = vld [vmem:[#allocation5 + $0x420] sm:$0xf]
    %v430 = vld [vmem:[#allocation5 + $0x424] sm:$0xf]
    %v431 = vld [vmem:[#allocation5 + $0x428] sm:$0xf]
    %v432 = vld [vmem:[#allocation5 + $0x42c] sm:$0xf]
    %v433 = vld [vmem:[#allocation5 + $0x430] sm:$0xf]
    %v434 = vld [vmem:[#allocation5 + $0x434] sm:$0xf]
    %v435 = vld [vmem:[#allocation5 + $0x438] sm:$0xf]
    %v436 = vld [vmem:[#allocation5 + $0x43c] sm:$0xf]
    %v437 = vld [vmem:[#allocation5 + $0x440] sm:$0xf]
    %v438 = vld [vmem:[#allocation5 + $0x444] sm:$0xf]
    %v439 = vld [vmem:[#allocation5 + $0x448] sm:$0xf]
    %v440 = vld [vmem:[#allocation5 + $0x44c] sm:$0xf]
    %v441 = vld [vmem:[#allocation5 + $0x450] sm:$0xf]
    %v442 = vld [vmem:[#allocation5 + $0x454] sm:$0xf]
    %v443 = vld [vmem:[#allocation5 + $0x458] sm:$0xf]
    %v444 = vld [vmem:[#allocation5 + $0x45c] sm:$0xf]
    %v445 = vld [vmem:[#allocation5 + $0x460] sm:$0xf]
    %v446 = vld [vmem:[#allocation5 + $0x464] sm:$0xf]
    %v447 = vld [vmem:[#allocation5 + $0x468] sm:$0xf]
    %v448 = vld [vmem:[#allocation5 + $0x46c] sm:$0xf]
    %v449 = vld [vmem:[#allocation5 + $0x470] sm:$0xf]
    %v450 = vld [vmem:[#allocation5 + $0x474] sm:$0xf]
    %v451 = vld [vmem:[#allocation5 + $0x478] sm:$0xf]
    %v452 = vld [vmem:[#allocation5 + $0x47c] sm:$0xf]
    %v453 = vld [vmem:[#allocation5 + $0x480] sm:$0xf]
    %v454 = vld [vmem:[#allocation5 + $0x484] sm:$0xf]
    %v455 = vld [vmem:[#allocation5 + $0x488] sm:$0xf]
    %v456 = vld [vmem:[#allocation5 + $0x48c] sm:$0xf]
    %v457 = vld [vmem:[#allocation5 + $0x490] sm:$0xf]
    %v458 = vld [vmem:[#allocation5 + $0x494] sm:$0xf]
    %v459 = vld [vmem:[#allocation5 + $0x498] sm:$0xf]
    %v460 = vld [vmem:[#allocation5 + $0x49c] sm:$0xf]
    %v461 = vld [vmem:[#allocation5 + $0x4a0] sm:$0xf]
    %v462 = vld [vmem:[#allocation5 + $0x4a4] sm:$0xf]
    %v463 = vld [vmem:[#allocation5 + $0x4a8] sm:$0xf]
    %v464 = vld [vmem:[#allocation5 + $0x4ac] sm:$0xf]
    %v465 = vld [vmem:[#allocation5 + $0x4b0] sm:$0xf]
    %v466 = vld [vmem:[#allocation5 + $0x4b4] sm:$0xf]
    %v467 = vld [vmem:[#allocation5 + $0x4b8] sm:$0xf]
    %v468 = vld [vmem:[#allocation5 + $0x4bc] sm:$0xf]
    %v469 = vld [vmem:[#allocation5 + $0x4c0] sm:$0xf]
    %v470 = vld [vmem:[#allocation5 + $0x4c4] sm:$0xf]
    %v471 = vld [vmem:[#allocation5 + $0x4c8] sm:$0xf]
    %v472 = vld [vmem:[#allocation5 + $0x4cc] sm:$0xf]
    %v473 = vld [vmem:[#allocation5 + $0x4d0] sm:$0xf]
    %v474 = vld [vmem:[#allocation5 + $0x4d4] sm:$0xf]
    %v475 = vld [vmem:[#allocation5 + $0x4d8] sm:$0xf]
    %v476 = vld [vmem:[#allocation5 + $0x4dc] sm:$0xf]
    %v477 = vld [vmem:[#allocation5 + $0x4e0] sm:$0xf]
    %v478 = vld [vmem:[#allocation5 + $0x4e4] sm:$0xf]
    %v479 = vld [vmem:[#allocation5 + $0x4e8] sm:$0xf]
    %v480 = vld [vmem:[#allocation5 + $0x4ec] sm:$0xf]
    %v481 = vld [vmem:[#allocation5 + $0x4f0] sm:$0xf]
    %v482 = vld [vmem:[#allocation5 + $0x4f4] sm:$0xf]
    %v483 = vld [vmem:[#allocation5 + $0x4f8] sm:$0xf]
    %v484 = vld [vmem:[#allocation5 + $0x4fc] sm:$0xf]
    %v485 = vld [vmem:[#allocation5 + $0x500] sm:$0xf]
    %v486 = vld [vmem:[#allocation5 + $0x504] sm:$0xf]
    %v487 = vld [vmem:[#allocation5 + $0x508] sm:$0xf]
    %v488 = vld [vmem:[#allocation5 + $0x50c] sm:$0xf]
    %v489 = vld [vmem:[#allocation5 + $0x510] sm:$0xf]
    %v490 = vld [vmem:[#allocation5 + $0x514] sm:$0xf]
    %v491 = vld [vmem:[#allocation5 + $0x518] sm:$0xf]
    %v492 = vld [vmem:[#allocation5 + $0x51c] sm:$0xf]
    %v493 = vld [vmem:[#allocation5 + $0x520] sm:$0xf]
    %v494 = vld [vmem:[#allocation5 + $0x524] sm:$0xf]
    %v495 = vld [vmem:[#allocation5 + $0x528] sm:$0xf]
    %v496 = vld [vmem:[#allocation5 + $0x52c] sm:$0xf]
    %v497 = vld [vmem:[#allocation5 + $0x530] sm:$0xf]
    %v498 = vld [vmem:[#allocation5 + $0x534] sm:$0xf]
    %v499 = vld [vmem:[#allocation5 + $0x538] sm:$0xf]
    %v500 = vld [vmem:[#allocation5 + $0x53c] sm:$0xf]
    %v501 = vld [vmem:[#allocation5 + $0x540] sm:$0xf]
    %v502 = vld [vmem:[#allocation5 + $0x544] sm:$0xf]
    %v503 = vld [vmem:[#allocation5 + $0x548] sm:$0xf]
    %v504 = vld [vmem:[#allocation5 + $0x54c] sm:$0xf]
    %v505 = vld [vmem:[#allocation5 + $0x550] sm:$0xf]
    %v506 = vld [vmem:[#allocation5 + $0x554] sm:$0xf]
    %v507 = vld [vmem:[#allocation5 + $0x558] sm:$0xf]
    %v508 = vld [vmem:[#allocation5 + $0x55c] sm:$0xf]
    %v509 = vld [vmem:[#allocation5 + $0x560] sm:$0xf]
    %v510 = vld [vmem:[#allocation5 + $0x564] sm:$0xf]
    %v511 = vld [vmem:[#allocation5 + $0x568] sm:$0xf]
    %v512 = vld [vmem:[#allocation5 + $0x56c] sm:$0xf]
    %v513 = vld [vmem:[#allocation5 + $0x570] sm:$0xf]
    %v514 = vld [vmem:[#allocation5 + $0x574] sm:$0xf]
    %v515 = vld [vmem:[#allocation5 + $0x578] sm:$0xf]
    %v516 = vld [vmem:[#allocation5 + $0x57c] sm:$0xf]
    %v517 = vld [vmem:[#allocation5 + $0x580] sm:$0xf]
    %v518 = vld [vmem:[#allocation5 + $0x584] sm:$0xf]
    %v519 = vld [vmem:[#allocation5 + $0x588] sm:$0xf]
    %v520 = vld [vmem:[#allocation5 + $0x58c] sm:$0xf]
    %v521 = vld [vmem:[#allocation5 + $0x590] sm:$0xf]
    %v522 = vld [vmem:[#allocation5 + $0x594] sm:$0xf]
    %v523 = vld [vmem:[#allocation5 + $0x598] sm:$0xf]
    %v524 = vld [vmem:[#allocation5 + $0x59c] sm:$0xf]
    %v525 = vld [vmem:[#allocation5 + $0x5a0] sm:$0xf]
    %v526 = vld [vmem:[#allocation5 + $0x5a4] sm:$0xf]
    %v527 = vld [vmem:[#allocation5 + $0x5a8] sm:$0xf]
    %v528 = vld [vmem:[#allocation5 + $0x5ac] sm:$0xf]
    %v529 = vld [vmem:[#allocation5 + $0x5b0] sm:$0xf]
    %v530 = vld [vmem:[#allocation5 + $0x5b4] sm:$0xf]
    %v531 = vld [vmem:[#allocation5 + $0x5b8] sm:$0xf]
    %v532 = vld [vmem:[#allocation5 + $0x5bc] sm:$0xf]
    %v533 = vld [vmem:[#allocation5 + $0x5c0] sm:$0xf]
    %v534 = vld [vmem:[#allocation5 + $0x5c4] sm:$0xf]
    %v535 = vld [vmem:[#allocation5 + $0x5c8] sm:$0xf]
    %v536 = vld [vmem:[#allocation5 + $0x5cc] sm:$0xf]
    %v537 = vld [vmem:[#allocation5 + $0x5d0] sm:$0xf]
    %v538 = vld [vmem:[#allocation5 + $0x5d4] sm:$0xf]
    %v539 = vld [vmem:[#allocation5 + $0x5d8] sm:$0xf]
    %v540 = vld [vmem:[#allocation5 + $0x5dc] sm:$0xf]
    %v541 = vld [vmem:[#allocation5 + $0x5e0] sm:$0xf]
    %v542 = vld [vmem:[#allocation5 + $0x5e4] sm:$0xf]
    %v543 = vld [vmem:[#allocation5 + $0x5e8] sm:$0xf]
    %v544 = vld [vmem:[#allocation5 + $0x5ec] sm:$0xf]
    %v545 = vld [vmem:[#allocation5 + $0x5f0] sm:$0xf]
    %v546 = vld [vmem:[#allocation5 + $0x5f4] sm:$0xf]
    %v547 = vld [vmem:[#allocation5 + $0x5f8] sm:$0xf]
    %v548 = vld [vmem:[#allocation5 + $0x5fc] sm:$0xf]
    %v549 = vld [vmem:[%s2] sm:$0x1]
    %v551 = vlaneseq
    %v552 = vshrl.u32 %v551, 7
    %v553 = vsub.s32 0, %v552
    %v554 = vrot.slane %v549, %v553
    %v940 = vunpack.c.l.b16 %v165
    %v941 = vunpack.c.l.b16 %v166
    %v942 = vunpack.c.l.b16 %v167
    %v943 = vunpack.c.l.b16 %v168
    %v944 = vunpack.c.l.b16 %v169
    %v945 = vunpack.c.l.b16 %v170
    %v946 = vunpack.c.l.b16 %v171
    %v947 = vunpack.c.l.b16 %v172
    %v948 = vunpack.c.l.b16 %v173
    %v949 = vunpack.c.l.b16 %v174
    %v950 = vunpack.c.l.b16 %v175
    %v951 = vunpack.c.l.b16 %v176
    %v952 = vunpack.c.l.b16 %v177
    %v953 = vunpack.c.l.b16 %v178
    %v954 = vunpack.c.l.b16 %v179
    %v955 = vunpack.c.l.b16 %v180
    %v956 = vunpack.c.l.b16 %v181
    %v957 = vunpack.c.l.b16 %v182
    %v958 = vunpack.c.l.b16 %v183
    %v959 = vunpack.c.l.b16 %v184
    %v960 = vunpack.c.l.b16 %v185
    %v961 = vunpack.c.l.b16 %v186
    %v962 = vunpack.c.l.b16 %v187
    %v963 = vunpack.c.l.b16 %v188
    %v964 = vunpack.c.l.b16 %v189
    %v965 = vunpack.c.l.b16 %v190
    %v966 = vunpack.c.l.b16 %v191
    %v967 = vunpack.c.l.b16 %v192
    %v968 = vunpack.c.l.b16 %v193
    %v969 = vunpack.c.l.b16 %v194
    %v970 = vunpack.c.l.b16 %v195
    %v971 = vunpack.c.l.b16 %v196
    %v972 = vunpack.c.l.b16 %v197
    %v973 = vunpack.c.l.b16 %v198
    %v974 = vunpack.c.l.b16 %v199
    %v975 = vunpack.c.l.b16 %v200
    %v976 = vunpack.c.l.b16 %v201
    %v977 = vunpack.c.l.b16 %v202
    %v978 = vunpack.c.l.b16 %v203
    %v979 = vunpack.c.l.b16 %v204
    %v980 = vunpack.c.l.b16 %v205
    %v981 = vunpack.c.l.b16 %v206
    %v982 = vunpack.c.l.b16 %v207
    %v983 = vunpack.c.l.b16 %v208
    %v984 = vunpack.c.l.b16 %v209
    %v985 = vunpack.c.l.b16 %v210
    %v986 = vunpack.c.l.b16 %v211
    %v987 = vunpack.c.l.b16 %v212
    %v988 = vunpack.c.l.b16 %v213
    %v989 = vunpack.c.l.b16 %v214
    %v990 = vunpack.c.l.b16 %v215
    %v991 = vunpack.c.l.b16 %v216
    %v992 = vunpack.c.l.b16 %v217
    %v993 = vunpack.c.l.b16 %v218
    %v994 = vunpack.c.l.b16 %v219
    %v995 = vunpack.c.l.b16 %v220
    %v996 = vunpack.c.l.b16 %v221
    %v997 = vunpack.c.l.b16 %v222
    %v998 = vunpack.c.l.b16 %v223
    %v999 = vunpack.c.l.b16 %v224
    %v1000 = vunpack.c.l.b16 %v225
    %v1001 = vunpack.c.l.b16 %v226
    %v1002 = vunpack.c.l.b16 %v227
    %v1003 = vunpack.c.l.b16 %v228
    %v1004 = vunpack.c.l.b16 %v229
    %v1005 = vunpack.c.l.b16 %v230
    %v1006 = vunpack.c.l.b16 %v231
    %v1007 = vunpack.c.l.b16 %v232
    %v1008 = vunpack.c.l.b16 %v233
    %v1009 = vunpack.c.l.b16 %v234
    %v1010 = vunpack.c.l.b16 %v235
    %v1011 = vunpack.c.l.b16 %v236
    %v1012 = vunpack.c.l.b16 %v237
    %v1013 = vunpack.c.l.b16 %v238
    %v1014 = vunpack.c.l.b16 %v239
    %v1015 = vunpack.c.l.b16 %v240
    %v1016 = vunpack.c.l.b16 %v241
    %v1017 = vunpack.c.l.b16 %v242
    %v1018 = vunpack.c.l.b16 %v243
    %v1019 = vunpack.c.l.b16 %v244
    %v1020 = vunpack.c.l.b16 %v245
    %v1021 = vunpack.c.l.b16 %v246
    %v1022 = vunpack.c.l.b16 %v247
    %v1023 = vunpack.c.l.b16 %v248
    %v1024 = vunpack.c.l.b16 %v249
    %v1025 = vunpack.c.l.b16 %v250
    %v1026 = vunpack.c.l.b16 %v251
    %v1027 = vunpack.c.l.b16 %v252
    %v1028 = vunpack.c.l.b16 %v253
    %v1029 = vunpack.c.l.b16 %v254
    %v1030 = vunpack.c.l.b16 %v255
    %v1031 = vunpack.c.l.b16 %v256
    %v1032 = vunpack.c.l.b16 %v257
    %v1033 = vunpack.c.l.b16 %v258
    %v1034 = vunpack.c.l.b16 %v259
    %v1035 = vunpack.c.l.b16 %v260
    %v1036 = vunpack.c.l.b16 %v261
    %v1037 = vunpack.c.l.b16 %v262
    %v1038 = vunpack.c.l.b16 %v263
    %v1039 = vunpack.c.l.b16 %v264
    %v1040 = vunpack.c.l.b16 %v265
    %v1041 = vunpack.c.l.b16 %v266
    %v1042 = vunpack.c.l.b16 %v267
    %v1043 = vunpack.c.l.b16 %v268
    %v1044 = vunpack.c.l.b16 %v269
    %v1045 = vunpack.c.l.b16 %v270
    %v1046 = vunpack.c.l.b16 %v271
    %v1047 = vunpack.c.l.b16 %v272
    %v1048 = vunpack.c.l.b16 %v273
    %v1049 = vunpack.c.l.b16 %v274
    %v1050 = vunpack.c.l.b16 %v275
    %v1051 = vunpack.c.l.b16 %v276
    %v1052 = vunpack.c.l.b16 %v277
    %v1053 = vunpack.c.l.b16 %v278
    %v1054 = vunpack.c.l.b16 %v279
    %v1055 = vunpack.c.l.b16 %v280
    %v1056 = vunpack.c.l.b16 %v281
    %v1057 = vunpack.c.l.b16 %v282
    %v1058 = vunpack.c.l.b16 %v283
    %v1059 = vunpack.c.l.b16 %v284
    %v1060 = vunpack.c.l.b16 %v285
    %v1061 = vunpack.c.l.b16 %v286
    %v1062 = vunpack.c.l.b16 %v287
    %v1063 = vunpack.c.l.b16 %v288
    %v1064 = vunpack.c.l.b16 %v289
    %v1065 = vunpack.c.l.b16 %v290
    %v1066 = vunpack.c.l.b16 %v291
    %v1067 = vunpack.c.l.b16 %v292
    %v1068 = vunpack.c.l.b16 %v293
    %v1069 = vunpack.c.l.b16 %v294
    %v1070 = vunpack.c.l.b16 %v295
    %v1071 = vunpack.c.l.b16 %v296
    %v1072 = vunpack.c.l.b16 %v297
    %v1073 = vunpack.c.l.b16 %v298
    %v1074 = vunpack.c.l.b16 %v299
    %v1075 = vunpack.c.l.b16 %v300
    %v1076 = vunpack.c.l.b16 %v301
    %v1077 = vunpack.c.l.b16 %v302
    %v1078 = vunpack.c.l.b16 %v303
    %v1079 = vunpack.c.l.b16 %v304
    %v1080 = vunpack.c.l.b16 %v305
    %v1081 = vunpack.c.l.b16 %v306
    %v1082 = vunpack.c.l.b16 %v307
    %v1083 = vunpack.c.l.b16 %v308
    %v1084 = vunpack.c.l.b16 %v309
    %v1085 = vunpack.c.l.b16 %v310
    %v1086 = vunpack.c.l.b16 %v311
    %v1087 = vunpack.c.l.b16 %v312
    %v1088 = vunpack.c.l.b16 %v313
    %v1089 = vunpack.c.l.b16 %v314
    %v1090 = vunpack.c.l.b16 %v315
    %v1091 = vunpack.c.l.b16 %v316
    %v1092 = vunpack.c.l.b16 %v317
    %v1093 = vunpack.c.l.b16 %v318
    %v1094 = vunpack.c.l.b16 %v319
    %v1095 = vunpack.c.l.b16 %v320
    %v1096 = vunpack.c.l.b16 %v321
    %v1097 = vunpack.c.l.b16 %v322
    %v1098 = vunpack.c.l.b16 %v323
    %v1099 = vunpack.c.l.b16 %v324
    %v1100 = vunpack.c.l.b16 %v325
    %v1101 = vunpack.c.l.b16 %v326
    %v1102 = vunpack.c.l.b16 %v327
    %v1103 = vunpack.c.l.b16 %v328
    %v1104 = vunpack.c.l.b16 %v329
    %v1105 = vunpack.c.l.b16 %v330
    %v1106 = vunpack.c.l.b16 %v331
    %v1107 = vunpack.c.l.b16 %v332
    %v1108 = vunpack.c.l.b16 %v333
    %v1109 = vunpack.c.l.b16 %v334
    %v1110 = vunpack.c.l.b16 %v335
    %v1111 = vunpack.c.l.b16 %v336
    %v1112 = vunpack.c.l.b16 %v337
    %v1113 = vunpack.c.l.b16 %v338
    %v1114 = vunpack.c.l.b16 %v339
    %v1115 = vunpack.c.l.b16 %v340
    %v1116 = vunpack.c.l.b16 %v341
    %v1117 = vunpack.c.l.b16 %v342
    %v1118 = vunpack.c.l.b16 %v343
    %v1119 = vunpack.c.l.b16 %v344
    %v1120 = vunpack.c.l.b16 %v345
    %v1121 = vunpack.c.l.b16 %v346
    %v1122 = vunpack.c.l.b16 %v347
    %v1123 = vunpack.c.l.b16 %v348
    %v1124 = vunpack.c.l.b16 %v349
    %v1125 = vunpack.c.l.b16 %v350
    %v1126 = vunpack.c.l.b16 %v351
    %v1127 = vunpack.c.l.b16 %v352
    %v1128 = vunpack.c.l.b16 %v353
    %v1129 = vunpack.c.l.b16 %v354
    %v1130 = vunpack.c.l.b16 %v355
    %v1131 = vunpack.c.l.b16 %v356
    %v1132 = vunpack.c.l.b16 %v357
    %v1133 = vunpack.c.l.b16 %v358
    %v1134 = vunpack.c.l.b16 %v359
    %v1135 = vunpack.c.l.b16 %v360
    %v1136 = vunpack.c.l.b16 %v361
    %v1137 = vunpack.c.l.b16 %v362
    %v1138 = vunpack.c.l.b16 %v363
    %v1139 = vunpack.c.l.b16 %v364
    %v1140 = vunpack.c.l.b16 %v365
    %v1141 = vunpack.c.l.b16 %v366
    %v1142 = vunpack.c.l.b16 %v367
    %v1143 = vunpack.c.l.b16 %v368
    %v1144 = vunpack.c.l.b16 %v369
    %v1145 = vunpack.c.l.b16 %v370
    %v1146 = vunpack.c.l.b16 %v371
    %v1147 = vunpack.c.l.b16 %v372
    %v1148 = vunpack.c.l.b16 %v373
    %v1149 = vunpack.c.l.b16 %v374
    %v1150 = vunpack.c.l.b16 %v375
    %v1151 = vunpack.c.l.b16 %v376
    %v1152 = vunpack.c.l.b16 %v377
    %v1153 = vunpack.c.l.b16 %v378
    %v1154 = vunpack.c.l.b16 %v379
    %v1155 = vunpack.c.l.b16 %v380
    %v1156 = vunpack.c.l.b16 %v381
    %v1157 = vunpack.c.l.b16 %v382
    %v1158 = vunpack.c.l.b16 %v383
    %v1159 = vunpack.c.l.b16 %v384
    %v1160 = vunpack.c.l.b16 %v385
    %v1161 = vunpack.c.l.b16 %v386
    %v1162 = vunpack.c.l.b16 %v387
    %v1163 = vunpack.c.l.b16 %v388
    %v1164 = vunpack.c.l.b16 %v389
    %v1165 = vunpack.c.l.b16 %v390
    %v1166 = vunpack.c.l.b16 %v391
    %v1167 = vunpack.c.l.b16 %v392
    %v1168 = vunpack.c.l.b16 %v393
    %v1169 = vunpack.c.l.b16 %v394
    %v1170 = vunpack.c.l.b16 %v395
    %v1171 = vunpack.c.l.b16 %v396
    %v1172 = vunpack.c.l.b16 %v397
    %v1173 = vunpack.c.l.b16 %v398
    %v1174 = vunpack.c.l.b16 %v399
    %v1175 = vunpack.c.l.b16 %v400
    %v1176 = vunpack.c.l.b16 %v401
    %v1177 = vunpack.c.l.b16 %v402
    %v1178 = vunpack.c.l.b16 %v403
    %v1179 = vunpack.c.l.b16 %v404
    %v1180 = vunpack.c.l.b16 %v405
    %v1181 = vunpack.c.l.b16 %v406
    %v1182 = vunpack.c.l.b16 %v407
    %v1183 = vunpack.c.l.b16 %v408
    %v1184 = vunpack.c.l.b16 %v409
    %v1185 = vunpack.c.l.b16 %v410
    %v1186 = vunpack.c.l.b16 %v411
    %v1187 = vunpack.c.l.b16 %v412
    %v1188 = vunpack.c.l.b16 %v413
    %v1189 = vunpack.c.l.b16 %v414
    %v1190 = vunpack.c.l.b16 %v415
    %v1191 = vunpack.c.l.b16 %v416
    %v1192 = vunpack.c.l.b16 %v417
    %v1193 = vunpack.c.l.b16 %v418
    %v1194 = vunpack.c.l.b16 %v419
    %v1195 = vunpack.c.l.b16 %v420
    %v1196 = vunpack.c.l.b16 %v421
    %v1197 = vunpack.c.l.b16 %v422
    %v1198 = vunpack.c.l.b16 %v423
    %v1199 = vunpack.c.l.b16 %v424
    %v1200 = vunpack.c.l.b16 %v425
    %v1201 = vunpack.c.l.b16 %v426
    %v1202 = vunpack.c.l.b16 %v427
    %v1203 = vunpack.c.l.b16 %v428
    %v1204 = vunpack.c.l.b16 %v429
    %v1205 = vunpack.c.l.b16 %v430
    %v1206 = vunpack.c.l.b16 %v431
    %v1207 = vunpack.c.l.b16 %v432
    %v1208 = vunpack.c.l.b16 %v433
    %v1209 = vunpack.c.l.b16 %v434
    %v1210 = vunpack.c.l.b16 %v435
    %v1211 = vunpack.c.l.b16 %v436
    %v1212 = vunpack.c.l.b16 %v437
    %v1213 = vunpack.c.l.b16 %v438
    %v1214 = vunpack.c.l.b16 %v439
    %v1215 = vunpack.c.l.b16 %v440
    %v1216 = vunpack.c.l.b16 %v441
    %v1217 = vunpack.c.l.b16 %v442
    %v1218 = vunpack.c.l.b16 %v443
    %v1219 = vunpack.c.l.b16 %v444
    %v1220 = vunpack.c.l.b16 %v445
    %v1221 = vunpack.c.l.b16 %v446
    %v1222 = vunpack.c.l.b16 %v447
    %v1223 = vunpack.c.l.b16 %v448
    %v1224 = vunpack.c.l.b16 %v449
    %v1225 = vunpack.c.l.b16 %v450
    %v1226 = vunpack.c.l.b16 %v451
    %v1227 = vunpack.c.l.b16 %v452
    %v1228 = vunpack.c.l.b16 %v453
    %v1229 = vunpack.c.l.b16 %v454
    %v1230 = vunpack.c.l.b16 %v455
    %v1231 = vunpack.c.l.b16 %v456
    %v1232 = vunpack.c.l.b16 %v457
    %v1233 = vunpack.c.l.b16 %v458
    %v1234 = vunpack.c.l.b16 %v459
    %v1235 = vunpack.c.l.b16 %v460
    %v1236 = vunpack.c.l.b16 %v461
    %v1237 = vunpack.c.l.b16 %v462
    %v1238 = vunpack.c.l.b16 %v463
    %v1239 = vunpack.c.l.b16 %v464
    %v1240 = vunpack.c.l.b16 %v465
    %v1241 = vunpack.c.l.b16 %v466
    %v1242 = vunpack.c.l.b16 %v467
    %v1243 = vunpack.c.l.b16 %v468
    %v1244 = vunpack.c.l.b16 %v469
    %v1245 = vunpack.c.l.b16 %v470
    %v1246 = vunpack.c.l.b16 %v471
    %v1247 = vunpack.c.l.b16 %v472
    %v1248 = vunpack.c.l.b16 %v473
    %v1249 = vunpack.c.l.b16 %v474
    %v1250 = vunpack.c.l.b16 %v475
    %v1251 = vunpack.c.l.b16 %v476
    %v1252 = vunpack.c.l.b16 %v477
    %v1253 = vunpack.c.l.b16 %v478
    %v1254 = vunpack.c.l.b16 %v479
    %v1255 = vunpack.c.l.b16 %v480
    %v1256 = vunpack.c.l.b16 %v481
    %v1257 = vunpack.c.l.b16 %v482
    %v1258 = vunpack.c.l.b16 %v483
    %v1259 = vunpack.c.l.b16 %v484
    %v1260 = vunpack.c.l.b16 %v485
    %v1261 = vunpack.c.l.b16 %v486
    %v1262 = vunpack.c.l.b16 %v487
    %v1263 = vunpack.c.l.b16 %v488
    %v1264 = vunpack.c.l.b16 %v489
    %v1265 = vunpack.c.l.b16 %v490
    %v1266 = vunpack.c.l.b16 %v491
    %v1267 = vunpack.c.l.b16 %v492
    %v1268 = vunpack.c.l.b16 %v493
    %v1269 = vunpack.c.l.b16 %v494
    %v1270 = vunpack.c.l.b16 %v495
    %v1271 = vunpack.c.l.b16 %v496
    %v1272 = vunpack.c.l.b16 %v497
    %v1273 = vunpack.c.l.b16 %v498
    %v1274 = vunpack.c.l.b16 %v499
    %v1275 = vunpack.c.l.b16 %v500
    %v1276 = vunpack.c.l.b16 %v501
    %v1277 = vunpack.c.l.b16 %v502
    %v1278 = vunpack.c.l.b16 %v503
    %v1279 = vunpack.c.l.b16 %v504
    %v1280 = vunpack.c.l.b16 %v505
    %v1281 = vunpack.c.l.b16 %v506
    %v1282 = vunpack.c.l.b16 %v507
    %v1283 = vunpack.c.l.b16 %v508
    %v1284 = vunpack.c.l.b16 %v509
    %v1285 = vunpack.c.l.b16 %v510
    %v1286 = vunpack.c.l.b16 %v511
    %v1287 = vunpack.c.l.b16 %v512
    %v1288 = vunpack.c.l.b16 %v513
    %v1289 = vunpack.c.l.b16 %v514
    %v1290 = vunpack.c.l.b16 %v515
    %v1291 = vunpack.c.l.b16 %v516
    %v1292 = vunpack.c.l.b16 %v517
    %v1293 = vunpack.c.l.b16 %v518
    %v1294 = vunpack.c.l.b16 %v519
    %v1295 = vunpack.c.l.b16 %v520
    %v1296 = vunpack.c.l.b16 %v521
    %v1297 = vunpack.c.l.b16 %v522
    %v1298 = vunpack.c.l.b16 %v523
    %v1299 = vunpack.c.l.b16 %v524
    %v1300 = vunpack.c.l.b16 %v525
    %v1301 = vunpack.c.l.b16 %v526
    %v1302 = vunpack.c.l.b16 %v527
    %v1303 = vunpack.c.l.b16 %v528
    %v1304 = vunpack.c.l.b16 %v529
    %v1305 = vunpack.c.l.b16 %v530
    %v1306 = vunpack.c.l.b16 %v531
    %v1307 = vunpack.c.l.b16 %v532
    %v1308 = vunpack.c.l.b16 %v533
    %v1309 = vunpack.c.l.b16 %v534
    %v1310 = vunpack.c.l.b16 %v535
    %v1311 = vunpack.c.l.b16 %v536
    %v1312 = vunpack.c.l.b16 %v537
    %v1313 = vunpack.c.l.b16 %v538
    %v1314 = vunpack.c.l.b16 %v539
    %v1315 = vunpack.c.l.b16 %v540
    %v1316 = vunpack.c.l.b16 %v541
    %v1317 = vunpack.c.l.b16 %v542
    %v1318 = vunpack.c.l.b16 %v543
    %v1319 = vunpack.c.l.b16 %v544
    %v1320 = vunpack.c.l.b16 %v545
    %v1321 = vunpack.c.l.b16 %v546
    %v1322 = vunpack.c.l.b16 %v547
    %v1323 = vunpack.c.l.b16 %v548
    %v1324 = vpack.c.b16 %v941, %v940
    %v1325 = vpack.c.b16 %v943, %v942
    %v1326 = vpack.c.b16 %v945, %v944
    %v1327 = vpack.c.b16 %v947, %v946
    %v1328 = vpack.c.b16 %v949, %v948
    %v1329 = vpack.c.b16 %v951, %v950
    %v1330 = vpack.c.b16 %v953, %v952
    %v1331 = vpack.c.b16 %v955, %v954
    %v1332 = vpack.c.b16 %v957, %v956
    %v1333 = vpack.c.b16 %v959, %v958
    %v1334 = vpack.c.b16 %v961, %v960
    %v1335 = vpack.c.b16 %v963, %v962
    %v1336 = vpack.c.b16 %v965, %v964
    %v1337 = vpack.c.b16 %v967, %v966
    %v1338 = vpack.c.b16 %v969, %v968
    %v1339 = vpack.c.b16 %v971, %v970
    %v1340 = vpack.c.b16 %v973, %v972
    %v1341 = vpack.c.b16 %v975, %v974
    %v1342 = vpack.c.b16 %v977, %v976
    %v1343 = vpack.c.b16 %v979, %v978
    %v1344 = vpack.c.b16 %v981, %v980
    %v1345 = vpack.c.b16 %v983, %v982
    %v1346 = vpack.c.b16 %v985, %v984
    %v1347 = vpack.c.b16 %v987, %v986
    %v1348 = vpack.c.b16 %v989, %v988
    %v1349 = vpack.c.b16 %v991, %v990
    %v1350 = vpack.c.b16 %v993, %v992
    %v1351 = vpack.c.b16 %v995, %v994
    %v1352 = vpack.c.b16 %v997, %v996
    %v1353 = vpack.c.b16 %v999, %v998
    %v1354 = vpack.c.b16 %v1001, %v1000
    %v1355 = vpack.c.b16 %v1003, %v1002
    %v1356 = vpack.c.b16 %v1005, %v1004
    %v1357 = vpack.c.b16 %v1007, %v1006
    %v1358 = vpack.c.b16 %v1009, %v1008
    %v1359 = vpack.c.b16 %v1011, %v1010
    %v1360 = vpack.c.b16 %v1013, %v1012
    %v1361 = vpack.c.b16 %v1015, %v1014
    %v1362 = vpack.c.b16 %v1017, %v1016
    %v1363 = vpack.c.b16 %v1019, %v1018
    %v1364 = vpack.c.b16 %v1021, %v1020
    %v1365 = vpack.c.b16 %v1023, %v1022
    %v1366 = vpack.c.b16 %v1025, %v1024
    %v1367 = vpack.c.b16 %v1027, %v1026
    %v1368 = vpack.c.b16 %v1029, %v1028
    %v1369 = vpack.c.b16 %v1031, %v1030
    %v1370 = vpack.c.b16 %v1033, %v1032
    %v1371 = vpack.c.b16 %v1035, %v1034
    %v1372 = vpack.c.b16 %v1037, %v1036
    %v1373 = vpack.c.b16 %v1039, %v1038
    %v1374 = vpack.c.b16 %v1041, %v1040
    %v1375 = vpack.c.b16 %v1043, %v1042
    %v1376 = vpack.c.b16 %v1045, %v1044
    %v1377 = vpack.c.b16 %v1047, %v1046
    %v1378 = vpack.c.b16 %v1049, %v1048
    %v1379 = vpack.c.b16 %v1051, %v1050
    %v1380 = vpack.c.b16 %v1053, %v1052
    %v1381 = vpack.c.b16 %v1055, %v1054
    %v1382 = vpack.c.b16 %v1057, %v1056
    %v1383 = vpack.c.b16 %v1059, %v1058
    %v1384 = vpack.c.b16 %v1061, %v1060
    %v1385 = vpack.c.b16 %v1063, %v1062
    %v1386 = vpack.c.b16 %v1065, %v1064
    %v1387 = vpack.c.b16 %v1067, %v1066
    %v1388 = vpack.c.b16 %v1069, %v1068
    %v1389 = vpack.c.b16 %v1071, %v1070
    %v1390 = vpack.c.b16 %v1073, %v1072
    %v1391 = vpack.c.b16 %v1075, %v1074
    %v1392 = vpack.c.b16 %v1077, %v1076
    %v1393 = vpack.c.b16 %v1079, %v1078
    %v1394 = vpack.c.b16 %v1081, %v1080
    %v1395 = vpack.c.b16 %v1083, %v1082
    %v1396 = vpack.c.b16 %v1085, %v1084
    %v1397 = vpack.c.b16 %v1087, %v1086
    %v1398 = vpack.c.b16 %v1089, %v1088
    %v1399 = vpack.c.b16 %v1091, %v1090
    %v1400 = vpack.c.b16 %v1093, %v1092
    %v1401 = vpack.c.b16 %v1095, %v1094
    %v1402 = vpack.c.b16 %v1097, %v1096
    %v1403 = vpack.c.b16 %v1099, %v1098
    %v1404 = vpack.c.b16 %v1101, %v1100
    %v1405 = vpack.c.b16 %v1103, %v1102
    %v1406 = vpack.c.b16 %v1105, %v1104
    %v1407 = vpack.c.b16 %v1107, %v1106
    %v1408 = vpack.c.b16 %v1109, %v1108
    %v1409 = vpack.c.b16 %v1111, %v1110
    %v1410 = vpack.c.b16 %v1113, %v1112
    %v1411 = vpack.c.b16 %v1115, %v1114
    %v1412 = vpack.c.b16 %v1117, %v1116
    %v1413 = vpack.c.b16 %v1119, %v1118
    %v1414 = vpack.c.b16 %v1121, %v1120
    %v1415 = vpack.c.b16 %v1123, %v1122
    %v1416 = vpack.c.b16 %v1125, %v1124
    %v1417 = vpack.c.b16 %v1127, %v1126
    %v1418 = vpack.c.b16 %v1129, %v1128
    %v1419 = vpack.c.b16 %v1131, %v1130
    %v1420 = vpack.c.b16 %v1133, %v1132
    %v1421 = vpack.c.b16 %v1135, %v1134
    %v1422 = vpack.c.b16 %v1137, %v1136
    %v1423 = vpack.c.b16 %v1139, %v1138
    %v1424 = vpack.c.b16 %v1141, %v1140
    %v1425 = vpack.c.b16 %v1143, %v1142
    %v1426 = vpack.c.b16 %v1145, %v1144
    %v1427 = vpack.c.b16 %v1147, %v1146
    %v1428 = vpack.c.b16 %v1149, %v1148
    %v1429 = vpack.c.b16 %v1151, %v1150
    %v1430 = vpack.c.b16 %v1153, %v1152
    %v1431 = vpack.c.b16 %v1155, %v1154
    %v1432 = vpack.c.b16 %v1157, %v1156
    %v1433 = vpack.c.b16 %v1159, %v1158
    %v1434 = vpack.c.b16 %v1161, %v1160
    %v1435 = vpack.c.b16 %v1163, %v1162
    %v1436 = vpack.c.b16 %v1165, %v1164
    %v1437 = vpack.c.b16 %v1167, %v1166
    %v1438 = vpack.c.b16 %v1169, %v1168
    %v1439 = vpack.c.b16 %v1171, %v1170
    %v1440 = vpack.c.b16 %v1173, %v1172
    %v1441 = vpack.c.b16 %v1175, %v1174
    %v1442 = vpack.c.b16 %v1177, %v1176
    %v1443 = vpack.c.b16 %v1179, %v1178
    %v1444 = vpack.c.b16 %v1181, %v1180
    %v1445 = vpack.c.b16 %v1183, %v1182
    %v1446 = vpack.c.b16 %v1185, %v1184
    %v1447 = vpack.c.b16 %v1187, %v1186
    %v1448 = vpack.c.b16 %v1189, %v1188
    %v1449 = vpack.c.b16 %v1191, %v1190
    %v1450 = vpack.c.b16 %v1193, %v1192
    %v1451 = vpack.c.b16 %v1195, %v1194
    %v1452 = vpack.c.b16 %v1197, %v1196
    %v1453 = vpack.c.b16 %v1199, %v1198
    %v1454 = vpack.c.b16 %v1201, %v1200
    %v1455 = vpack.c.b16 %v1203, %v1202
    %v1456 = vpack.c.b16 %v1205, %v1204
    %v1457 = vpack.c.b16 %v1207, %v1206
    %v1458 = vpack.c.b16 %v1209, %v1208
    %v1459 = vpack.c.b16 %v1211, %v1210
    %v1460 = vpack.c.b16 %v1213, %v1212
    %v1461 = vpack.c.b16 %v1215, %v1214
    %v1462 = vpack.c.b16 %v1217, %v1216
    %v1463 = vpack.c.b16 %v1219, %v1218
    %v1464 = vpack.c.b16 %v1221, %v1220
    %v1465 = vpack.c.b16 %v1223, %v1222
    %v1466 = vpack.c.b16 %v1225, %v1224
    %v1467 = vpack.c.b16 %v1227, %v1226
    %v1468 = vpack.c.b16 %v1229, %v1228
    %v1469 = vpack.c.b16 %v1231, %v1230
    %v1470 = vpack.c.b16 %v1233, %v1232
    %v1471 = vpack.c.b16 %v1235, %v1234
    %v1472 = vpack.c.b16 %v1237, %v1236
    %v1473 = vpack.c.b16 %v1239, %v1238
    %v1474 = vpack.c.b16 %v1241, %v1240
    %v1475 = vpack.c.b16 %v1243, %v1242
    %v1476 = vpack.c.b16 %v1245, %v1244
    %v1477 = vpack.c.b16 %v1247, %v1246
    %v1478 = vpack.c.b16 %v1249, %v1248
    %v1479 = vpack.c.b16 %v1251, %v1250
    %v1480 = vpack.c.b16 %v1253, %v1252
    %v1481 = vpack.c.b16 %v1255, %v1254
    %v1482 = vpack.c.b16 %v1257, %v1256
    %v1483 = vpack.c.b16 %v1259, %v1258
    %v1484 = vpack.c.b16 %v1261, %v1260
    %v1485 = vpack.c.b16 %v1263, %v1262
    %v1486 = vpack.c.b16 %v1265, %v1264
    %v1487 = vpack.c.b16 %v1267, %v1266
    %v1488 = vpack.c.b16 %v1269, %v1268
    %v1489 = vpack.c.b16 %v1271, %v1270
    %v1490 = vpack.c.b16 %v1273, %v1272
    %v1491 = vpack.c.b16 %v1275, %v1274
    %v1492 = vpack.c.b16 %v1277, %v1276
    %v1493 = vpack.c.b16 %v1279, %v1278
    %v1494 = vpack.c.b16 %v1281, %v1280
    %v1495 = vpack.c.b16 %v1283, %v1282
    %v1496 = vpack.c.b16 %v1285, %v1284
    %v1497 = vpack.c.b16 %v1287, %v1286
    %v1498 = vpack.c.b16 %v1289, %v1288
    %v1499 = vpack.c.b16 %v1291, %v1290
    %v1500 = vpack.c.b16 %v1293, %v1292
    %v1501 = vpack.c.b16 %v1295, %v1294
    %v1502 = vpack.c.b16 %v1297, %v1296
    %v1503 = vpack.c.b16 %v1299, %v1298
    %v1504 = vpack.c.b16 %v1301, %v1300
    %v1505 = vpack.c.b16 %v1303, %v1302
    %v1506 = vpack.c.b16 %v1305, %v1304
    %v1507 = vpack.c.b16 %v1307, %v1306
    %v1508 = vpack.c.b16 %v1309, %v1308
    %v1509 = vpack.c.b16 %v1311, %v1310
    %v1510 = vpack.c.b16 %v1313, %v1312
    %v1511 = vpack.c.b16 %v1315, %v1314
    %v1512 = vpack.c.b16 %v1317, %v1316
    %v1513 = vpack.c.b16 %v1319, %v1318
    %v1514 = vpack.c.b16 %v1321, %v1320
    %v1515 = vpack.c.b16 %v1323, %v1322
    %1708 = vmatprep.subr.bf16.mxu0 0
    %1709 = vmatpush1.bf16.msra.mxu0 %v1324
    %1710 = vmatprep.subr.bf16.mxu0 0
    %1711 = vmatpush1.bf16.msra.mxu0 %v1325
    %1712 = vmatprep.subr.bf16.mxu0 0
    %1713 = vmatpush1.bf16.msra.mxu0 %v1326
    %1714 = vmatprep.subr.bf16.mxu0 0
    %1715 = vmatpush1.bf16.msra.mxu0 %v1327
    %1716 = vmatprep.subr.bf16.mxu0 0
    %1717 = vmatpush1.bf16.msra.mxu0 %v1328
    %1718 = vmatprep.subr.bf16.mxu0 0
    %1719 = vmatpush1.bf16.msra.mxu0 %v1329
    %1720 = vmatprep.subr.bf16.mxu0 0
    %1721 = vmatpush1.bf16.msra.mxu0 %v1330
    %1722 = vmatprep.subr.bf16.mxu0 0
    %1723 = vmatpush1.bf16.msra.mxu0 %v1331
    %1724 = vmatprep.subr.bf16.mxu0 0
    %1725 = vmatpush1.bf16.msra.mxu0 %v1332
    %1726 = vmatprep.subr.bf16.mxu0 0
    %1727 = vmatpush1.bf16.msra.mxu0 %v1333
    %1728 = vmatprep.subr.bf16.mxu0 0
    %1729 = vmatpush1.bf16.msra.mxu0 %v1334
    %1730 = vmatprep.subr.bf16.mxu0 0
    %1731 = vmatpush1.bf16.msra.mxu0 %v1335
    %1732 = vmatprep.subr.bf16.mxu0 0
    %1733 = vmatpush1.bf16.msra.mxu0 %v1336
    %1734 = vmatprep.subr.bf16.mxu0 0
    %1735 = vmatpush1.bf16.msra.mxu0 %v1337
    %1736 = vmatprep.subr.bf16.mxu0 0
    %1737 = vmatpush1.bf16.msra.mxu0 %v1338
    %1738 = vmatprep.subr.bf16.mxu0 0
    %1739 = vmatpush1.bf16.msra.mxu0 %v1339
    %1740 = vmatprep.mubr.bf16.mxu0 %v142
    %1741 = vmatmul.mubr.bf16.gmra.mrb[0].mxu0 %v141
    %v1742 = vpop.f32.mrb[0].mxu0
    %v1743 = vadd.f32 %v554, %v1742
    %v1744 = vpop.f32.mrb[0].mxu0
    %v1745 = vpop.f32.mrb[0].mxu0
    %v1746 = vpop.f32.mrb[0].mxu0
    %1747 = vdwg.mxu0
    %1748 = vmatprep.subr.bf16.mxu0 0
    %1749 = vmatpush1.bf16.msra.mxu0 %v1340
    %1750 = vmatprep.subr.bf16.mxu0 0
    %1751 = vmatpush1.bf16.msra.mxu0 %v1341
    %1752 = vmatprep.subr.bf16.mxu0 0
    %1753 = vmatpush1.bf16.msra.mxu0 %v1342
    %1754 = vmatprep.subr.bf16.mxu0 0
    %1755 = vmatpush1.bf16.msra.mxu0 %v1343
    %1756 = vmatprep.subr.bf16.mxu0 0
    %1757 = vmatpush1.bf16.msra.mxu0 %v1344
    %1758 = vmatprep.subr.bf16.mxu0 0
    %1759 = vmatpush1.bf16.msra.mxu0 %v1345
    %1760 = vmatprep.subr.bf16.mxu0 0
    %1761 = vmatpush1.bf16.msra.mxu0 %v1346
    %1762 = vmatprep.subr.bf16.mxu0 0
    %1763 = vmatpush1.bf16.msra.mxu0 %v1347
    %1764 = vmatprep.subr.bf16.mxu0 0
    %1765 = vmatpush1.bf16.msra.mxu0 %v1348
    %1766 = vmatprep.subr.bf16.mxu0 0
    %1767 = vmatpush1.bf16.msra.mxu0 %v1349
    %1768 = vmatprep.subr.bf16.mxu0 0
    %1769 = vmatpush1.bf16.msra.mxu0 %v1350
    %1770 = vmatprep.subr.bf16.mxu0 0
    %1771 = vmatpush1.bf16.msra.mxu0 %v1351
    %1772 = vmatprep.subr.bf16.mxu0 0
    %1773 = vmatpush1.bf16.msra.mxu0 %v1352
    %1774 = vmatprep.subr.bf16.mxu0 0
    %1775 = vmatpush1.bf16.msra.mxu0 %v1353
    %1776 = vmatprep.subr.bf16.mxu0 0
    %1777 = vmatpush1.bf16.msra.mxu0 %v1354
    %1778 = vmatprep.subr.bf16.mxu0 0
    %1779 = vmatpush1.bf16.msra.mxu0 %v1355
    %1780 = vmatprep.mubr.bf16.mxu0 %v144
    %1781 = vmatmul.mubr.bf16.gmra.mrb[0].mxu0 %v143
    %v1782 = vpop.f32.mrb[0].mxu0
    %v1783 = vadd.f32 %v1743, %v1782
    %v1784 = vpop.f32.mrb[0].mxu0
    %v1785 = vpop.f32.mrb[0].mxu0
    %v1786 = vpop.f32.mrb[0].mxu0
    %1787 = vdwg.mxu0
    %1788 = vmatprep.subr.bf16.mxu0 0
    %1789 = vmatpush1.bf16.msra.mxu0 %v1356
    %1790 = vmatprep.subr.bf16.mxu0 0
    %1791 = vmatpush1.bf16.msra.mxu0 %v1357
    %1792 = vmatprep.subr.bf16.mxu0 0
    %1793 = vmatpush1.bf16.msra.mxu0 %v1358
    %1794 = vmatprep.subr.bf16.mxu0 0
    %1795 = vmatpush1.bf16.msra.mxu0 %v1359
    %1796 = vmatprep.subr.bf16.mxu0 0
    %1797 = vmatpush1.bf16.msra.mxu0 %v1360
    %1798 = vmatprep.subr.bf16.mxu0 0
    %1799 = vmatpush1.bf16.msra.mxu0 %v1361
    %1800 = vmatprep.subr.bf16.mxu0 0
    %1801 = vmatpush1.bf16.msra.mxu0 %v1362
    %1802 = vmatprep.subr.bf16.mxu0 0
    %1803 = vmatpush1.bf16.msra.mxu0 %v1363
    %1804 = vmatprep.subr.bf16.mxu0 0
    %1805 = vmatpush1.bf16.msra.mxu0 %v1364
    %1806 = vmatprep.subr.bf16.mxu0 0
    %1807 = vmatpush1.bf16.msra.mxu0 %v1365
    %1808 = vmatprep.subr.bf16.mxu0 0
    %1809 = vmatpush1.bf16.msra.mxu0 %v1366
    %1810 = vmatprep.subr.bf16.mxu0 0
    %1811 = vmatpush1.bf16.msra.mxu0 %v1367
    %1812 = vmatprep.subr.bf16.mxu0 0
    %1813 = vmatpush1.bf16.msra.mxu0 %v1368
    %1814 = vmatprep.subr.bf16.mxu0 0
    %1815 = vmatpush1.bf16.msra.mxu0 %v1369
    %1816 = vmatprep.subr.bf16.mxu0 0
    %1817 = vmatpush1.bf16.msra.mxu0 %v1370
    %1818 = vmatprep.subr.bf16.mxu0 0
    %1819 = vmatpush1.bf16.msra.mxu0 %v1371
    %1820 = vmatprep.mubr.bf16.mxu0 %v146
    %1821 = vmatmul.mubr.bf16.gmra.mrb[0].mxu0 %v145
    %v1822 = vpop.f32.mrb[0].mxu0
    %v1823 = vadd.f32 %v1783, %v1822
    %v1824 = vpop.f32.mrb[0].mxu0
    %v1825 = vpop.f32.mrb[0].mxu0
    %v1826 = vpop.f32.mrb[0].mxu0
    %1827 = vdwg.mxu0
    %1828 = vmatprep.subr.bf16.mxu0 0
    %1829 = vmatpush1.bf16.msra.mxu0 %v1372
    %1830 = vmatprep.subr.bf16.mxu0 0
    %1831 = vmatpush1.bf16.msra.mxu0 %v1373
    %1832 = vmatprep.subr.bf16.mxu0 0
    %1833 = vmatpush1.bf16.msra.mxu0 %v1374
    %1834 = vmatprep.subr.bf16.mxu0 0
    %1835 = vmatpush1.bf16.msra.mxu0 %v1375
    %1836 = vmatprep.subr.bf16.mxu0 0
    %1837 = vmatpush1.bf16.msra.mxu0 %v1376
    %1838 = vmatprep.subr.bf16.mxu0 0
    %1839 = vmatpush1.bf16.msra.mxu0 %v1377
    %1840 = vmatprep.subr.bf16.mxu0 0
    %1841 = vmatpush1.bf16.msra.mxu0 %v1378
    %1842 = vmatprep.subr.bf16.mxu0 0
    %1843 = vmatpush1.bf16.msra.mxu0 %v1379
    %1844 = vmatprep.subr.bf16.mxu0 0
    %1845 = vmatpush1.bf16.msra.mxu0 %v1380
    %1846 = vmatprep.subr.bf16.mxu0 0
    %1847 = vmatpush1.bf16.msra.mxu0 %v1381
    %1848 = vmatprep.subr.bf16.mxu0 0
    %1849 = vmatpush1.bf16.msra.mxu0 %v1382
    %1850 = vmatprep.subr.bf16.mxu0 0
    %1851 = vmatpush1.bf16.msra.mxu0 %v1383
    %1852 = vmatprep.subr.bf16.mxu0 0
    %1853 = vmatpush1.bf16.msra.mxu0 %v1384
    %1854 = vmatprep.subr.bf16.mxu0 0
    %1855 = vmatpush1.bf16.msra.mxu0 %v1385
    %1856 = vmatprep.subr.bf16.mxu0 0
    %1857 = vmatpush1.bf16.msra.mxu0 %v1386
    %1858 = vmatprep.subr.bf16.mxu0 0
    %1859 = vmatpush1.bf16.msra.mxu0 %v1387
    %1860 = vmatprep.mubr.bf16.mxu0 %v148
    %1861 = vmatmul.mubr.bf16.gmra.mrb[0].mxu0 %v147
    %v1862 = vpop.f32.mrb[0].mxu0
    %v1863 = vadd.f32 %v1823, %v1862
    %v1864 = vpop.f32.mrb[0].mxu0
    %v1865 = vpop.f32.mrb[0].mxu0
    %v1866 = vpop.f32.mrb[0].mxu0
    %1867 = vdwg.mxu0
    %1868 = vmatprep.subr.bf16.mxu0 0
    %1869 = vmatpush1.bf16.msra.mxu0 %v1388
    %1870 = vmatprep.subr.bf16.mxu0 0
    %1871 = vmatpush1.bf16.msra.mxu0 %v1389
    %1872 = vmatprep.subr.bf16.mxu0 0
    %1873 = vmatpush1.bf16.msra.mxu0 %v1390
    %1874 = vmatprep.subr.bf16.mxu0 0
    %1875 = vmatpush1.bf16.msra.mxu0 %v1391
    %1876 = vmatprep.subr.bf16.mxu0 0
    %1877 = vmatpush1.bf16.msra.mxu0 %v1392
    %1878 = vmatprep.subr.bf16.mxu0 0
    %1879 = vmatpush1.bf16.msra.mxu0 %v1393
    %1880 = vmatprep.subr.bf16.mxu0 0
    %1881 = vmatpush1.bf16.msra.mxu0 %v1394
    %1882 = vmatprep.subr.bf16.mxu0 0
    %1883 = vmatpush1.bf16.msra.mxu0 %v1395
    %1884 = vmatprep.subr.bf16.mxu0 0
    %1885 = vmatpush1.bf16.msra.mxu0 %v1396
    %1886 = vmatprep.subr.bf16.mxu0 0
    %1887 = vmatpush1.bf16.msra.mxu0 %v1397
    %1888 = vmatprep.subr.bf16.mxu0 0
    %1889 = vmatpush1.bf16.msra.mxu0 %v1398
    %1890 = vmatprep.subr.bf16.mxu0 0
    %1891 = vmatpush1.bf16.msra.mxu0 %v1399
    %1892 = vmatprep.subr.bf16.mxu0 0
    %1893 = vmatpush1.bf16.msra.mxu0 %v1400
    %1894 = vmatprep.subr.bf16.mxu0 0
    %1895 = vmatpush1.bf16.msra.mxu0 %v1401
    %1896 = vmatprep.subr.bf16.mxu0 0
    %1897 = vmatpush1.bf16.msra.mxu0 %v1402
    %1898 = vmatprep.subr.bf16.mxu0 0
    %1899 = vmatpush1.bf16.msra.mxu0 %v1403
    %1900 = vmatprep.mubr.bf16.mxu0 %v150
    %1901 = vmatmul.mubr.bf16.gmra.mrb[0].mxu0 %v149
    %v1902 = vpop.f32.mrb[0].mxu0
    %v1903 = vadd.f32 %v1863, %v1902
    %v1904 = vpop.f32.mrb[0].mxu0
    %v1905 = vpop.f32.mrb[0].mxu0
    %v1906 = vpop.f32.mrb[0].mxu0
    %1907 = vdwg.mxu0
    %1908 = vmatprep.subr.bf16.mxu0 0
    %1909 = vmatpush1.bf16.msra.mxu0 %v1404
    %1910 = vmatprep.subr.bf16.mxu0 0
    %1911 = vmatpush1.bf16.msra.mxu0 %v1405
    %1912 = vmatprep.subr.bf16.mxu0 0
    %1913 = vmatpush1.bf16.msra.mxu0 %v1406
    %1914 = vmatprep.subr.bf16.mxu0 0
    %1915 = vmatpush1.bf16.msra.mxu0 %v1407
    %1916 = vmatprep.subr.bf16.mxu0 0
    %1917 = vmatpush1.bf16.msra.mxu0 %v1408
    %1918 = vmatprep.subr.bf16.mxu0 0
    %1919 = vmatpush1.bf16.msra.mxu0 %v1409
    %1920 = vmatprep.subr.bf16.mxu0 0
    %1921 = vmatpush1.bf16.msra.mxu0 %v1410
    %1922 = vmatprep.subr.bf16.mxu0 0
    %1923 = vmatpush1.bf16.msra.mxu0 %v1411
    %1924 = vmatprep.subr.bf16.mxu0 0
    %1925 = vmatpush1.bf16.msra.mxu0 %v1412
    %1926 = vmatprep.subr.bf16.mxu0 0
    %1927 = vmatpush1.bf16.msra.mxu0 %v1413
    %1928 = vmatprep.subr.bf16.mxu0 0
    %1929 = vmatpush1.bf16.msra.mxu0 %v1414
    %1930 = vmatprep.subr.bf16.mxu0 0
    %1931 = vmatpush1.bf16.msra.mxu0 %v1415
    %1932 = vmatprep.subr.bf16.mxu0 0
    %1933 = vmatpush1.bf16.msra.mxu0 %v1416
    %1934 = vmatprep.subr.bf16.mxu0 0
    %1935 = vmatpush1.bf16.msra.mxu0 %v1417
    %1936 = vmatprep.subr.bf16.mxu0 0
    %1937 = vmatpush1.bf16.msra.mxu0 %v1418
    %1938 = vmatprep.subr.bf16.mxu0 0
    %1939 = vmatpush1.bf16.msra.mxu0 %v1419
    %1940 = vmatprep.mubr.bf16.mxu0 %v152
    %1941 = vmatmul.mubr.bf16.gmra.mrb[0].mxu0 %v151
    %v1942 = vpop.f32.mrb[0].mxu0
    %v1943 = vadd.f32 %v1903, %v1942
    %v1944 = vpop.f32.mrb[0].mxu0
    %v1945 = vpop.f32.mrb[0].mxu0
    %v1946 = vpop.f32.mrb[0].mxu0
    %1947 = vdwg.mxu0
    %1948 = vmatprep.subr.bf16.mxu0 0
    %1949 = vmatpush1.bf16.msra.mxu0 %v1420
    %1950 = vmatprep.subr.bf16.mxu0 0
    %1951 = vmatpush1.bf16.msra.mxu0 %v1421
    %1952 = vmatprep.subr.bf16.mxu0 0
    %1953 = vmatpush1.bf16.msra.mxu0 %v1422
    %1954 = vmatprep.subr.bf16.mxu0 0
    %1955 = vmatpush1.bf16.msra.mxu0 %v1423
    %1956 = vmatprep.subr.bf16.mxu0 0
    %1957 = vmatpush1.bf16.msra.mxu0 %v1424
    %1958 = vmatprep.subr.bf16.mxu0 0
    %1959 = vmatpush1.bf16.msra.mxu0 %v1425
    %1960 = vmatprep.subr.bf16.mxu0 0
    %1961 = vmatpush1.bf16.msra.mxu0 %v1426
    %1962 = vmatprep.subr.bf16.mxu0 0
    %1963 = vmatpush1.bf16.msra.mxu0 %v1427
    %1964 = vmatprep.subr.bf16.mxu0 0
    %1965 = vmatpush1.bf16.msra.mxu0 %v1428
    %1966 = vmatprep.subr.bf16.mxu0 0
    %1967 = vmatpush1.bf16.msra.mxu0 %v1429
    %1968 = vmatprep.subr.bf16.mxu0 0
    %1969 = vmatpush1.bf16.msra.mxu0 %v1430
    %1970 = vmatprep.subr.bf16.mxu0 0
    %1971 = vmatpush1.bf16.msra.mxu0 %v1431
    %1972 = vmatprep.subr.bf16.mxu0 0
    %1973 = vmatpush1.bf16.msra.mxu0 %v1432
    %1974 = vmatprep.subr.bf16.mxu0 0
    %1975 = vmatpush1.bf16.msra.mxu0 %v1433
    %1976 = vmatprep.subr.bf16.mxu0 0
    %1977 = vmatpush1.bf16.msra.mxu0 %v1434
    %1978 = vmatprep.subr.bf16.mxu0 0
    %1979 = vmatpush1.bf16.msra.mxu0 %v1435
    %1980 = vmatprep.mubr.bf16.mxu0 %v154
    %1981 = vmatmul.mubr.bf16.gmra.mrb[0].mxu0 %v153
    %v1982 = vpop.f32.mrb[0].mxu0
    %v1983 = vadd.f32 %v1943, %v1982
    %v1984 = vpop.f32.mrb[0].mxu0
    %v1985 = vpop.f32.mrb[0].mxu0
    %v1986 = vpop.f32.mrb[0].mxu0
    %1987 = vdwg.mxu0
    %1988 = vmatprep.subr.bf16.mxu0 0
    %1989 = vmatpush1.bf16.msra.mxu0 %v1436
    %1990 = vmatprep.subr.bf16.mxu0 0
    %1991 = vmatpush1.bf16.msra.mxu0 %v1437
    %1992 = vmatprep.subr.bf16.mxu0 0
    %1993 = vmatpush1.bf16.msra.mxu0 %v1438
    %1994 = vmatprep.subr.bf16.mxu0 0
    %1995 = vmatpush1.bf16.msra.mxu0 %v1439
    %1996 = vmatprep.subr.bf16.mxu0 0
    %1997 = vmatpush1.bf16.msra.mxu0 %v1440
    %1998 = vmatprep.subr.bf16.mxu0 0
    %1999 = vmatpush1.bf16.msra.mxu0 %v1441
    %2000 = vmatprep.subr.bf16.mxu0 0
    %2001 = vmatpush1.bf16.msra.mxu0 %v1442
    %2002 = vmatprep.subr.bf16.mxu0 0
    %2003 = vmatpush1.bf16.msra.mxu0 %v1443
    %2004 = vmatprep.subr.bf16.mxu0 0
    %2005 = vmatpush1.bf16.msra.mxu0 %v1444
    %2006 = vmatprep.subr.bf16.mxu0 0
    %2007 = vmatpush1.bf16.msra.mxu0 %v1445
    %2008 = vmatprep.subr.bf16.mxu0 0
    %2009 = vmatpush1.bf16.msra.mxu0 %v1446
    %2010 = vmatprep.subr.bf16.mxu0 0
    %2011 = vmatpush1.bf16.msra.mxu0 %v1447
    %2012 = vmatprep.subr.bf16.mxu0 0
    %2013 = vmatpush1.bf16.msra.mxu0 %v1448
    %2014 = vmatprep.subr.bf16.mxu0 0
    %2015 = vmatpush1.bf16.msra.mxu0 %v1449
    %2016 = vmatprep.subr.bf16.mxu0 0
    %2017 = vmatpush1.bf16.msra.mxu0 %v1450
    %2018 = vmatprep.subr.bf16.mxu0 0
    %2019 = vmatpush1.bf16.msra.mxu0 %v1451
    %2020 = vmatprep.mubr.bf16.mxu0 %v156
    %2021 = vmatmul.mubr.bf16.gmra.mrb[0].mxu0 %v155
    %v2022 = vpop.f32.mrb[0].mxu0
    %v2023 = vadd.f32 %v1983, %v2022
    %v2024 = vpop.f32.mrb[0].mxu0
    %v2025 = vpop.f32.mrb[0].mxu0
    %v2026 = vpop.f32.mrb[0].mxu0
    %2027 = vdwg.mxu0
    %2028 = vmatprep.subr.bf16.mxu0 0
    %2029 = vmatpush1.bf16.msra.mxu0 %v1452
    %2030 = vmatprep.subr.bf16.mxu0 0
    %2031 = vmatpush1.bf16.msra.mxu0 %v1453
    %2032 = vmatprep.subr.bf16.mxu0 0
    %2033 = vmatpush1.bf16.msra.mxu0 %v1454
    %2034 = vmatprep.subr.bf16.mxu0 0
    %2035 = vmatpush1.bf16.msra.mxu0 %v1455
    %2036 = vmatprep.subr.bf16.mxu0 0
    %2037 = vmatpush1.bf16.msra.mxu0 %v1456
    %2038 = vmatprep.subr.bf16.mxu0 0
    %2039 = vmatpush1.bf16.msra.mxu0 %v1457
    %2040 = vmatprep.subr.bf16.mxu0 0
    %2041 = vmatpush1.bf16.msra.mxu0 %v1458
    %2042 = vmatprep.subr.bf16.mxu0 0
    %2043 = vmatpush1.bf16.msra.mxu0 %v1459
    %2044 = vmatprep.subr.bf16.mxu0 0
    %2045 = vmatpush1.bf16.msra.mxu0 %v1460
    %2046 = vmatprep.subr.bf16.mxu0 0
    %2047 = vmatpush1.bf16.msra.mxu0 %v1461
    %2048 = vmatprep.subr.bf16.mxu0 0
    %2049 = vmatpush1.bf16.msra.mxu0 %v1462
    %2050 = vmatprep.subr.bf16.mxu0 0
    %2051 = vmatpush1.bf16.msra.mxu0 %v1463
    %2052 = vmatprep.subr.bf16.mxu0 0
    %2053 = vmatpush1.bf16.msra.mxu0 %v1464
    %2054 = vmatprep.subr.bf16.mxu0 0
    %2055 = vmatpush1.bf16.msra.mxu0 %v1465
    %2056 = vmatprep.subr.bf16.mxu0 0
    %2057 = vmatpush1.bf16.msra.mxu0 %v1466
    %2058 = vmatprep.subr.bf16.mxu0 0
    %2059 = vmatpush1.bf16.msra.mxu0 %v1467
    %2060 = vmatprep.mubr.bf16.mxu0 %v158
    %2061 = vmatmul.mubr.bf16.gmra.mrb[0].mxu0 %v157
    %v2062 = vpop.f32.mrb[0].mxu0
    %v2063 = vadd.f32 %v2023, %v2062
    %v2064 = vpop.f32.mrb[0].mxu0
    %v2065 = vpop.f32.mrb[0].mxu0
    %v2066 = vpop.f32.mrb[0].mxu0
    %2067 = vdwg.mxu0
    %2068 = vmatprep.subr.bf16.mxu0 0
    %2069 = vmatpush1.bf16.msra.mxu0 %v1468
    %2070 = vmatprep.subr.bf16.mxu0 0
    %2071 = vmatpush1.bf16.msra.mxu0 %v1469
    %2072 = vmatprep.subr.bf16.mxu0 0
    %2073 = vmatpush1.bf16.msra.mxu0 %v1470
    %2074 = vmatprep.subr.bf16.mxu0 0
    %2075 = vmatpush1.bf16.msra.mxu0 %v1471
    %2076 = vmatprep.subr.bf16.mxu0 0
    %2077 = vmatpush1.bf16.msra.mxu0 %v1472
    %2078 = vmatprep.subr.bf16.mxu0 0
    %2079 = vmatpush1.bf16.msra.mxu0 %v1473
    %2080 = vmatprep.subr.bf16.mxu0 0
    %2081 = vmatpush1.bf16.msra.mxu0 %v1474
    %2082 = vmatprep.subr.bf16.mxu0 0
    %2083 = vmatpush1.bf16.msra.mxu0 %v1475
    %2084 = vmatprep.subr.bf16.mxu0 0
    %2085 = vmatpush1.bf16.msra.mxu0 %v1476
    %2086 = vmatprep.subr.bf16.mxu0 0
    %2087 = vmatpush1.bf16.msra.mxu0 %v1477
    %2088 = vmatprep.subr.bf16.mxu0 0
    %2089 = vmatpush1.bf16.msra.mxu0 %v1478
    %2090 = vmatprep.subr.bf16.mxu0 0
    %2091 = vmatpush1.bf16.msra.mxu0 %v1479
    %2092 = vmatprep.subr.bf16.mxu0 0
    %2093 = vmatpush1.bf16.msra.mxu0 %v1480
    %2094 = vmatprep.subr.bf16.mxu0 0
    %2095 = vmatpush1.bf16.msra.mxu0 %v1481
    %2096 = vmatprep.subr.bf16.mxu0 0
    %2097 = vmatpush1.bf16.msra.mxu0 %v1482
    %2098 = vmatprep.subr.bf16.mxu0 0
    %2099 = vmatpush1.bf16.msra.mxu0 %v1483
    %2100 = vmatprep.mubr.bf16.mxu0 %v160
    %2101 = vmatmul.mubr.bf16.gmra.mrb[0].mxu0 %v159
    %v2102 = vpop.f32.mrb[0].mxu0
    %v2103 = vadd.f32 %v2063, %v2102
    %v2104 = vpop.f32.mrb[0].mxu0
    %v2105 = vpop.f32.mrb[0].mxu0
    %v2106 = vpop.f32.mrb[0].mxu0
    %2107 = vdwg.mxu0
    %2108 = vmatprep.subr.bf16.mxu0 0
    %2109 = vmatpush1.bf16.msra.mxu0 %v1484
    %2110 = vmatprep.subr.bf16.mxu0 0
    %2111 = vmatpush1.bf16.msra.mxu0 %v1485
    %2112 = vmatprep.subr.bf16.mxu0 0
    %2113 = vmatpush1.bf16.msra.mxu0 %v1486
    %2114 = vmatprep.subr.bf16.mxu0 0
    %2115 = vmatpush1.bf16.msra.mxu0 %v1487
    %2116 = vmatprep.subr.bf16.mxu0 0
    %2117 = vmatpush1.bf16.msra.mxu0 %v1488
    %2118 = vmatprep.subr.bf16.mxu0 0
    %2119 = vmatpush1.bf16.msra.mxu0 %v1489
    %2120 = vmatprep.subr.bf16.mxu0 0
    %2121 = vmatpush1.bf16.msra.mxu0 %v1490
    %2122 = vmatprep.subr.bf16.mxu0 0
    %2123 = vmatpush1.bf16.msra.mxu0 %v1491
    %2124 = vmatprep.subr.bf16.mxu0 0
    %2125 = vmatpush1.bf16.msra.mxu0 %v1492
    %2126 = vmatprep.subr.bf16.mxu0 0
    %2127 = vmatpush1.bf16.msra.mxu0 %v1493
    %2128 = vmatprep.subr.bf16.mxu0 0
    %2129 = vmatpush1.bf16.msra.mxu0 %v1494
    %2130 = vmatprep.subr.bf16.mxu0 0
    %2131 = vmatpush1.bf16.msra.mxu0 %v1495
    %2132 = vmatprep.subr.bf16.mxu0 0
    %2133 = vmatpush1.bf16.msra.mxu0 %v1496
    %2134 = vmatprep.subr.bf16.mxu0 0
    %2135 = vmatpush1.bf16.msra.mxu0 %v1497
    %2136 = vmatprep.subr.bf16.mxu0 0
    %2137 = vmatpush1.bf16.msra.mxu0 %v1498
    %2138 = vmatprep.subr.bf16.mxu0 0
    %2139 = vmatpush1.bf16.msra.mxu0 %v1499
    %2140 = vmatprep.mubr.bf16.mxu0 %v162
    %2141 = vmatmul.mubr.bf16.gmra.mrb[0].mxu0 %v161
    %v2142 = vpop.f32.mrb[0].mxu0
    %v2143 = vadd.f32 %v2103, %v2142
    %v2144 = vpop.f32.mrb[0].mxu0
    %v2145 = vpop.f32.mrb[0].mxu0
    %v2146 = vpop.f32.mrb[0].mxu0
    %2147 = vdwg.mxu0
    %2148 = vmatprep.subr.bf16.mxu0 0
    %2149 = vmatpush1.bf16.msra.mxu0 %v1500
    %2150 = vmatprep.subr.bf16.mxu0 0
    %2151 = vmatpush1.bf16.msra.mxu0 %v1501
    %2152 = vmatprep.subr.bf16.mxu0 0
    %2153 = vmatpush1.bf16.msra.mxu0 %v1502
    %2154 = vmatprep.subr.bf16.mxu0 0
    %2155 = vmatpush1.bf16.msra.mxu0 %v1503
    %2156 = vmatprep.subr.bf16.mxu0 0
    %2157 = vmatpush1.bf16.msra.mxu0 %v1504
    %2158 = vmatprep.subr.bf16.mxu0 0
    %2159 = vmatpush1.bf16.msra.mxu0 %v1505
    %2160 = vmatprep.subr.bf16.mxu0 0
    %2161 = vmatpush1.bf16.msra.mxu0 %v1506
    %2162 = vmatprep.subr.bf16.mxu0 0
    %2163 = vmatpush1.bf16.msra.mxu0 %v1507
    %2164 = vmatprep.subr.bf16.mxu0 0
    %2165 = vmatpush1.bf16.msra.mxu0 %v1508
    %2166 = vmatprep.subr.bf16.mxu0 0
    %2167 = vmatpush1.bf16.msra.mxu0 %v1509
    %2168 = vmatprep.subr.bf16.mxu0 0
    %2169 = vmatpush1.bf16.msra.mxu0 %v1510
    %2170 = vmatprep.subr.bf16.mxu0 0
    %2171 = vmatpush1.bf16.msra.mxu0 %v1511
    %2172 = vmatprep.subr.bf16.mxu0 0
    %2173 = vmatpush1.bf16.msra.mxu0 %v1512
    %2174 = vmatprep.subr.bf16.mxu0 0
    %2175 = vmatpush1.bf16.msra.mxu0 %v1513
    %2176 = vmatprep.subr.bf16.mxu0 0
    %2177 = vmatpush1.bf16.msra.mxu0 %v1514
    %2178 = vmatprep.subr.bf16.mxu0 0
    %2179 = vmatpush1.bf16.msra.mxu0 %v1515
    %2180 = vmatprep.mubr.bf16.mxu0 %v164
    %2181 = vmatmul.mubr.bf16.gmra.mrb[0].mxu0 %v163
    %v2182 = vpop.f32.mrb[0].mxu0
    %v2183 = vadd.f32 %v2143, %v2182
    %v2184 = vpop.f32.mrb[0].mxu0
    %v2185 = vpop.f32.mrb[0].mxu0
    %v2186 = vpop.f32.mrb[0].mxu0
    %2187 = vdwg.mxu0
    %v2188 = vmax.f32 %v2183, 0.0
    %v2189 = vpack.c.bf16 %v2188, %v2188
    %v2190 = vld [vmem:[#allocation7] sm:$0xf]
    %v2191 = vld [vmem:[#allocation7 + $0x4] sm:$0xf]
    %v2192 = vld [vmem:[#allocation7 + $0x8] sm:$0xf]
    %v2193 = vld [vmem:[#allocation7 + $0xc] sm:$0xf]
    %v2194 = vld [vmem:[#allocation7 + $0x10] sm:$0xf]
    %v2195 = vld [vmem:[#allocation7 + $0x14] sm:$0xf]
    %v2196 = vld [vmem:[#allocation7 + $0x18] sm:$0xf]
    %v2197 = vld [vmem:[#allocation7 + $0x1c] sm:$0xf]
    %v2198 = vld [vmem:[#allocation7 + $0x20] sm:$0xf]
    %v2199 = vld [vmem:[#allocation7 + $0x24] sm:$0xf]
    %v2200 = vld [vmem:[#allocation7 + $0x28] sm:$0xf]
    %v2201 = vld [vmem:[#allocation7 + $0x2c] sm:$0xf]
    %v2202 = vld [vmem:[#allocation7 + $0x30] sm:$0xf]
    %v2203 = vld [vmem:[#allocation7 + $0x34] sm:$0xf]
    %v2204 = vld [vmem:[#allocation7 + $0x38] sm:$0xf]
    %v2205 = vld [vmem:[#allocation7 + $0x3c] sm:$0xf]
    %v2206 = vld [vmem:[%s4] sm:$0x1]
    %v2208 = vlaneseq
    %v2209 = vshrl.u32 %v2208, 7
    %v2210 = vsub.s32 0, %v2209
    %v2211 = vrot.slane %v2206, %v2210
    %v2229 = vunpack.c.l.b16 %v2190
    %v2230 = vunpack.c.l.b16 %v2191
    %v2231 = vunpack.c.l.b16 %v2192
    %v2232 = vunpack.c.l.b16 %v2193
    %v2233 = vunpack.c.l.b16 %v2194
    %v2234 = vunpack.c.l.b16 %v2195
    %v2235 = vunpack.c.l.b16 %v2196
    %v2236 = vunpack.c.l.b16 %v2197
    %v2237 = vunpack.c.l.b16 %v2198
    %v2238 = vunpack.c.l.b16 %v2199
    %v2239 = vunpack.c.l.b16 %v2200
    %v2240 = vunpack.c.l.b16 %v2201
    %v2241 = vunpack.c.l.b16 %v2202
    %v2242 = vunpack.c.l.b16 %v2203
    %v2243 = vunpack.c.l.b16 %v2204
    %v2244 = vunpack.c.l.b16 %v2205
    %v2245 = vpack.c.b16 %v2230, %v2229
    %v2246 = vpack.c.b16 %v2232, %v2231
    %v2247 = vpack.c.b16 %v2234, %v2233
    %v2248 = vpack.c.b16 %v2236, %v2235
    %v2249 = vpack.c.b16 %v2238, %v2237
    %v2250 = vpack.c.b16 %v2240, %v2239
    %v2251 = vpack.c.b16 %v2242, %v2241
    %v2252 = vpack.c.b16 %v2244, %v2243
    %2261 = vmatprep.subr.bf16.mxu0 0
    %2262 = vmatpush1.bf16.msra.mxu0 %v2245
    %2263 = vmatprep.subr.bf16.mxu0 0
    %2264 = vmatpush1.bf16.msra.mxu0 %v2246
    %2265 = vmatprep.subr.bf16.mxu0 0
    %2266 = vmatpush1.bf16.msra.mxu0 %v2247
    %2267 = vmatprep.subr.bf16.mxu0 0
    %2268 = vmatpush1.bf16.msra.mxu0 %v2248
    %2269 = vmatprep.subr.bf16.mxu0 0
    %2270 = vmatpush1.bf16.msra.mxu0 %v2249
    %2271 = vmatprep.subr.bf16.mxu0 0
    %2272 = vmatpush1.bf16.msra.mxu0 %v2250
    %2273 = vmatprep.subr.bf16.mxu0 0
    %2274 = vmatpush1.bf16.msra.mxu0 %v2251
    %2275 = vmatprep.subr.bf16.mxu0 0
    %2276 = vmatpush1.bf16.msra.mxu0 %v2252
    %2277 = vmatprep.subr.bf16.mxu0 0
    %2278 = vmatpush1.bf16.msra.mxu0 0
    %2279 = vmatprep.subr.bf16.mxu0 0
    %2280 = vmatpush1.bf16.msra.mxu0 0
    %2281 = vmatprep.subr.bf16.mxu0 0
    %2282 = vmatpush1.bf16.msra.mxu0 0
    %2283 = vmatprep.subr.bf16.mxu0 0
    %2284 = vmatpush1.bf16.msra.mxu0 0
    %2285 = vmatprep.subr.bf16.mxu0 0
    %2286 = vmatpush1.bf16.msra.mxu0 0
    %2287 = vmatprep.subr.bf16.mxu0 0
    %2288 = vmatpush1.bf16.msra.mxu0 0
    %2289 = vmatprep.subr.bf16.mxu0 0
    %2290 = vmatpush1.bf16.msra.mxu0 0
    %2291 = vmatprep.subr.bf16.mxu0 0
    %2292 = vmatpush1.bf16.msra.mxu0 0
    %2293 = vmatprep.mubr.bf16.mxu0 0
    %2294 = vmatmul.mubr.bf16.gmra.mrb[0].mxu0 %v2189
    %v2295 = vpop.f32.mrb[0].mxu0
    %v2296 = vadd.f32 %v2211, %v2295
    %v2297 = vpop.f32.mrb[0].mxu0
    %v2298 = vpop.f32.mrb[0].mxu0
    %v2299 = vpop.f32.mrb[0].mxu0
    %2300 = vdwg.mxu0
    %v2301 = vld [vmem:[%s9] sm:$0xff]
    %v2302 = vmul.f32 %v2296, 0.5
    %v2303 = vmul.f32 %v2302, 1.442695
    %v2304 = vpow.pop %v2303
    %2306 = vrot.lane.b32.xlu0 %v2304, 112
    %v2307 = vpop.permute.xlu0 %2306
    %v2309 = vmul.f32 %v2301, %v2307
    %v2310 = vadd.f32 %v2296, %v2309
    %v2311 = vpack.c.bf16 %v2310, %v2310
    %v2312 = vld [vmem:[#allocation8] sm:$0xf]
    %v2313 = vld [vmem:[#allocation8 + $0x4] sm:$0xf]
    %v2314 = vld [vmem:[#allocation10] sm:$0x1]
    %v2316 = vlaneseq
    %v2317 = vshrl.u32 %v2316, 7
    %v2318 = vsub.s32 0, %v2317
    %v2319 = vrot.slane %v2314, %v2318
    %v2323 = vunpack.c.l.b16 %v2312
    %v2324 = vunpack.c.l.b16 %v2313
    %v2325 = vpack.c.b16 %v2324, %v2323
    %vm2327 = vcmask 130048
    %v2329 = vsel %vm2327, %v2311, 0
    %2331 = vmatprep.subr.bf16.mxu0 0
    %2332 = vmatpush1.bf16.msra.mxu0 %v2325
    %2333 = vmatprep.subr.bf16.mxu0 0
    %2334 = vmatpush1.bf16.msra.mxu0 0
    %2335 = vmatprep.subr.bf16.mxu0 0
    %2336 = vmatpush1.bf16.msra.mxu0 0
    %2337 = vmatprep.subr.bf16.mxu0 0
    %2338 = vmatpush1.bf16.msra.mxu0 0
    %2339 = vmatprep.subr.bf16.mxu0 0
    %2340 = vmatpush1.bf16.msra.mxu0 0
    %2341 = vmatprep.subr.bf16.mxu0 0
    %2342 = vmatpush1.bf16.msra.mxu0 0
    %2343 = vmatprep.subr.bf16.mxu0 0
    %2344 = vmatpush1.bf16.msra.mxu0 0
    %2345 = vmatprep.subr.bf16.mxu0 0
    %2346 = vmatpush1.bf16.msra.mxu0 0
    %2347 = vmatprep.subr.bf16.mxu0 0
    %2348 = vmatpush1.bf16.msra.mxu0 0
    %2349 = vmatprep.subr.bf16.mxu0 0
    %2350 = vmatpush1.bf16.msra.mxu0 0
    %2351 = vmatprep.subr.bf16.mxu0 0
    %2352 = vmatpush1.bf16.msra.mxu0 0
    %2353 = vmatprep.subr.bf16.mxu0 0
    %2354 = vmatpush1.bf16.msra.mxu0 0
    %2355 = vmatprep.subr.bf16.mxu0 0
    %2356 = vmatpush1.bf16.msra.mxu0 0
    %2357 = vmatprep.subr.bf16.mxu0 0
    %2358 = vmatpush1.bf16.msra.mxu0 0
    %2359 = vmatprep.subr.bf16.mxu0 0
    %2360 = vmatpush1.bf16.msra.mxu0 0
    %2361 = vmatprep.subr.bf16.mxu0 0
    %2362 = vmatpush1.bf16.msra.mxu0 0
    %2363 = vmatprep.mubr.bf16.mxu0 0
    %2364 = vmatmul.mubr.bf16.gmra.mrb[0].mxu0 %v2329
    %v2365 = vpop.f32.mrb[0].mxu0
    %v2366 = vadd.f32 %v2319, %v2365
    %v2367 = vpop.f32.mrb[0].mxu0
    %v2368 = vpop.f32.mrb[0].mxu0
    %v2369 = vpop.f32.mrb[0].mxu0
    %2370 = vdwg.mxu0
    %v2371 = vmax.f32 %v2366, 0.0
    %v2372 = vpack.c.bf16 %v2371, %v2371
    %v2373 = vld [vmem:[#allocation11] sm:$0xff]
    %v2374 = vld [vmem:[#allocation11 + $0x8] sm:$0xff]
    %v2375 = vld [vmem:[#allocation11 + $0x10] sm:$0xff]
    %v2376 = vld [vmem:[#allocation11 + $0x18] sm:$0xff]
    %v2377 = vld [vmem:[#allocation11 + $0x20] sm:$0xff]
    %v2378 = vld [vmem:[#allocation11 + $0x28] sm:$0xff]
    %v2379 = vld [vmem:[#allocation11 + $0x30] sm:$0xff]
    %v2380 = vld [vmem:[#allocation11 + $0x38] sm:$0xff]
    %v2381 = vld [vmem:[#allocation11 + $0x40] sm:$0xff]
    %v2382 = vld [vmem:[#allocation11 + $0x48] sm:$0xff]
    %v2383 = vld [vmem:[#allocation11 + $0x50] sm:$0xff]
    %v2384 = vld [vmem:[#allocation11 + $0x58] sm:$0xff]
    %v2385 = vld [vmem:[#allocation11 + $0x60] sm:$0xff]
    %v2386 = vld [vmem:[#allocation11 + $0x68] sm:$0xff]
    %v2387 = vld [vmem:[#allocation11 + $0x70] sm:$0xff]
    %v2388 = vld [vmem:[#allocation11 + $0x78] sm:$0xff]
    %v2389 = vld [vmem:[#allocation11 + $0x80] sm:$0xff]
    %v2390 = vld [vmem:[#allocation11 + $0x88] sm:$0xff]
    %v2391 = vld [vmem:[#allocation11 + $0x90] sm:$0xff]
    %v2392 = vld [vmem:[#allocation11 + $0x98] sm:$0xff]
    %v2393 = vld [vmem:[#allocation11 + $0xa0] sm:$0xff]
    %v2394 = vld [vmem:[#allocation11 + $0xa8] sm:$0xff]
    %v2395 = vld [vmem:[#allocation11 + $0xb0] sm:$0xff]
    %v2396 = vld [vmem:[#allocation11 + $0xb8] sm:$0xff]
    %v2397 = vld [vmem:[#allocation11 + $0xc0] sm:$0xff]
    %v2398 = vld [vmem:[#allocation11 + $0xc8] sm:$0xff]
    %v2399 = vld [vmem:[#allocation11 + $0xd0] sm:$0xff]
    %v2400 = vld [vmem:[#allocation11 + $0xd8] sm:$0xff]
    %v2401 = vld [vmem:[#allocation11 + $0xe0] sm:$0xff]
    %v2402 = vld [vmem:[#allocation11 + $0xe8] sm:$0xff]
    %v2403 = vld [vmem:[#allocation11 + $0xf0] sm:$0xff]
    %v2404 = vld [vmem:[#allocation11 + $0xf8] sm:$0xff]
    %v2405 = vld [vmem:[#allocation11 + $0x100] sm:$0xff]
    %v2406 = vld [vmem:[#allocation11 + $0x108] sm:$0xff]
    %v2407 = vld [vmem:[#allocation11 + $0x110] sm:$0xff]
    %v2408 = vld [vmem:[#allocation11 + $0x118] sm:$0xff]
    %v2409 = vld [vmem:[#allocation11 + $0x120] sm:$0xff]
    %v2410 = vld [vmem:[#allocation11 + $0x128] sm:$0xff]
    %v2411 = vld [vmem:[#allocation11 + $0x130] sm:$0xff]
    %v2412 = vld [vmem:[#allocation11 + $0x138] sm:$0xff]
    %v2413 = vld [vmem:[#allocation11 + $0x140] sm:$0xff]
    %v2414 = vld [vmem:[#allocation11 + $0x148] sm:$0xff]
    %v2415 = vld [vmem:[#allocation11 + $0x150] sm:$0xff]
    %v2416 = vld [vmem:[#allocation11 + $0x158] sm:$0xff]
    %v2417 = vld [vmem:[#allocation11 + $0x160] sm:$0xff]
    %v2418 = vld [vmem:[#allocation11 + $0x168] sm:$0xff]
    %v2419 = vld [vmem:[#allocation11 + $0x170] sm:$0xff]
    %v2420 = vld [vmem:[#allocation11 + $0x178] sm:$0xff]
    %v2421 = vld [vmem:[#allocation11 + $0x180] sm:$0xff]
    %v2422 = vld [vmem:[#allocation11 + $0x188] sm:$0xff]
    %v2423 = vld [vmem:[#allocation11 + $0x190] sm:$0xff]
    %v2424 = vld [vmem:[#allocation11 + $0x198] sm:$0xff]
    %v2425 = vld [vmem:[#allocation11 + $0x1a0] sm:$0xff]
    %v2426 = vld [vmem:[#allocation11 + $0x1a8] sm:$0xff]
    %v2427 = vld [vmem:[#allocation11 + $0x1b0] sm:$0xff]
    %v2428 = vld [vmem:[#allocation11 + $0x1b8] sm:$0xff]
    %v2429 = vld [vmem:[#allocation11 + $0x1c0] sm:$0xff]
    %v2430 = vld [vmem:[#allocation11 + $0x1c8] sm:$0xff]
    %v2431 = vld [vmem:[#allocation11 + $0x1d0] sm:$0xff]
    %v2432 = vld [vmem:[#allocation11 + $0x1d8] sm:$0xff]
    %v2433 = vld [vmem:[#allocation11 + $0x1e0] sm:$0xff]
    %v2434 = vld [vmem:[#allocation11 + $0x1e8] sm:$0xff]
    %v2435 = vld [vmem:[#allocation11 + $0x1f0] sm:$0xff]
    %v2436 = vld [vmem:[#allocation11 + $0x1f8] sm:$0xff]
    %v2437 = vld [vmem:[#allocation11 + $0x200] sm:$0xff]
    %v2438 = vld [vmem:[#allocation11 + $0x208] sm:$0xff]
    %v2439 = vld [vmem:[#allocation11 + $0x210] sm:$0xff]
    %v2440 = vld [vmem:[#allocation11 + $0x218] sm:$0xff]
    %v2441 = vld [vmem:[#allocation11 + $0x220] sm:$0xff]
    %v2442 = vld [vmem:[#allocation11 + $0x228] sm:$0xff]
    %v2443 = vld [vmem:[#allocation11 + $0x230] sm:$0xff]
    %v2444 = vld [vmem:[#allocation11 + $0x238] sm:$0xff]
    %v2445 = vld [vmem:[#allocation11 + $0x240] sm:$0xff]
    %v2446 = vld [vmem:[#allocation11 + $0x248] sm:$0xff]
    %v2447 = vld [vmem:[#allocation11 + $0x250] sm:$0xff]
    %v2448 = vld [vmem:[#allocation11 + $0x258] sm:$0xff]
    %v2449 = vld [vmem:[#allocation11 + $0x260] sm:$0xff]
    %v2450 = vld [vmem:[#allocation11 + $0x268] sm:$0xff]
    %v2451 = vld [vmem:[#allocation11 + $0x270] sm:$0xff]
    %v2452 = vld [vmem:[#allocation11 + $0x278] sm:$0xff]
    %v2453 = vld [vmem:[#allocation11 + $0x280] sm:$0xff]
    %v2454 = vld [vmem:[#allocation11 + $0x288] sm:$0xff]
    %v2455 = vld [vmem:[#allocation11 + $0x290] sm:$0xff]
    %v2456 = vld [vmem:[#allocation11 + $0x298] sm:$0xff]
    %v2457 = vld [vmem:[#allocation11 + $0x2a0] sm:$0xff]
    %v2458 = vld [vmem:[#allocation11 + $0x2a8] sm:$0xff]
    %v2459 = vld [vmem:[#allocation11 + $0x2b0] sm:$0xff]
    %v2460 = vld [vmem:[#allocation11 + $0x2b8] sm:$0xff]
    %v2461 = vld [vmem:[#allocation11 + $0x2c0] sm:$0xff]
    %v2462 = vld [vmem:[#allocation11 + $0x2c8] sm:$0xff]
    %v2463 = vld [vmem:[#allocation11 + $0x2d0] sm:$0xff]
    %v2464 = vld [vmem:[#allocation11 + $0x2d8] sm:$0xff]
    %v2465 = vld [vmem:[#allocation11 + $0x2e0] sm:$0xff]
    %v2466 = vld [vmem:[#allocation11 + $0x2e8] sm:$0xff]
    %v2467 = vld [vmem:[#allocation11 + $0x2f0] sm:$0xff]
    %v2468 = vld [vmem:[#allocation11 + $0x2f8] sm:$0xff]
    %v2469 = vld [vmem:[#allocation11 + $0x300] sm:$0xff]
    %v2470 = vld [vmem:[#allocation11 + $0x308] sm:$0xff]
    %v2471 = vld [vmem:[#allocation11 + $0x310] sm:$0xff]
    %v2472 = vld [vmem:[#allocation11 + $0x318] sm:$0xff]
    %v2473 = vld [vmem:[#allocation11 + $0x320] sm:$0xff]
    %v2474 = vld [vmem:[#allocation11 + $0x328] sm:$0xff]
    %v2475 = vld [vmem:[#allocation11 + $0x330] sm:$0xff]
    %v2476 = vld [vmem:[#allocation11 + $0x338] sm:$0xff]
    %v2477 = vld [vmem:[#allocation11 + $0x340] sm:$0xff]
    %v2478 = vld [vmem:[#allocation11 + $0x348] sm:$0xff]
    %v2479 = vld [vmem:[#allocation11 + $0x350] sm:$0xff]
    %v2480 = vld [vmem:[#allocation11 + $0x358] sm:$0xff]
    %v2481 = vld [vmem:[#allocation11 + $0x360] sm:$0xff]
    %v2482 = vld [vmem:[#allocation11 + $0x368] sm:$0xff]
    %v2483 = vld [vmem:[#allocation11 + $0x370] sm:$0xff]
    %v2484 = vld [vmem:[#allocation11 + $0x378] sm:$0xff]
    %v2485 = vld [vmem:[#allocation11 + $0x380] sm:$0xff]
    %v2486 = vld [vmem:[#allocation11 + $0x388] sm:$0xff]
    %v2487 = vld [vmem:[#allocation11 + $0x390] sm:$0xff]
    %v2488 = vld [vmem:[#allocation11 + $0x398] sm:$0xff]
    %v2489 = vld [vmem:[#allocation11 + $0x3a0] sm:$0xff]
    %v2490 = vld [vmem:[#allocation11 + $0x3a8] sm:$0xff]
    %v2491 = vld [vmem:[#allocation11 + $0x3b0] sm:$0xff]
    %v2492 = vld [vmem:[#allocation11 + $0x3b8] sm:$0xff]
    %v2493 = vld [vmem:[#allocation11 + $0x3c0] sm:$0xff]
    %v2494 = vld [vmem:[#allocation11 + $0x3c8] sm:$0xff]
    %v2495 = vld [vmem:[#allocation11 + $0x3d0] sm:$0xff]
    %v2496 = vld [vmem:[#allocation11 + $0x3d8] sm:$0xff]
    %v2497 = vld [vmem:[#allocation11 + $0x3e0] sm:$0xff]
    %v2498 = vld [vmem:[#allocation11 + $0x3e8] sm:$0xff]
    %v2499 = vld [vmem:[#allocation11 + $0x3f0] sm:$0xff]
    %v2500 = vld [vmem:[#allocation11 + $0x3f8] sm:$0xff]
    %v2501 = vld [vmem:[#allocation11 + $0x400] sm:$0xff]
    %v2502 = vld [vmem:[#allocation11 + $0x408] sm:$0xff]
    %v2503 = vld [vmem:[#allocation11 + $0x410] sm:$0xff]
    %v2504 = vld [vmem:[#allocation11 + $0x418] sm:$0xff]
    %v2505 = vld [vmem:[#allocation11 + $0x420] sm:$0xff]
    %v2506 = vld [vmem:[#allocation11 + $0x428] sm:$0xff]
    %v2507 = vld [vmem:[#allocation11 + $0x430] sm:$0xff]
    %v2508 = vld [vmem:[#allocation11 + $0x438] sm:$0xff]
    %v2509 = vld [vmem:[#allocation11 + $0x440] sm:$0xff]
    %v2510 = vld [vmem:[#allocation11 + $0x448] sm:$0xff]
    %v2511 = vld [vmem:[#allocation11 + $0x450] sm:$0xff]
    %v2512 = vld [vmem:[#allocation11 + $0x458] sm:$0xff]
    %v2513 = vld [vmem:[#allocation11 + $0x460] sm:$0xff]
    %v2514 = vld [vmem:[#allocation11 + $0x468] sm:$0xff]
    %v2515 = vld [vmem:[#allocation11 + $0x470] sm:$0xff]
    %v2516 = vld [vmem:[#allocation11 + $0x478] sm:$0xff]
    %v2517 = vld [vmem:[#allocation11 + $0x480] sm:$0xff]
    %v2518 = vld [vmem:[#allocation11 + $0x488] sm:$0xff]
    %v2519 = vld [vmem:[#allocation11 + $0x490] sm:$0xff]
    %v2520 = vld [vmem:[#allocation11 + $0x498] sm:$0xff]
    %v2521 = vld [vmem:[#allocation11 + $0x4a0] sm:$0xff]
    %v2522 = vld [vmem:[#allocation11 + $0x4a8] sm:$0xff]
    %v2523 = vld [vmem:[#allocation11 + $0x4b0] sm:$0xff]
    %v2524 = vld [vmem:[#allocation11 + $0x4b8] sm:$0xff]
    %v2525 = vld [vmem:[#allocation11 + $0x4c0] sm:$0xff]
    %v2526 = vld [vmem:[#allocation11 + $0x4c8] sm:$0xff]
    %v2527 = vld [vmem:[#allocation11 + $0x4d0] sm:$0xff]
    %v2528 = vld [vmem:[#allocation11 + $0x4d8] sm:$0xff]
    %v2529 = vld [vmem:[#allocation11 + $0x4e0] sm:$0xff]
    %v2530 = vld [vmem:[#allocation11 + $0x4e8] sm:$0xff]
    %v2531 = vld [vmem:[#allocation11 + $0x4f0] sm:$0xff]
    %v2532 = vld [vmem:[#allocation11 + $0x4f8] sm:$0xff]
    %v2533 = vld [vmem:[#allocation11 + $0x500] sm:$0xff]
    %v2534 = vld [vmem:[#allocation11 + $0x508] sm:$0xff]
    %v2535 = vld [vmem:[#allocation11 + $0x510] sm:$0xff]
    %v2536 = vld [vmem:[#allocation11 + $0x518] sm:$0xff]
    %v2537 = vld [vmem:[#allocation11 + $0x520] sm:$0xff]
    %v2538 = vld [vmem:[#allocation11 + $0x528] sm:$0xff]
    %v2539 = vld [vmem:[#allocation11 + $0x530] sm:$0xff]
    %v2540 = vld [vmem:[#allocation11 + $0x538] sm:$0xff]
    %v2541 = vld [vmem:[#allocation11 + $0x540] sm:$0xff]
    %v2542 = vld [vmem:[#allocation11 + $0x548] sm:$0xff]
    %v2543 = vld [vmem:[#allocation11 + $0x550] sm:$0xff]
    %v2544 = vld [vmem:[#allocation11 + $0x558] sm:$0xff]
    %v2545 = vld [vmem:[#allocation11 + $0x560] sm:$0xff]
    %v2546 = vld [vmem:[#allocation11 + $0x568] sm:$0xff]
    %v2547 = vld [vmem:[#allocation11 + $0x570] sm:$0xff]
    %v2548 = vld [vmem:[#allocation11 + $0x578] sm:$0xff]
    %v2549 = vld [vmem:[#allocation11 + $0x580] sm:$0xff]
    %v2550 = vld [vmem:[#allocation11 + $0x588] sm:$0xff]
    %v2551 = vld [vmem:[#allocation11 + $0x590] sm:$0xff]
    %v2552 = vld [vmem:[#allocation11 + $0x598] sm:$0xff]
    %v2553 = vld [vmem:[#allocation11 + $0x5a0] sm:$0xff]
    %v2554 = vld [vmem:[#allocation11 + $0x5a8] sm:$0xff]
    %v2555 = vld [vmem:[#allocation11 + $0x5b0] sm:$0xff]
    %v2556 = vld [vmem:[#allocation11 + $0x5b8] sm:$0xff]
    %v2557 = vld [vmem:[#allocation11 + $0x5c0] sm:$0xff]
    %v2558 = vld [vmem:[#allocation11 + $0x5c8] sm:$0xff]
    %v2559 = vld [vmem:[#allocation11 + $0x5d0] sm:$0xff]
    %v2560 = vld [vmem:[#allocation11 + $0x5d8] sm:$0xff]
    %v2561 = vld [vmem:[#allocation11 + $0x5e0] sm:$0xff]
    %v2562 = vld [vmem:[#allocation11 + $0x5e8] sm:$0xff]
    %v2563 = vld [vmem:[#allocation11 + $0x5f0] sm:$0xff]
    %v2564 = vld [vmem:[#allocation11 + $0x5f8] sm:$0xff]
    %v2565 = vld [vmem:[%s8] sm:$0xff]
    %v2566 = vld [vmem:[%s8 + $0x8] sm:$0xff]
    %v2567 = vld [vmem:[%s8 + $0x10] sm:$0xff]
    %v2571 = vlaneseq
    %v2572 = vshrl.u32 %v2571, 7
    %v2573 = vsub.s32 0, %v2572
    %v2574 = vrot.slane %v2565, %v2573
    %v2575 = vlaneseq
    %v2576 = vshrl.u32 %v2575, 7
    %v2577 = vsub.s32 1, %v2576
    %v2578 = vrot.slane %v2565, %v2577
    %v2579 = vlaneseq
    %v2580 = vshrl.u32 %v2579, 7
    %v2581 = vsub.s32 2, %v2580
    %v2582 = vrot.slane %v2565, %v2581
    %v2583 = vlaneseq
    %v2584 = vshrl.u32 %v2583, 7
    %v2585 = vsub.s32 3, %v2584
    %v2586 = vrot.slane %v2565, %v2585
    %v2587 = vlaneseq
    %v2588 = vshrl.u32 %v2587, 7
    %v2589 = vsub.s32 4, %v2588
    %v2590 = vrot.slane %v2565, %v2589
    %v2591 = vlaneseq
    %v2592 = vshrl.u32 %v2591, 7
    %v2593 = vsub.s32 5, %v2592
    %v2594 = vrot.slane %v2565, %v2593
    %v2595 = vlaneseq
    %v2596 = vshrl.u32 %v2595, 7
    %v2597 = vsub.s32 6, %v2596
    %v2598 = vrot.slane %v2565, %v2597
    %v2599 = vlaneseq
    %v2600 = vshrl.u32 %v2599, 7
    %v2601 = vsub.s32 7, %v2600
    %v2602 = vrot.slane %v2565, %v2601
    %v2603 = vlaneseq
    %v2604 = vshrl.u32 %v2603, 7
    %v2605 = vsub.s32 0, %v2604
    %v2606 = vrot.slane %v2566, %v2605
    %v2607 = vlaneseq
    %v2608 = vshrl.u32 %v2607, 7
    %v2609 = vsub.s32 1, %v2608
    %v2610 = vrot.slane %v2566, %v2609
    %v2611 = vlaneseq
    %v2612 = vshrl.u32 %v2611, 7
    %v2613 = vsub.s32 2, %v2612
    %v2614 = vrot.slane %v2566, %v2613
    %v2615 = vlaneseq
    %v2616 = vshrl.u32 %v2615, 7
    %v2617 = vsub.s32 3, %v2616
    %v2618 = vrot.slane %v2566, %v2617
    %v2619 = vlaneseq
    %v2620 = vshrl.u32 %v2619, 7
    %v2621 = vsub.s32 4, %v2620
    %v2622 = vrot.slane %v2566, %v2621
    %v2623 = vlaneseq
    %v2624 = vshrl.u32 %v2623, 7
    %v2625 = vsub.s32 5, %v2624
    %v2626 = vrot.slane %v2566, %v2625
    %v2627 = vlaneseq
    %v2628 = vshrl.u32 %v2627, 7
    %v2629 = vsub.s32 6, %v2628
    %v2630 = vrot.slane %v2566, %v2629
    %v2631 = vlaneseq
    %v2632 = vshrl.u32 %v2631, 7
    %v2633 = vsub.s32 7, %v2632
    %v2634 = vrot.slane %v2566, %v2633
    %v2635 = vlaneseq
    %v2636 = vshrl.u32 %v2635, 7
    %v2637 = vsub.s32 0, %v2636
    %v2638 = vrot.slane %v2567, %v2637
    %v2639 = vlaneseq
    %v2640 = vshrl.u32 %v2639, 7
    %v2641 = vsub.s32 1, %v2640
    %v2642 = vrot.slane %v2567, %v2641
    %v2643 = vlaneseq
    %v2644 = vshrl.u32 %v2643, 7
    %v2645 = vsub.s32 2, %v2644
    %v2646 = vrot.slane %v2567, %v2645
    %v2647 = vlaneseq
    %v2648 = vshrl.u32 %v2647, 7
    %v2649 = vsub.s32 3, %v2648
    %v2650 = vrot.slane %v2567, %v2649
    %v2651 = vlaneseq
    %v2652 = vshrl.u32 %v2651, 7
    %v2653 = vsub.s32 4, %v2652
    %v2654 = vrot.slane %v2567, %v2653
    %v2655 = vlaneseq
    %v2656 = vshrl.u32 %v2655, 7
    %v2657 = vsub.s32 5, %v2656
    %v2658 = vrot.slane %v2567, %v2657
    %v2659 = vlaneseq
    %v2660 = vshrl.u32 %v2659, 7
    %v2661 = vsub.s32 6, %v2660
    %v2662 = vrot.slane %v2567, %v2661
    %v2663 = vlaneseq
    %v2664 = vshrl.u32 %v2663, 7
    %v2665 = vsub.s32 7, %v2664
    %v2666 = vrot.slane %v2567, %v2665
    %v2883 = vunpack.c.l.b16 %v2373
    %v2884 = vunpack.c.h.b16 %v2373
    %v2885 = vunpack.c.l.b16 %v2374
    %v2886 = vunpack.c.h.b16 %v2374
    %v2887 = vunpack.c.l.b16 %v2375
    %v2888 = vunpack.c.h.b16 %v2375
    %v2889 = vunpack.c.l.b16 %v2376
    %v2890 = vunpack.c.h.b16 %v2376
    %v2891 = vunpack.c.l.b16 %v2377
    %v2892 = vunpack.c.h.b16 %v2377
    %v2893 = vunpack.c.l.b16 %v2378
    %v2894 = vunpack.c.h.b16 %v2378
    %v2895 = vunpack.c.l.b16 %v2379
    %v2896 = vunpack.c.h.b16 %v2379
    %v2897 = vunpack.c.l.b16 %v2380
    %v2898 = vunpack.c.h.b16 %v2380
    %v2899 = vunpack.c.l.b16 %v2381
    %v2900 = vunpack.c.h.b16 %v2381
    %v2901 = vunpack.c.l.b16 %v2382
    %v2902 = vunpack.c.h.b16 %v2382
    %v2903 = vunpack.c.l.b16 %v2383
    %v2904 = vunpack.c.h.b16 %v2383
    %v2905 = vunpack.c.l.b16 %v2384
    %v2906 = vunpack.c.h.b16 %v2384
    %v2907 = vunpack.c.l.b16 %v2385
    %v2908 = vunpack.c.h.b16 %v2385
    %v2909 = vunpack.c.l.b16 %v2386
    %v2910 = vunpack.c.h.b16 %v2386
    %v2911 = vunpack.c.l.b16 %v2387
    %v2912 = vunpack.c.h.b16 %v2387
    %v2913 = vunpack.c.l.b16 %v2388
    %v2914 = vunpack.c.h.b16 %v2388
    %v2915 = vunpack.c.l.b16 %v2389
    %v2916 = vunpack.c.h.b16 %v2389
    %v2917 = vunpack.c.l.b16 %v2390
    %v2918 = vunpack.c.h.b16 %v2390
    %v2919 = vunpack.c.l.b16 %v2391
    %v2920 = vunpack.c.h.b16 %v2391
    %v2921 = vunpack.c.l.b16 %v2392
    %v2922 = vunpack.c.h.b16 %v2392
    %v2923 = vunpack.c.l.b16 %v2393
    %v2924 = vunpack.c.h.b16 %v2393
    %v2925 = vunpack.c.l.b16 %v2394
    %v2926 = vunpack.c.h.b16 %v2394
    %v2927 = vunpack.c.l.b16 %v2395
    %v2928 = vunpack.c.h.b16 %v2395
    %v2929 = vunpack.c.l.b16 %v2396
    %v2930 = vunpack.c.h.b16 %v2396
    %v2931 = vunpack.c.l.b16 %v2397
    %v2932 = vunpack.c.h.b16 %v2397
    %v2933 = vunpack.c.l.b16 %v2398
    %v2934 = vunpack.c.h.b16 %v2398
    %v2935 = vunpack.c.l.b16 %v2399
    %v2936 = vunpack.c.h.b16 %v2399
    %v2937 = vunpack.c.l.b16 %v2400
    %v2938 = vunpack.c.h.b16 %v2400
    %v2939 = vunpack.c.l.b16 %v2401
    %v2940 = vunpack.c.h.b16 %v2401
    %v2941 = vunpack.c.l.b16 %v2402
    %v2942 = vunpack.c.h.b16 %v2402
    %v2943 = vunpack.c.l.b16 %v2403
    %v2944 = vunpack.c.h.b16 %v2403
    %v2945 = vunpack.c.l.b16 %v2404
    %v2946 = vunpack.c.h.b16 %v2404
    %v2947 = vunpack.c.l.b16 %v2405
    %v2948 = vunpack.c.h.b16 %v2405
    %v2949 = vunpack.c.l.b16 %v2406
    %v2950 = vunpack.c.h.b16 %v2406
    %v2951 = vunpack.c.l.b16 %v2407
    %v2952 = vunpack.c.h.b16 %v2407
    %v2953 = vunpack.c.l.b16 %v2408
    %v2954 = vunpack.c.h.b16 %v2408
    %v2955 = vunpack.c.l.b16 %v2409
    %v2956 = vunpack.c.h.b16 %v2409
    %v2957 = vunpack.c.l.b16 %v2410
    %v2958 = vunpack.c.h.b16 %v2410
    %v2959 = vunpack.c.l.b16 %v2411
    %v2960 = vunpack.c.h.b16 %v2411
    %v2961 = vunpack.c.l.b16 %v2412
    %v2962 = vunpack.c.h.b16 %v2412
    %v2963 = vunpack.c.l.b16 %v2413
    %v2964 = vunpack.c.h.b16 %v2413
    %v2965 = vunpack.c.l.b16 %v2414
    %v2966 = vunpack.c.h.b16 %v2414
    %v2967 = vunpack.c.l.b16 %v2415
    %v2968 = vunpack.c.h.b16 %v2415
    %v2969 = vunpack.c.l.b16 %v2416
    %v2970 = vunpack.c.h.b16 %v2416
    %v2971 = vunpack.c.l.b16 %v2417
    %v2972 = vunpack.c.h.b16 %v2417
    %v2973 = vunpack.c.l.b16 %v2418
    %v2974 = vunpack.c.h.b16 %v2418
    %v2975 = vunpack.c.l.b16 %v2419
    %v2976 = vunpack.c.h.b16 %v2419
    %v2977 = vunpack.c.l.b16 %v2420
    %v2978 = vunpack.c.h.b16 %v2420
    %v2979 = vunpack.c.l.b16 %v2421
    %v2980 = vunpack.c.h.b16 %v2421
    %v2981 = vunpack.c.l.b16 %v2422
    %v2982 = vunpack.c.h.b16 %v2422
    %v2983 = vunpack.c.l.b16 %v2423
    %v2984 = vunpack.c.h.b16 %v2423
    %v2985 = vunpack.c.l.b16 %v2424
    %v2986 = vunpack.c.h.b16 %v2424
    %v2987 = vunpack.c.l.b16 %v2425
    %v2988 = vunpack.c.h.b16 %v2425
    %v2989 = vunpack.c.l.b16 %v2426
    %v2990 = vunpack.c.h.b16 %v2426
    %v2991 = vunpack.c.l.b16 %v2427
    %v2992 = vunpack.c.h.b16 %v2427
    %v2993 = vunpack.c.l.b16 %v2428
    %v2994 = vunpack.c.h.b16 %v2428
    %v2995 = vunpack.c.l.b16 %v2429
    %v2996 = vunpack.c.h.b16 %v2429
    %v2997 = vunpack.c.l.b16 %v2430
    %v2998 = vunpack.c.h.b16 %v2430
    %v2999 = vunpack.c.l.b16 %v2431
    %v3000 = vunpack.c.h.b16 %v2431
    %v3001 = vunpack.c.l.b16 %v2432
    %v3002 = vunpack.c.h.b16 %v2432
    %v3003 = vunpack.c.l.b16 %v2433
    %v3004 = vunpack.c.h.b16 %v2433
    %v3005 = vunpack.c.l.b16 %v2434
    %v3006 = vunpack.c.h.b16 %v2434
    %v3007 = vunpack.c.l.b16 %v2435
    %v3008 = vunpack.c.h.b16 %v2435
    %v3009 = vunpack.c.l.b16 %v2436
    %v3010 = vunpack.c.h.b16 %v2436
    %v3011 = vunpack.c.l.b16 %v2437
    %v3012 = vunpack.c.h.b16 %v2437
    %v3013 = vunpack.c.l.b16 %v2438
    %v3014 = vunpack.c.h.b16 %v2438
    %v3015 = vunpack.c.l.b16 %v2439
    %v3016 = vunpack.c.h.b16 %v2439
    %v3017 = vunpack.c.l.b16 %v2440
    %v3018 = vunpack.c.h.b16 %v2440
    %v3019 = vunpack.c.l.b16 %v2441
    %v3020 = vunpack.c.h.b16 %v2441
    %v3021 = vunpack.c.l.b16 %v2442
    %v3022 = vunpack.c.h.b16 %v2442
    %v3023 = vunpack.c.l.b16 %v2443
    %v3024 = vunpack.c.h.b16 %v2443
    %v3025 = vunpack.c.l.b16 %v2444
    %v3026 = vunpack.c.h.b16 %v2444
    %v3027 = vunpack.c.l.b16 %v2445
    %v3028 = vunpack.c.h.b16 %v2445
    %v3029 = vunpack.c.l.b16 %v2446
    %v3030 = vunpack.c.h.b16 %v2446
    %v3031 = vunpack.c.l.b16 %v2447
    %v3032 = vunpack.c.h.b16 %v2447
    %v3033 = vunpack.c.l.b16 %v2448
    %v3034 = vunpack.c.h.b16 %v2448
    %v3035 = vunpack.c.l.b16 %v2449
    %v3036 = vunpack.c.h.b16 %v2449
    %v3037 = vunpack.c.l.b16 %v2450
    %v3038 = vunpack.c.h.b16 %v2450
    %v3039 = vunpack.c.l.b16 %v2451
    %v3040 = vunpack.c.h.b16 %v2451
    %v3041 = vunpack.c.l.b16 %v2452
    %v3042 = vunpack.c.h.b16 %v2452
    %v3043 = vunpack.c.l.b16 %v2453
    %v3044 = vunpack.c.h.b16 %v2453
    %v3045 = vunpack.c.l.b16 %v2454
    %v3046 = vunpack.c.h.b16 %v2454
    %v3047 = vunpack.c.l.b16 %v2455
    %v3048 = vunpack.c.h.b16 %v2455
    %v3049 = vunpack.c.l.b16 %v2456
    %v3050 = vunpack.c.h.b16 %v2456
    %v3051 = vunpack.c.l.b16 %v2457
    %v3052 = vunpack.c.h.b16 %v2457
    %v3053 = vunpack.c.l.b16 %v2458
    %v3054 = vunpack.c.h.b16 %v2458
    %v3055 = vunpack.c.l.b16 %v2459
    %v3056 = vunpack.c.h.b16 %v2459
    %v3057 = vunpack.c.l.b16 %v2460
    %v3058 = vunpack.c.h.b16 %v2460
    %v3059 = vunpack.c.l.b16 %v2461
    %v3060 = vunpack.c.h.b16 %v2461
    %v3061 = vunpack.c.l.b16 %v2462
    %v3062 = vunpack.c.h.b16 %v2462
    %v3063 = vunpack.c.l.b16 %v2463
    %v3064 = vunpack.c.h.b16 %v2463
    %v3065 = vunpack.c.l.b16 %v2464
    %v3066 = vunpack.c.h.b16 %v2464
    %v3067 = vunpack.c.l.b16 %v2465
    %v3068 = vunpack.c.h.b16 %v2465
    %v3069 = vunpack.c.l.b16 %v2466
    %v3070 = vunpack.c.h.b16 %v2466
    %v3071 = vunpack.c.l.b16 %v2467
    %v3072 = vunpack.c.h.b16 %v2467
    %v3073 = vunpack.c.l.b16 %v2468
    %v3074 = vunpack.c.h.b16 %v2468
    %v3075 = vunpack.c.l.b16 %v2469
    %v3076 = vunpack.c.h.b16 %v2469
    %v3077 = vunpack.c.l.b16 %v2470
    %v3078 = vunpack.c.h.b16 %v2470
    %v3079 = vunpack.c.l.b16 %v2471
    %v3080 = vunpack.c.h.b16 %v2471
    %v3081 = vunpack.c.l.b16 %v2472
    %v3082 = vunpack.c.h.b16 %v2472
    %v3083 = vunpack.c.l.b16 %v2473
    %v3084 = vunpack.c.h.b16 %v2473
    %v3085 = vunpack.c.l.b16 %v2474
    %v3086 = vunpack.c.h.b16 %v2474
    %v3087 = vunpack.c.l.b16 %v2475
    %v3088 = vunpack.c.h.b16 %v2475
    %v3089 = vunpack.c.l.b16 %v2476
    %v3090 = vunpack.c.h.b16 %v2476
    %v3091 = vunpack.c.l.b16 %v2477
    %v3092 = vunpack.c.h.b16 %v2477
    %v3093 = vunpack.c.l.b16 %v2478
    %v3094 = vunpack.c.h.b16 %v2478
    %v3095 = vunpack.c.l.b16 %v2479
    %v3096 = vunpack.c.h.b16 %v2479
    %v3097 = vunpack.c.l.b16 %v2480
    %v3098 = vunpack.c.h.b16 %v2480
    %v3099 = vunpack.c.l.b16 %v2481
    %v3100 = vunpack.c.h.b16 %v2481
    %v3101 = vunpack.c.l.b16 %v2482
    %v3102 = vunpack.c.h.b16 %v2482
    %v3103 = vunpack.c.l.b16 %v2483
    %v3104 = vunpack.c.h.b16 %v2483
    %v3105 = vunpack.c.l.b16 %v2484
    %v3106 = vunpack.c.h.b16 %v2484
    %v3107 = vunpack.c.l.b16 %v2485
    %v3108 = vunpack.c.h.b16 %v2485
    %v3109 = vunpack.c.l.b16 %v2486
    %v3110 = vunpack.c.h.b16 %v2486
    %v3111 = vunpack.c.l.b16 %v2487
    %v3112 = vunpack.c.h.b16 %v2487
    %v3113 = vunpack.c.l.b16 %v2488
    %v3114 = vunpack.c.h.b16 %v2488
    %v3115 = vunpack.c.l.b16 %v2489
    %v3116 = vunpack.c.h.b16 %v2489
    %v3117 = vunpack.c.l.b16 %v2490
    %v3118 = vunpack.c.h.b16 %v2490
    %v3119 = vunpack.c.l.b16 %v2491
    %v3120 = vunpack.c.h.b16 %v2491
    %v3121 = vunpack.c.l.b16 %v2492
    %v3122 = vunpack.c.h.b16 %v2492
    %v3123 = vunpack.c.l.b16 %v2493
    %v3124 = vunpack.c.h.b16 %v2493
    %v3125 = vunpack.c.l.b16 %v2494
    %v3126 = vunpack.c.h.b16 %v2494
    %v3127 = vunpack.c.l.b16 %v2495
    %v3128 = vunpack.c.h.b16 %v2495
    %v3129 = vunpack.c.l.b16 %v2496
    %v3130 = vunpack.c.h.b16 %v2496
    %v3131 = vunpack.c.l.b16 %v2497
    %v3132 = vunpack.c.h.b16 %v2497
    %v3133 = vunpack.c.l.b16 %v2498
    %v3134 = vunpack.c.h.b16 %v2498
    %v3135 = vunpack.c.l.b16 %v2499
    %v3136 = vunpack.c.h.b16 %v2499
    %v3137 = vunpack.c.l.b16 %v2500
    %v3138 = vunpack.c.h.b16 %v2500
    %v3139 = vunpack.c.l.b16 %v2501
    %v3140 = vunpack.c.h.b16 %v2501
    %v3141 = vunpack.c.l.b16 %v2502
    %v3142 = vunpack.c.h.b16 %v2502
    %v3143 = vunpack.c.l.b16 %v2503
    %v3144 = vunpack.c.h.b16 %v2503
    %v3145 = vunpack.c.l.b16 %v2504
    %v3146 = vunpack.c.h.b16 %v2504
    %v3147 = vunpack.c.l.b16 %v2505
    %v3148 = vunpack.c.h.b16 %v2505
    %v3149 = vunpack.c.l.b16 %v2506
    %v3150 = vunpack.c.h.b16 %v2506
    %v3151 = vunpack.c.l.b16 %v2507
    %v3152 = vunpack.c.h.b16 %v2507
    %v3153 = vunpack.c.l.b16 %v2508
    %v3154 = vunpack.c.h.b16 %v2508
    %v3155 = vunpack.c.l.b16 %v2509
    %v3156 = vunpack.c.h.b16 %v2509
    %v3157 = vunpack.c.l.b16 %v2510
    %v3158 = vunpack.c.h.b16 %v2510
    %v3159 = vunpack.c.l.b16 %v2511
    %v3160 = vunpack.c.h.b16 %v2511
    %v3161 = vunpack.c.l.b16 %v2512
    %v3162 = vunpack.c.h.b16 %v2512
    %v3163 = vunpack.c.l.b16 %v2513
    %v3164 = vunpack.c.h.b16 %v2513
    %v3165 = vunpack.c.l.b16 %v2514
    %v3166 = vunpack.c.h.b16 %v2514
    %v3167 = vunpack.c.l.b16 %v2515
    %v3168 = vunpack.c.h.b16 %v2515
    %v3169 = vunpack.c.l.b16 %v2516
    %v3170 = vunpack.c.h.b16 %v2516
    %v3171 = vunpack.c.l.b16 %v2517
    %v3172 = vunpack.c.h.b16 %v2517
    %v3173 = vunpack.c.l.b16 %v2518
    %v3174 = vunpack.c.h.b16 %v2518
    %v3175 = vunpack.c.l.b16 %v2519
    %v3176 = vunpack.c.h.b16 %v2519
    %v3177 = vunpack.c.l.b16 %v2520
    %v3178 = vunpack.c.h.b16 %v2520
    %v3179 = vunpack.c.l.b16 %v2521
    %v3180 = vunpack.c.h.b16 %v2521
    %v3181 = vunpack.c.l.b16 %v2522
    %v3182 = vunpack.c.h.b16 %v2522
    %v3183 = vunpack.c.l.b16 %v2523
    %v3184 = vunpack.c.h.b16 %v2523
    %v3185 = vunpack.c.l.b16 %v2524
    %v3186 = vunpack.c.h.b16 %v2524
    %v3187 = vunpack.c.l.b16 %v2525
    %v3188 = vunpack.c.h.b16 %v2525
    %v3189 = vunpack.c.l.b16 %v2526
    %v3190 = vunpack.c.h.b16 %v2526
    %v3191 = vunpack.c.l.b16 %v2527
    %v3192 = vunpack.c.h.b16 %v2527
    %v3193 = vunpack.c.l.b16 %v2528
    %v3194 = vunpack.c.h.b16 %v2528
    %v3195 = vunpack.c.l.b16 %v2529
    %v3196 = vunpack.c.h.b16 %v2529
    %v3197 = vunpack.c.l.b16 %v2530
    %v3198 = vunpack.c.h.b16 %v2530
    %v3199 = vunpack.c.l.b16 %v2531
    %v3200 = vunpack.c.h.b16 %v2531
    %v3201 = vunpack.c.l.b16 %v2532
    %v3202 = vunpack.c.h.b16 %v2532
    %v3203 = vunpack.c.l.b16 %v2533
    %v3204 = vunpack.c.h.b16 %v2533
    %v3205 = vunpack.c.l.b16 %v2534
    %v3206 = vunpack.c.h.b16 %v2534
    %v3207 = vunpack.c.l.b16 %v2535
    %v3208 = vunpack.c.h.b16 %v2535
    %v3209 = vunpack.c.l.b16 %v2536
    %v3210 = vunpack.c.h.b16 %v2536
    %v3211 = vunpack.c.l.b16 %v2537
    %v3212 = vunpack.c.h.b16 %v2537
    %v3213 = vunpack.c.l.b16 %v2538
    %v3214 = vunpack.c.h.b16 %v2538
    %v3215 = vunpack.c.l.b16 %v2539
    %v3216 = vunpack.c.h.b16 %v2539
    %v3217 = vunpack.c.l.b16 %v2540
    %v3218 = vunpack.c.h.b16 %v2540
    %v3219 = vunpack.c.l.b16 %v2541
    %v3220 = vunpack.c.h.b16 %v2541
    %v3221 = vunpack.c.l.b16 %v2542
    %v3222 = vunpack.c.h.b16 %v2542
    %v3223 = vunpack.c.l.b16 %v2543
    %v3224 = vunpack.c.h.b16 %v2543
    %v3225 = vunpack.c.l.b16 %v2544
    %v3226 = vunpack.c.h.b16 %v2544
    %v3227 = vunpack.c.l.b16 %v2545
    %v3228 = vunpack.c.h.b16 %v2545
    %v3229 = vunpack.c.l.b16 %v2546
    %v3230 = vunpack.c.h.b16 %v2546
    %v3231 = vunpack.c.l.b16 %v2547
    %v3232 = vunpack.c.h.b16 %v2547
    %v3233 = vunpack.c.l.b16 %v2548
    %v3234 = vunpack.c.h.b16 %v2548
    %v3235 = vunpack.c.l.b16 %v2549
    %v3236 = vunpack.c.h.b16 %v2549
    %v3237 = vunpack.c.l.b16 %v2550
    %v3238 = vunpack.c.h.b16 %v2550
    %v3239 = vunpack.c.l.b16 %v2551
    %v3240 = vunpack.c.h.b16 %v2551
    %v3241 = vunpack.c.l.b16 %v2552
    %v3242 = vunpack.c.h.b16 %v2552
    %v3243 = vunpack.c.l.b16 %v2553
    %v3244 = vunpack.c.h.b16 %v2553
    %v3245 = vunpack.c.l.b16 %v2554
    %v3246 = vunpack.c.h.b16 %v2554
    %v3247 = vunpack.c.l.b16 %v2555
    %v3248 = vunpack.c.h.b16 %v2555
    %v3249 = vunpack.c.l.b16 %v2556
    %v3250 = vunpack.c.h.b16 %v2556
    %v3251 = vunpack.c.l.b16 %v2557
    %v3252 = vunpack.c.h.b16 %v2557
    %v3253 = vunpack.c.l.b16 %v2558
    %v3254 = vunpack.c.h.b16 %v2558
    %v3255 = vunpack.c.l.b16 %v2559
    %v3256 = vunpack.c.h.b16 %v2559
    %v3257 = vunpack.c.l.b16 %v2560
    %v3258 = vunpack.c.h.b16 %v2560
    %v3259 = vunpack.c.l.b16 %v2561
    %v3260 = vunpack.c.h.b16 %v2561
    %v3261 = vunpack.c.l.b16 %v2562
    %v3262 = vunpack.c.h.b16 %v2562
    %v3263 = vunpack.c.l.b16 %v2563
    %v3264 = vunpack.c.h.b16 %v2563
    %v3265 = vunpack.c.l.b16 %v2564
    %v3266 = vunpack.c.h.b16 %v2564
    %v3267 = vpack.c.b16 %v2907, %v2883
    %v3268 = vpack.c.b16 %v2908, %v2884
    %v3269 = vpack.c.b16 %v2909, %v2885
    %v3270 = vpack.c.b16 %v2910, %v2886
    %v3271 = vpack.c.b16 %v2911, %v2887
    %v3272 = vpack.c.b16 %v2912, %v2888
    %v3273 = vpack.c.b16 %v2913, %v2889
    %v3274 = vpack.c.b16 %v2914, %v2890
    %v3275 = vpack.c.b16 %v2915, %v2891
    %v3276 = vpack.c.b16 %v2916, %v2892
    %v3277 = vpack.c.b16 %v2917, %v2893
    %v3278 = vpack.c.b16 %v2918, %v2894
    %v3279 = vpack.c.b16 %v2919, %v2895
    %v3280 = vpack.c.b16 %v2920, %v2896
    %v3281 = vpack.c.b16 %v2921, %v2897
    %v3282 = vpack.c.b16 %v2922, %v2898
    %v3283 = vpack.c.b16 %v2923, %v2899
    %v3284 = vpack.c.b16 %v2924, %v2900
    %v3285 = vpack.c.b16 %v2925, %v2901
    %v3286 = vpack.c.b16 %v2926, %v2902
    %v3287 = vpack.c.b16 %v2927, %v2903
    %v3288 = vpack.c.b16 %v2928, %v2904
    %v3289 = vpack.c.b16 %v2929, %v2905
    %v3290 = vpack.c.b16 %v2930, %v2906
    %v3291 = vpack.c.b16 %v2955, %v2931
    %v3292 = vpack.c.b16 %v2956, %v2932
    %v3293 = vpack.c.b16 %v2957, %v2933
    %v3294 = vpack.c.b16 %v2958, %v2934
    %v3295 = vpack.c.b16 %v2959, %v2935
    %v3296 = vpack.c.b16 %v2960, %v2936
    %v3297 = vpack.c.b16 %v2961, %v2937
    %v3298 = vpack.c.b16 %v2962, %v2938
    %v3299 = vpack.c.b16 %v2963, %v2939
    %v3300 = vpack.c.b16 %v2964, %v2940
    %v3301 = vpack.c.b16 %v2965, %v2941
    %v3302 = vpack.c.b16 %v2966, %v2942
    %v3303 = vpack.c.b16 %v2967, %v2943
    %v3304 = vpack.c.b16 %v2968, %v2944
    %v3305 = vpack.c.b16 %v2969, %v2945
    %v3306 = vpack.c.b16 %v2970, %v2946
    %v3307 = vpack.c.b16 %v2971, %v2947
    %v3308 = vpack.c.b16 %v2972, %v2948
    %v3309 = vpack.c.b16 %v2973, %v2949
    %v3310 = vpack.c.b16 %v2974, %v2950
    %v3311 = vpack.c.b16 %v2975, %v2951
    %v3312 = vpack.c.b16 %v2976, %v2952
    %v3313 = vpack.c.b16 %v2977, %v2953
    %v3314 = vpack.c.b16 %v2978, %v2954
    %v3315 = vpack.c.b16 %v3003, %v2979
    %v3316 = vpack.c.b16 %v3004, %v2980
    %v3317 = vpack.c.b16 %v3005, %v2981
    %v3318 = vpack.c.b16 %v3006, %v2982
    %v3319 = vpack.c.b16 %v3007, %v2983
    %v3320 = vpack.c.b16 %v3008, %v2984
    %v3321 = vpack.c.b16 %v3009, %v2985
    %v3322 = vpack.c.b16 %v3010, %v2986
    %v3323 = vpack.c.b16 %v3011, %v2987
    %v3324 = vpack.c.b16 %v3012, %v2988
    %v3325 = vpack.c.b16 %v3013, %v2989
    %v3326 = vpack.c.b16 %v3014, %v2990
    %v3327 = vpack.c.b16 %v3015, %v2991
    %v3328 = vpack.c.b16 %v3016, %v2992
    %v3329 = vpack.c.b16 %v3017, %v2993
    %v3330 = vpack.c.b16 %v3018, %v2994
    %v3331 = vpack.c.b16 %v3019, %v2995
    %v3332 = vpack.c.b16 %v3020, %v2996
    %v3333 = vpack.c.b16 %v3021, %v2997
    %v3334 = vpack.c.b16 %v3022, %v2998
    %v3335 = vpack.c.b16 %v3023, %v2999
    %v3336 = vpack.c.b16 %v3024, %v3000
    %v3337 = vpack.c.b16 %v3025, %v3001
    %v3338 = vpack.c.b16 %v3026, %v3002
    %v3339 = vpack.c.b16 %v3051, %v3027
    %v3340 = vpack.c.b16 %v3052, %v3028
    %v3341 = vpack.c.b16 %v3053, %v3029
    %v3342 = vpack.c.b16 %v3054, %v3030
    %v3343 = vpack.c.b16 %v3055, %v3031
    %v3344 = vpack.c.b16 %v3056, %v3032
    %v3345 = vpack.c.b16 %v3057, %v3033
    %v3346 = vpack.c.b16 %v3058, %v3034
    %v3347 = vpack.c.b16 %v3059, %v3035
    %v3348 = vpack.c.b16 %v3060, %v3036
    %v3349 = vpack.c.b16 %v3061, %v3037
    %v3350 = vpack.c.b16 %v3062, %v3038
    %v3351 = vpack.c.b16 %v3063, %v3039
    %v3352 = vpack.c.b16 %v3064, %v3040
    %v3353 = vpack.c.b16 %v3065, %v3041
    %v3354 = vpack.c.b16 %v3066, %v3042
    %v3355 = vpack.c.b16 %v3067, %v3043
    %v3356 = vpack.c.b16 %v3068, %v3044
    %v3357 = vpack.c.b16 %v3069, %v3045
    %v3358 = vpack.c.b16 %v3070, %v3046
    %v3359 = vpack.c.b16 %v3071, %v3047
    %v3360 = vpack.c.b16 %v3072, %v3048
    %v3361 = vpack.c.b16 %v3073, %v3049
    %v3362 = vpack.c.b16 %v3074, %v3050
    %v3363 = vpack.c.b16 %v3099, %v3075
    %v3364 = vpack.c.b16 %v3100, %v3076
    %v3365 = vpack.c.b16 %v3101, %v3077
    %v3366 = vpack.c.b16 %v3102, %v3078
    %v3367 = vpack.c.b16 %v3103, %v3079
    %v3368 = vpack.c.b16 %v3104, %v3080
    %v3369 = vpack.c.b16 %v3105, %v3081
    %v3370 = vpack.c.b16 %v3106, %v3082
    %v3371 = vpack.c.b16 %v3107, %v3083
    %v3372 = vpack.c.b16 %v3108, %v3084
    %v3373 = vpack.c.b16 %v3109, %v3085
    %v3374 = vpack.c.b16 %v3110, %v3086
    %v3375 = vpack.c.b16 %v3111, %v3087
    %v3376 = vpack.c.b16 %v3112, %v3088
    %v3377 = vpack.c.b16 %v3113, %v3089
    %v3378 = vpack.c.b16 %v3114, %v3090
    %v3379 = vpack.c.b16 %v3115, %v3091
    %v3380 = vpack.c.b16 %v3116, %v3092
    %v3381 = vpack.c.b16 %v3117, %v3093
    %v3382 = vpack.c.b16 %v3118, %v3094
    %v3383 = vpack.c.b16 %v3119, %v3095
    %v3384 = vpack.c.b16 %v3120, %v3096
    %v3385 = vpack.c.b16 %v3121, %v3097
    %v3386 = vpack.c.b16 %v3122, %v3098
    %v3387 = vpack.c.b16 %v3147, %v3123
    %v3388 = vpack.c.b16 %v3148, %v3124
    %v3389 = vpack.c.b16 %v3149, %v3125
    %v3390 = vpack.c.b16 %v3150, %v3126
    %v3391 = vpack.c.b16 %v3151, %v3127
    %v3392 = vpack.c.b16 %v3152, %v3128
    %v3393 = vpack.c.b16 %v3153, %v3129
    %v3394 = vpack.c.b16 %v3154, %v3130
    %v3395 = vpack.c.b16 %v3155, %v3131
    %v3396 = vpack.c.b16 %v3156, %v3132
    %v3397 = vpack.c.b16 %v3157, %v3133
    %v3398 = vpack.c.b16 %v3158, %v3134
    %v3399 = vpack.c.b16 %v3159, %v3135
    %v3400 = vpack.c.b16 %v3160, %v3136
    %v3401 = vpack.c.b16 %v3161, %v3137
    %v3402 = vpack.c.b16 %v3162, %v3138
    %v3403 = vpack.c.b16 %v3163, %v3139
    %v3404 = vpack.c.b16 %v3164, %v3140
    %v3405 = vpack.c.b16 %v3165, %v3141
    %v3406 = vpack.c.b16 %v3166, %v3142
    %v3407 = vpack.c.b16 %v3167, %v3143
    %v3408 = vpack.c.b16 %v3168, %v3144
    %v3409 = vpack.c.b16 %v3169, %v3145
    %v3410 = vpack.c.b16 %v3170, %v3146
    %v3411 = vpack.c.b16 %v3195, %v3171
    %v3412 = vpack.c.b16 %v3196, %v3172
    %v3413 = vpack.c.b16 %v3197, %v3173
    %v3414 = vpack.c.b16 %v3198, %v3174
    %v3415 = vpack.c.b16 %v3199, %v3175
    %v3416 = vpack.c.b16 %v3200, %v3176
    %v3417 = vpack.c.b16 %v3201, %v3177
    %v3418 = vpack.c.b16 %v3202, %v3178
    %v3419 = vpack.c.b16 %v3203, %v3179
    %v3420 = vpack.c.b16 %v3204, %v3180
    %v3421 = vpack.c.b16 %v3205, %v3181
    %v3422 = vpack.c.b16 %v3206, %v3182
    %v3423 = vpack.c.b16 %v3207, %v3183
    %v3424 = vpack.c.b16 %v3208, %v3184
    %v3425 = vpack.c.b16 %v3209, %v3185
    %v3426 = vpack.c.b16 %v3210, %v3186
    %v3427 = vpack.c.b16 %v3211, %v3187
    %v3428 = vpack.c.b16 %v3212, %v3188
    %v3429 = vpack.c.b16 %v3213, %v3189
    %v3430 = vpack.c.b16 %v3214, %v3190
    %v3431 = vpack.c.b16 %v3215, %v3191
    %v3432 = vpack.c.b16 %v3216, %v3192
    %v3433 = vpack.c.b16 %v3217, %v3193
    %v3434 = vpack.c.b16 %v3218, %v3194
    %v3435 = vpack.c.b16 %v3243, %v3219
    %v3436 = vpack.c.b16 %v3244, %v3220
    %v3437 = vpack.c.b16 %v3245, %v3221
    %v3438 = vpack.c.b16 %v3246, %v3222
    %v3439 = vpack.c.b16 %v3247, %v3223
    %v3440 = vpack.c.b16 %v3248, %v3224
    %v3441 = vpack.c.b16 %v3249, %v3225
    %v3442 = vpack.c.b16 %v3250, %v3226
    %v3443 = vpack.c.b16 %v3251, %v3227
    %v3444 = vpack.c.b16 %v3252, %v3228
    %v3445 = vpack.c.b16 %v3253, %v3229
    %v3446 = vpack.c.b16 %v3254, %v3230
    %v3447 = vpack.c.b16 %v3255, %v3231
    %v3448 = vpack.c.b16 %v3256, %v3232
    %v3449 = vpack.c.b16 %v3257, %v3233
    %v3450 = vpack.c.b16 %v3258, %v3234
    %v3451 = vpack.c.b16 %v3259, %v3235
    %v3452 = vpack.c.b16 %v3260, %v3236
    %v3453 = vpack.c.b16 %v3261, %v3237
    %v3454 = vpack.c.b16 %v3262, %v3238
    %v3455 = vpack.c.b16 %v3263, %v3239
    %v3456 = vpack.c.b16 %v3264, %v3240
    %v3457 = vpack.c.b16 %v3265, %v3241
    %v3458 = vpack.c.b16 %v3266, %v3242
    %3651 = vmatprep.subr.bf16.mxu0 %v3268
    %3652 = vmatpush1.bf16.msra.mxu0 %v3267
    %3653 = vmatprep.subr.bf16.mxu0 %v3292
    %3654 = vmatpush1.bf16.msra.mxu0 %v3291
    %3655 = vmatprep.subr.bf16.mxu0 %v3316
    %3656 = vmatpush1.bf16.msra.mxu0 %v3315
    %3657 = vmatprep.subr.bf16.mxu0 %v3340
    %3658 = vmatpush1.bf16.msra.mxu0 %v3339
    %3659 = vmatprep.subr.bf16.mxu0 %v3364
    %3660 = vmatpush1.bf16.msra.mxu0 %v3363
    %3661 = vmatprep.subr.bf16.mxu0 %v3388
    %3662 = vmatpush1.bf16.msra.mxu0 %v3387
    %3663 = vmatprep.subr.bf16.mxu0 %v3412
    %3664 = vmatpush1.bf16.msra.mxu0 %v3411
    %3665 = vmatprep.subr.bf16.mxu0 %v3436
    %3666 = vmatpush1.bf16.msra.mxu0 %v3435
    %3667 = vmatprep.subr.bf16.mxu0 0
    %3668 = vmatpush1.bf16.msra.mxu0 0
    %3669 = vmatprep.subr.bf16.mxu0 0
    %3670 = vmatpush1.bf16.msra.mxu0 0
    %3671 = vmatprep.subr.bf16.mxu0 0
    %3672 = vmatpush1.bf16.msra.mxu0 0
    %3673 = vmatprep.subr.bf16.mxu0 0
    %3674 = vmatpush1.bf16.msra.mxu0 0
    %3675 = vmatprep.subr.bf16.mxu0 0
    %3676 = vmatpush1.bf16.msra.mxu0 0
    %3677 = vmatprep.subr.bf16.mxu0 0
    %3678 = vmatpush1.bf16.msra.mxu0 0
    %3679 = vmatprep.subr.bf16.mxu0 0
    %3680 = vmatpush1.bf16.msra.mxu0 0
    %3681 = vmatprep.subr.bf16.mxu0 0
    %3682 = vmatpush1.bf16.msra.mxu0 0
    %3683 = vmatprep.mubr.bf16.mxu0 0
    %3684 = vmatmul.mubr.bf16.gmra.mrb[0].mxu0 %v2372
    %v3685 = vpop.f32.mrb[0].mxu0
    %v3686 = vadd.f32 %v2574, %v3685
    %v3687 = vpop.f32.mrb[0].mxu0
    %v3688 = vadd.f32 %v2578, %v3687
    %v3689 = vpop.f32.mrb[0].mxu0
    %v3690 = vpop.f32.mrb[0].mxu0
    %3691 = vdwg.mxu0
    %3692 = vmatprep.subr.bf16.mxu0 %v3270
    %3693 = vmatpush1.bf16.msra.mxu0 %v3269
    %3694 = vmatprep.subr.bf16.mxu0 %v3294
    %3695 = vmatpush1.bf16.msra.mxu0 %v3293
    %3696 = vmatprep.subr.bf16.mxu0 %v3318
    %3697 = vmatpush1.bf16.msra.mxu0 %v3317
    %3698 = vmatprep.subr.bf16.mxu0 %v3342
    %3699 = vmatpush1.bf16.msra.mxu0 %v3341
    %3700 = vmatprep.subr.bf16.mxu0 %v3366
    %3701 = vmatpush1.bf16.msra.mxu0 %v3365
    %3702 = vmatprep.subr.bf16.mxu0 %v3390
    %3703 = vmatpush1.bf16.msra.mxu0 %v3389
    %3704 = vmatprep.subr.bf16.mxu0 %v3414
    %3705 = vmatpush1.bf16.msra.mxu0 %v3413
    %3706 = vmatprep.subr.bf16.mxu0 %v3438
    %3707 = vmatpush1.bf16.msra.mxu0 %v3437
    %3708 = vmatprep.subr.bf16.mxu0 0
    %3709 = vmatpush1.bf16.msra.mxu0 0
    %3710 = vmatprep.subr.bf16.mxu0 0
    %3711 = vmatpush1.bf16.msra.mxu0 0
    %3712 = vmatprep.subr.bf16.mxu0 0
    %3713 = vmatpush1.bf16.msra.mxu0 0
    %3714 = vmatprep.subr.bf16.mxu0 0
    %3715 = vmatpush1.bf16.msra.mxu0 0
    %3716 = vmatprep.subr.bf16.mxu0 0
    %3717 = vmatpush1.bf16.msra.mxu0 0
    %3718 = vmatprep.subr.bf16.mxu0 0
    %3719 = vmatpush1.bf16.msra.mxu0 0
    %3720 = vmatprep.subr.bf16.mxu0 0
    %3721 = vmatpush1.bf16.msra.mxu0 0
    %3722 = vmatprep.subr.bf16.mxu0 0
    %3723 = vmatpush1.bf16.msra.mxu0 0
    %3724 = vmatprep.mubr.bf16.mxu0 0
    %3725 = vmatmul.mubr.bf16.gmra.mrb[0].mxu0 %v2372
    %v3726 = vpop.f32.mrb[0].mxu0
    %v3727 = vadd.f32 %v2582, %v3726
    %v3728 = vpop.f32.mrb[0].mxu0
    %v3729 = vadd.f32 %v2586, %v3728
    %v3730 = vpop.f32.mrb[0].mxu0
    %v3731 = vpop.f32.mrb[0].mxu0
    %3732 = vdwg.mxu0
    %3733 = vmatprep.subr.bf16.mxu0 %v3272
    %3734 = vmatpush1.bf16.msra.mxu0 %v3271
    %3735 = vmatprep.subr.bf16.mxu0 %v3296
    %3736 = vmatpush1.bf16.msra.mxu0 %v3295
    %3737 = vmatprep.subr.bf16.mxu0 %v3320
    %3738 = vmatpush1.bf16.msra.mxu0 %v3319
    %3739 = vmatprep.subr.bf16.mxu0 %v3344
    %3740 = vmatpush1.bf16.msra.mxu0 %v3343
    %3741 = vmatprep.subr.bf16.mxu0 %v3368
    %3742 = vmatpush1.bf16.msra.mxu0 %v3367
    %3743 = vmatprep.subr.bf16.mxu0 %v3392
    %3744 = vmatpush1.bf16.msra.mxu0 %v3391
    %3745 = vmatprep.subr.bf16.mxu0 %v3416
    %3746 = vmatpush1.bf16.msra.mxu0 %v3415
    %3747 = vmatprep.subr.bf16.mxu0 %v3440
    %3748 = vmatpush1.bf16.msra.mxu0 %v3439
    %3749 = vmatprep.subr.bf16.mxu0 0
    %3750 = vmatpush1.bf16.msra.mxu0 0
    %3751 = vmatprep.subr.bf16.mxu0 0
    %3752 = vmatpush1.bf16.msra.mxu0 0
    %3753 = vmatprep.subr.bf16.mxu0 0
    %3754 = vmatpush1.bf16.msra.mxu0 0
    %3755 = vmatprep.subr.bf16.mxu0 0
    %3756 = vmatpush1.bf16.msra.mxu0 0
    %3757 = vmatprep.subr.bf16.mxu0 0
    %3758 = vmatpush1.bf16.msra.mxu0 0
    %3759 = vmatprep.subr.bf16.mxu0 0
    %3760 = vmatpush1.bf16.msra.mxu0 0
    %3761 = vmatprep.subr.bf16.mxu0 0
    %3762 = vmatpush1.bf16.msra.mxu0 0
    %3763 = vmatprep.subr.bf16.mxu0 0
    %3764 = vmatpush1.bf16.msra.mxu0 0
    %3765 = vmatprep.mubr.bf16.mxu0 0
    %3766 = vmatmul.mubr.bf16.gmra.mrb[0].mxu0 %v2372
    %v3767 = vpop.f32.mrb[0].mxu0
    %v3768 = vadd.f32 %v2590, %v3767
    %v3769 = vpop.f32.mrb[0].mxu0
    %v3770 = vadd.f32 %v2594, %v3769
    %v3771 = vpop.f32.mrb[0].mxu0
    %v3772 = vpop.f32.mrb[0].mxu0
    %3773 = vdwg.mxu0
    %3774 = vmatprep.subr.bf16.mxu0 %v3274
    %3775 = vmatpush1.bf16.msra.mxu0 %v3273
    %3776 = vmatprep.subr.bf16.mxu0 %v3298
    %3777 = vmatpush1.bf16.msra.mxu0 %v3297
    %3778 = vmatprep.subr.bf16.mxu0 %v3322
    %3779 = vmatpush1.bf16.msra.mxu0 %v3321
    %3780 = vmatprep.subr.bf16.mxu0 %v3346
    %3781 = vmatpush1.bf16.msra.mxu0 %v3345
    %3782 = vmatprep.subr.bf16.mxu0 %v3370
    %3783 = vmatpush1.bf16.msra.mxu0 %v3369
    %3784 = vmatprep.subr.bf16.mxu0 %v3394
    %3785 = vmatpush1.bf16.msra.mxu0 %v3393
    %3786 = vmatprep.subr.bf16.mxu0 %v3418
    %3787 = vmatpush1.bf16.msra.mxu0 %v3417
    %3788 = vmatprep.subr.bf16.mxu0 %v3442
    %3789 = vmatpush1.bf16.msra.mxu0 %v3441
    %3790 = vmatprep.subr.bf16.mxu0 0
    %3791 = vmatpush1.bf16.msra.mxu0 0
    %3792 = vmatprep.subr.bf16.mxu0 0
    %3793 = vmatpush1.bf16.msra.mxu0 0
    %3794 = vmatprep.subr.bf16.mxu0 0
    %3795 = vmatpush1.bf16.msra.mxu0 0
    %3796 = vmatprep.subr.bf16.mxu0 0
    %3797 = vmatpush1.bf16.msra.mxu0 0
    %3798 = vmatprep.subr.bf16.mxu0 0
    %3799 = vmatpush1.bf16.msra.mxu0 0
    %3800 = vmatprep.subr.bf16.mxu0 0
    %3801 = vmatpush1.bf16.msra.mxu0 0
    %3802 = vmatprep.subr.bf16.mxu0 0
    %3803 = vmatpush1.bf16.msra.mxu0 0
    %3804 = vmatprep.subr.bf16.mxu0 0
    %3805 = vmatpush1.bf16.msra.mxu0 0
    %3806 = vmatprep.mubr.bf16.mxu0 0
    %3807 = vmatmul.mubr.bf16.gmra.mrb[0].mxu0 %v2372
    %v3808 = vpop.f32.mrb[0].mxu0
    %v3809 = vadd.f32 %v2598, %v3808
    %v3810 = vpop.f32.mrb[0].mxu0
    %v3811 = vadd.f32 %v2602, %v3810
    %v3812 = vpop.f32.mrb[0].mxu0
    %v3813 = vpop.f32.mrb[0].mxu0
    %3814 = vdwg.mxu0
    %3815 = vmatprep.subr.bf16.mxu0 %v3276
    %3816 = vmatpush1.bf16.msra.mxu0 %v3275
    %3817 = vmatprep.subr.bf16.mxu0 %v3300
    %3818 = vmatpush1.bf16.msra.mxu0 %v3299
    %3819 = vmatprep.subr.bf16.mxu0 %v3324
    %3820 = vmatpush1.bf16.msra.mxu0 %v3323
    %3821 = vmatprep.subr.bf16.mxu0 %v3348
    %3822 = vmatpush1.bf16.msra.mxu0 %v3347
    %3823 = vmatprep.subr.bf16.mxu0 %v3372
    %3824 = vmatpush1.bf16.msra.mxu0 %v3371
    %3825 = vmatprep.subr.bf16.mxu0 %v3396
    %3826 = vmatpush1.bf16.msra.mxu0 %v3395
    %3827 = vmatprep.subr.bf16.mxu0 %v3420
    %3828 = vmatpush1.bf16.msra.mxu0 %v3419
    %3829 = vmatprep.subr.bf16.mxu0 %v3444
    %3830 = vmatpush1.bf16.msra.mxu0 %v3443
    %3831 = vmatprep.subr.bf16.mxu0 0
    %3832 = vmatpush1.bf16.msra.mxu0 0
    %3833 = vmatprep.subr.bf16.mxu0 0
    %3834 = vmatpush1.bf16.msra.mxu0 0
    %3835 = vmatprep.subr.bf16.mxu0 0
    %3836 = vmatpush1.bf16.msra.mxu0 0
    %3837 = vmatprep.subr.bf16.mxu0 0
    %3838 = vmatpush1.bf16.msra.mxu0 0
    %3839 = vmatprep.subr.bf16.mxu0 0
    %3840 = vmatpush1.bf16.msra.mxu0 0
    %3841 = vmatprep.subr.bf16.mxu0 0
    %3842 = vmatpush1.bf16.msra.mxu0 0
    %3843 = vmatprep.subr.bf16.mxu0 0
    %3844 = vmatpush1.bf16.msra.mxu0 0
    %3845 = vmatprep.subr.bf16.mxu0 0
    %3846 = vmatpush1.bf16.msra.mxu0 0
    %3847 = vmatprep.mubr.bf16.mxu0 0
    %3848 = vmatmul.mubr.bf16.gmra.mrb[0].mxu0 %v2372
    %v3849 = vpop.f32.mrb[0].mxu0
    %v3850 = vadd.f32 %v2606, %v3849
    %v3851 = vpop.f32.mrb[0].mxu0
    %v3852 = vadd.f32 %v2610, %v3851
    %v3853 = vpop.f32.mrb[0].mxu0
    %v3854 = vpop.f32.mrb[0].mxu0
    %3855 = vdwg.mxu0
    %3856 = vmatprep.subr.bf16.mxu0 %v3278
    %3857 = vmatpush1.bf16.msra.mxu0 %v3277
    %3858 = vmatprep.subr.bf16.mxu0 %v3302
    %3859 = vmatpush1.bf16.msra.mxu0 %v3301
    %3860 = vmatprep.subr.bf16.mxu0 %v3326
    %3861 = vmatpush1.bf16.msra.mxu0 %v3325
    %3862 = vmatprep.subr.bf16.mxu0 %v3350
    %3863 = vmatpush1.bf16.msra.mxu0 %v3349
    %3864 = vmatprep.subr.bf16.mxu0 %v3374
    %3865 = vmatpush1.bf16.msra.mxu0 %v3373
    %3866 = vmatprep.subr.bf16.mxu0 %v3398
    %3867 = vmatpush1.bf16.msra.mxu0 %v3397
    %3868 = vmatprep.subr.bf16.mxu0 %v3422
    %3869 = vmatpush1.bf16.msra.mxu0 %v3421
    %3870 = vmatprep.subr.bf16.mxu0 %v3446
    %3871 = vmatpush1.bf16.msra.mxu0 %v3445
    %3872 = vmatprep.subr.bf16.mxu0 0
    %3873 = vmatpush1.bf16.msra.mxu0 0
    %3874 = vmatprep.subr.bf16.mxu0 0
    %3875 = vmatpush1.bf16.msra.mxu0 0
    %3876 = vmatprep.subr.bf16.mxu0 0
    %3877 = vmatpush1.bf16.msra.mxu0 0
    %3878 = vmatprep.subr.bf16.mxu0 0
    %3879 = vmatpush1.bf16.msra.mxu0 0
    %3880 = vmatprep.subr.bf16.mxu0 0
    %3881 = vmatpush1.bf16.msra.mxu0 0
    %3882 = vmatprep.subr.bf16.mxu0 0
    %3883 = vmatpush1.bf16.msra.mxu0 0
    %3884 = vmatprep.subr.bf16.mxu0 0
    %3885 = vmatpush1.bf16.msra.mxu0 0
    %3886 = vmatprep.subr.bf16.mxu0 0
    %3887 = vmatpush1.bf16.msra.mxu0 0
    %3888 = vmatprep.mubr.bf16.mxu0 0
    %3889 = vmatmul.mubr.bf16.gmra.mrb[0].mxu0 %v2372
    %v3890 = vpop.f32.mrb[0].mxu0
    %v3891 = vadd.f32 %v2614, %v3890
    %v3892 = vpop.f32.mrb[0].mxu0
    %v3893 = vadd.f32 %v2618, %v3892
    %v3894 = vpop.f32.mrb[0].mxu0
    %v3895 = vpop.f32.mrb[0].mxu0
    %3896 = vdwg.mxu0
    %3897 = vmatprep.subr.bf16.mxu0 %v3280
    %3898 = vmatpush1.bf16.msra.mxu0 %v3279
    %3899 = vmatprep.subr.bf16.mxu0 %v3304
    %3900 = vmatpush1.bf16.msra.mxu0 %v3303
    %3901 = vmatprep.subr.bf16.mxu0 %v3328
    %3902 = vmatpush1.bf16.msra.mxu0 %v3327
    %3903 = vmatprep.subr.bf16.mxu0 %v3352
    %3904 = vmatpush1.bf16.msra.mxu0 %v3351
    %3905 = vmatprep.subr.bf16.mxu0 %v3376
    %3906 = vmatpush1.bf16.msra.mxu0 %v3375
    %3907 = vmatprep.subr.bf16.mxu0 %v3400
    %3908 = vmatpush1.bf16.msra.mxu0 %v3399
    %3909 = vmatprep.subr.bf16.mxu0 %v3424
    %3910 = vmatpush1.bf16.msra.mxu0 %v3423
    %3911 = vmatprep.subr.bf16.mxu0 %v3448
    %3912 = vmatpush1.bf16.msra.mxu0 %v3447
    %3913 = vmatprep.subr.bf16.mxu0 0
    %3914 = vmatpush1.bf16.msra.mxu0 0
    %3915 = vmatprep.subr.bf16.mxu0 0
    %3916 = vmatpush1.bf16.msra.mxu0 0
    %3917 = vmatprep.subr.bf16.mxu0 0
    %3918 = vmatpush1.bf16.msra.mxu0 0
    %3919 = vmatprep.subr.bf16.mxu0 0
    %3920 = vmatpush1.bf16.msra.mxu0 0
    %3921 = vmatprep.subr.bf16.mxu0 0
    %3922 = vmatpush1.bf16.msra.mxu0 0
    %3923 = vmatprep.subr.bf16.mxu0 0
    %3924 = vmatpush1.bf16.msra.mxu0 0
    %3925 = vmatprep.subr.bf16.mxu0 0
    %3926 = vmatpush1.bf16.msra.mxu0 0
    %3927 = vmatprep.subr.bf16.mxu0 0
    %3928 = vmatpush1.bf16.msra.mxu0 0
    %3929 = vmatprep.mubr.bf16.mxu0 0
    %3930 = vmatmul.mubr.bf16.gmra.mrb[0].mxu0 %v2372
    %v3931 = vpop.f32.mrb[0].mxu0
    %v3932 = vadd.f32 %v2622, %v3931
    %v3933 = vpop.f32.mrb[0].mxu0
    %v3934 = vadd.f32 %v2626, %v3933
    %v3935 = vpop.f32.mrb[0].mxu0
    %v3936 = vpop.f32.mrb[0].mxu0
    %3937 = vdwg.mxu0
    %3938 = vmatprep.subr.bf16.mxu0 %v3282
    %3939 = vmatpush1.bf16.msra.mxu0 %v3281
    %3940 = vmatprep.subr.bf16.mxu0 %v3306
    %3941 = vmatpush1.bf16.msra.mxu0 %v3305
    %3942 = vmatprep.subr.bf16.mxu0 %v3330
    %3943 = vmatpush1.bf16.msra.mxu0 %v3329
    %3944 = vmatprep.subr.bf16.mxu0 %v3354
    %3945 = vmatpush1.bf16.msra.mxu0 %v3353
    %3946 = vmatprep.subr.bf16.mxu0 %v3378
    %3947 = vmatpush1.bf16.msra.mxu0 %v3377
    %3948 = vmatprep.subr.bf16.mxu0 %v3402
    %3949 = vmatpush1.bf16.msra.mxu0 %v3401
    %3950 = vmatprep.subr.bf16.mxu0 %v3426
    %3951 = vmatpush1.bf16.msra.mxu0 %v3425
    %3952 = vmatprep.subr.bf16.mxu0 %v3450
    %3953 = vmatpush1.bf16.msra.mxu0 %v3449
    %3954 = vmatprep.subr.bf16.mxu0 0
    %3955 = vmatpush1.bf16.msra.mxu0 0
    %3956 = vmatprep.subr.bf16.mxu0 0
    %3957 = vmatpush1.bf16.msra.mxu0 0
    %3958 = vmatprep.subr.bf16.mxu0 0
    %3959 = vmatpush1.bf16.msra.mxu0 0
    %3960 = vmatprep.subr.bf16.mxu0 0
    %3961 = vmatpush1.bf16.msra.mxu0 0
    %3962 = vmatprep.subr.bf16.mxu0 0
    %3963 = vmatpush1.bf16.msra.mxu0 0
    %3964 = vmatprep.subr.bf16.mxu0 0
    %3965 = vmatpush1.bf16.msra.mxu0 0
    %3966 = vmatprep.subr.bf16.mxu0 0
    %3967 = vmatpush1.bf16.msra.mxu0 0
    %3968 = vmatprep.subr.bf16.mxu0 0
    %3969 = vmatpush1.bf16.msra.mxu0 0
    %3970 = vmatprep.mubr.bf16.mxu0 0
    %3971 = vmatmul.mubr.bf16.gmra.mrb[0].mxu0 %v2372
    %v3972 = vpop.f32.mrb[0].mxu0
    %v3973 = vadd.f32 %v2630, %v3972
    %v3974 = vpop.f32.mrb[0].mxu0
    %v3975 = vadd.f32 %v2634, %v3974
    %v3976 = vpop.f32.mrb[0].mxu0
    %v3977 = vpop.f32.mrb[0].mxu0
    %3978 = vdwg.mxu0
    %3979 = vmatprep.subr.bf16.mxu0 %v3284
    %3980 = vmatpush1.bf16.msra.mxu0 %v3283
    %3981 = vmatprep.subr.bf16.mxu0 %v3308
    %3982 = vmatpush1.bf16.msra.mxu0 %v3307
    %3983 = vmatprep.subr.bf16.mxu0 %v3332
    %3984 = vmatpush1.bf16.msra.mxu0 %v3331
    %3985 = vmatprep.subr.bf16.mxu0 %v3356
    %3986 = vmatpush1.bf16.msra.mxu0 %v3355
    %3987 = vmatprep.subr.bf16.mxu0 %v3380
    %3988 = vmatpush1.bf16.msra.mxu0 %v3379
    %3989 = vmatprep.subr.bf16.mxu0 %v3404
    %3990 = vmatpush1.bf16.msra.mxu0 %v3403
    %3991 = vmatprep.subr.bf16.mxu0 %v3428
    %3992 = vmatpush1.bf16.msra.mxu0 %v3427
    %3993 = vmatprep.subr.bf16.mxu0 %v3452
    %3994 = vmatpush1.bf16.msra.mxu0 %v3451
    %3995 = vmatprep.subr.bf16.mxu0 0
    %3996 = vmatpush1.bf16.msra.mxu0 0
    %3997 = vmatprep.subr.bf16.mxu0 0
    %3998 = vmatpush1.bf16.msra.mxu0 0
    %3999 = vmatprep.subr.bf16.mxu0 0
    %4000 = vmatpush1.bf16.msra.mxu0 0
    %4001 = vmatprep.subr.bf16.mxu0 0
    %4002 = vmatpush1.bf16.msra.mxu0 0
    %4003 = vmatprep.subr.bf16.mxu0 0
    %4004 = vmatpush1.bf16.msra.mxu0 0
    %4005 = vmatprep.subr.bf16.mxu0 0
    %4006 = vmatpush1.bf16.msra.mxu0 0
    %4007 = vmatprep.subr.bf16.mxu0 0
    %4008 = vmatpush1.bf16.msra.mxu0 0
    %4009 = vmatprep.subr.bf16.mxu0 0
    %4010 = vmatpush1.bf16.msra.mxu0 0
    %4011 = vmatprep.mubr.bf16.mxu0 0
    %4012 = vmatmul.mubr.bf16.gmra.mrb[0].mxu0 %v2372
    %v4013 = vpop.f32.mrb[0].mxu0
    %v4014 = vadd.f32 %v2638, %v4013
    %v4015 = vpop.f32.mrb[0].mxu0
    %v4016 = vadd.f32 %v2642, %v4015
    %v4017 = vpop.f32.mrb[0].mxu0
    %v4018 = vpop.f32.mrb[0].mxu0
    %4019 = vdwg.mxu0
    %4020 = vmatprep.subr.bf16.mxu0 %v3286
    %4021 = vmatpush1.bf16.msra.mxu0 %v3285
    %4022 = vmatprep.subr.bf16.mxu0 %v3310
    %4023 = vmatpush1.bf16.msra.mxu0 %v3309
    %4024 = vmatprep.subr.bf16.mxu0 %v3334
    %4025 = vmatpush1.bf16.msra.mxu0 %v3333
    %4026 = vmatprep.subr.bf16.mxu0 %v3358
    %4027 = vmatpush1.bf16.msra.mxu0 %v3357
    %4028 = vmatprep.subr.bf16.mxu0 %v3382
    %4029 = vmatpush1.bf16.msra.mxu0 %v3381
    %4030 = vmatprep.subr.bf16.mxu0 %v3406
    %4031 = vmatpush1.bf16.msra.mxu0 %v3405
    %4032 = vmatprep.subr.bf16.mxu0 %v3430
    %4033 = vmatpush1.bf16.msra.mxu0 %v3429
    %4034 = vmatprep.subr.bf16.mxu0 %v3454
    %4035 = vmatpush1.bf16.msra.mxu0 %v3453
    %4036 = vmatprep.subr.bf16.mxu0 0
    %4037 = vmatpush1.bf16.msra.mxu0 0
    %4038 = vmatprep.subr.bf16.mxu0 0
    %4039 = vmatpush1.bf16.msra.mxu0 0
    %4040 = vmatprep.subr.bf16.mxu0 0
    %4041 = vmatpush1.bf16.msra.mxu0 0
    %4042 = vmatprep.subr.bf16.mxu0 0
    %4043 = vmatpush1.bf16.msra.mxu0 0
    %4044 = vmatprep.subr.bf16.mxu0 0
    %4045 = vmatpush1.bf16.msra.mxu0 0
    %4046 = vmatprep.subr.bf16.mxu0 0
    %4047 = vmatpush1.bf16.msra.mxu0 0
    %4048 = vmatprep.subr.bf16.mxu0 0
    %4049 = vmatpush1.bf16.msra.mxu0 0
    %4050 = vmatprep.subr.bf16.mxu0 0
    %4051 = vmatpush1.bf16.msra.mxu0 0
    %4052 = vmatprep.mubr.bf16.mxu0 0
    %4053 = vmatmul.mubr.bf16.gmra.mrb[0].mxu0 %v2372
    %v4054 = vpop.f32.mrb[0].mxu0
    %v4055 = vadd.f32 %v2646, %v4054
    %v4056 = vpop.f32.mrb[0].mxu0
    %v4057 = vadd.f32 %v2650, %v4056
    %v4058 = vpop.f32.mrb[0].mxu0
    %v4059 = vpop.f32.mrb[0].mxu0
    %4060 = vdwg.mxu0
    %4061 = vmatprep.subr.bf16.mxu0 %v3288
    %4062 = vmatpush1.bf16.msra.mxu0 %v3287
    %4063 = vmatprep.subr.bf16.mxu0 %v3312
    %4064 = vmatpush1.bf16.msra.mxu0 %v3311
    %4065 = vmatprep.subr.bf16.mxu0 %v3336
    %4066 = vmatpush1.bf16.msra.mxu0 %v3335
    %4067 = vmatprep.subr.bf16.mxu0 %v3360
    %4068 = vmatpush1.bf16.msra.mxu0 %v3359
    %4069 = vmatprep.subr.bf16.mxu0 %v3384
    %4070 = vmatpush1.bf16.msra.mxu0 %v3383
    %4071 = vmatprep.subr.bf16.mxu0 %v3408
    %4072 = vmatpush1.bf16.msra.mxu0 %v3407
    %4073 = vmatprep.subr.bf16.mxu0 %v3432
    %4074 = vmatpush1.bf16.msra.mxu0 %v3431
    %4075 = vmatprep.subr.bf16.mxu0 %v3456
    %4076 = vmatpush1.bf16.msra.mxu0 %v3455
    %4077 = vmatprep.subr.bf16.mxu0 0
    %4078 = vmatpush1.bf16.msra.mxu0 0
    %4079 = vmatprep.subr.bf16.mxu0 0
    %4080 = vmatpush1.bf16.msra.mxu0 0
    %4081 = vmatprep.subr.bf16.mxu0 0
    %4082 = vmatpush1.bf16.msra.mxu0 0
    %4083 = vmatprep.subr.bf16.mxu0 0
    %4084 = vmatpush1.bf16.msra.mxu0 0
    %4085 = vmatprep.subr.bf16.mxu0 0
    %4086 = vmatpush1.bf16.msra.mxu0 0
    %4087 = vmatprep.subr.bf16.mxu0 0
    %4088 = vmatpush1.bf16.msra.mxu0 0
    %4089 = vmatprep.subr.bf16.mxu0 0
    %4090 = vmatpush1.bf16.msra.mxu0 0
    %4091 = vmatprep.subr.bf16.mxu0 0
    %4092 = vmatpush1.bf16.msra.mxu0 0
    %4093 = vmatprep.mubr.bf16.mxu0 0
    %4094 = vmatmul.mubr.bf16.gmra.mrb[0].mxu0 %v2372
    %v4095 = vpop.f32.mrb[0].mxu0
    %v4096 = vadd.f32 %v2654, %v4095
    %v4097 = vpop.f32.mrb[0].mxu0
    %v4098 = vadd.f32 %v2658, %v4097
    %v4099 = vpop.f32.mrb[0].mxu0
    %v4100 = vpop.f32.mrb[0].mxu0
    %4101 = vdwg.mxu0
    %4102 = vmatprep.subr.bf16.mxu0 %v3290
    %4103 = vmatpush1.bf16.msra.mxu0 %v3289
    %4104 = vmatprep.subr.bf16.mxu0 %v3314
    %4105 = vmatpush1.bf16.msra.mxu0 %v3313
    %4106 = vmatprep.subr.bf16.mxu0 %v3338
    %4107 = vmatpush1.bf16.msra.mxu0 %v3337
    %4108 = vmatprep.subr.bf16.mxu0 %v3362
    %4109 = vmatpush1.bf16.msra.mxu0 %v3361
    %4110 = vmatprep.subr.bf16.mxu0 %v3386
    %4111 = vmatpush1.bf16.msra.mxu0 %v3385
    %4112 = vmatprep.subr.bf16.mxu0 %v3410
    %4113 = vmatpush1.bf16.msra.mxu0 %v3409
    %4114 = vmatprep.subr.bf16.mxu0 %v3434
    %4115 = vmatpush1.bf16.msra.mxu0 %v3433
    %4116 = vmatprep.subr.bf16.mxu0 %v3458
    %4117 = vmatpush1.bf16.msra.mxu0 %v3457
    %4118 = vmatprep.subr.bf16.mxu0 0
    %4119 = vmatpush1.bf16.msra.mxu0 0
    %4120 = vmatprep.subr.bf16.mxu0 0
    %4121 = vmatpush1.bf16.msra.mxu0 0
    %4122 = vmatprep.subr.bf16.mxu0 0
    %4123 = vmatpush1.bf16.msra.mxu0 0
    %4124 = vmatprep.subr.bf16.mxu0 0
    %4125 = vmatpush1.bf16.msra.mxu0 0
    %4126 = vmatprep.subr.bf16.mxu0 0
    %4127 = vmatpush1.bf16.msra.mxu0 0
    %4128 = vmatprep.subr.bf16.mxu0 0
    %4129 = vmatpush1.bf16.msra.mxu0 0
    %4130 = vmatprep.subr.bf16.mxu0 0
    %4131 = vmatpush1.bf16.msra.mxu0 0
    %4132 = vmatprep.subr.bf16.mxu0 0
    %4133 = vmatpush1.bf16.msra.mxu0 0
    %4134 = vmatprep.mubr.bf16.mxu0 0
    %4135 = vmatmul.mubr.bf16.gmra.mrb[0].mxu0 %v2372
    %v4136 = vpop.f32.mrb[0].mxu0
    %v4137 = vadd.f32 %v2662, %v4136
    %v4138 = vpop.f32.mrb[0].mxu0
    %v4139 = vadd.f32 %v2666, %v4138
    %v4140 = vpop.f32.mrb[0].mxu0
    %v4141 = vpop.f32.mrb[0].mxu0
    %4142 = vdwg.mxu0
    %v4143 = vsub.f32 0.0, %v3686
    %v4144 = vsub.f32 0.0, %v3688
    %v4145 = vsub.f32 0.0, %v3727
    %v4146 = vsub.f32 0.0, %v3729
    %v4147 = vsub.f32 0.0, %v3768
    %v4148 = vsub.f32 0.0, %v3770
    %v4149 = vsub.f32 0.0, %v3809
    %v4150 = vsub.f32 0.0, %v3811
    %v4151 = vsub.f32 0.0, %v3850
    %v4152 = vsub.f32 0.0, %v3852
    %v4153 = vsub.f32 0.0, %v3891
    %v4154 = vsub.f32 0.0, %v3893
    %v4155 = vsub.f32 0.0, %v3932
    %v4156 = vsub.f32 0.0, %v3934
    %v4157 = vsub.f32 0.0, %v3973
    %v4158 = vsub.f32 0.0, %v3975
    %v4159 = vsub.f32 0.0, %v4014
    %v4160 = vsub.f32 0.0, %v4016
    %v4161 = vsub.f32 0.0, %v4055
    %v4162 = vsub.f32 0.0, %v4057
    %v4163 = vsub.f32 0.0, %v4096
    %v4164 = vsub.f32 0.0, %v4098
    %v4165 = vsub.f32 0.0, %v4137
    %v4166 = vsub.f32 0.0, %v4139
    %v4167 = vmul.f32 %v4143, 1.442695
    %v4168 = vpow.pop %v4167
    %v4169 = vmul.f32 %v4144, 1.442695
    %v4170 = vpow.pop %v4169
    %v4171 = vmul.f32 %v4145, 1.442695
    %v4172 = vpow.pop %v4171
    %v4173 = vmul.f32 %v4146, 1.442695
    %v4174 = vpow.pop %v4173
    %v4175 = vmul.f32 %v4147, 1.442695
    %v4176 = vpow.pop %v4175
    %v4177 = vmul.f32 %v4148, 1.442695
    %v4178 = vpow.pop %v4177
    %v4179 = vmul.f32 %v4149, 1.442695
    %v4180 = vpow.pop %v4179
    %v4181 = vmul.f32 %v4150, 1.442695
    %v4182 = vpow.pop %v4181
    %v4183 = vmul.f32 %v4151, 1.442695
    %v4184 = vpow.pop %v4183
    %v4185 = vmul.f32 %v4152, 1.442695
    %v4186 = vpow.pop %v4185
    %v4187 = vmul.f32 %v4153, 1.442695
    %v4188 = vpow.pop %v4187
    %v4189 = vmul.f32 %v4154, 1.442695
    %v4190 = vpow.pop %v4189
    %v4191 = vmul.f32 %v4155, 1.442695
    %v4192 = vpow.pop %v4191
    %v4193 = vmul.f32 %v4156, 1.442695
    %v4194 = vpow.pop %v4193
    %v4195 = vmul.f32 %v4157, 1.442695
    %v4196 = vpow.pop %v4195
    %v4197 = vmul.f32 %v4158, 1.442695
    %v4198 = vpow.pop %v4197
    %v4199 = vmul.f32 %v4159, 1.442695
    %v4200 = vpow.pop %v4199
    %v4201 = vmul.f32 %v4160, 1.442695
    %v4202 = vpow.pop %v4201
    %v4203 = vmul.f32 %v4161, 1.442695
    %v4204 = vpow.pop %v4203
    %v4205 = vmul.f32 %v4162, 1.442695
    %v4206 = vpow.pop %v4205
    %v4207 = vmul.f32 %v4163, 1.442695
    %v4208 = vpow.pop %v4207
    %v4209 = vmul.f32 %v4164, 1.442695
    %v4210 = vpow.pop %v4209
    %v4211 = vmul.f32 %v4165, 1.442695
    %v4212 = vpow.pop %v4211
    %v4213 = vmul.f32 %v4166, 1.442695
    %v4214 = vpow.pop %v4213
    %v4215 = vadd.f32 %v4168, 1.0
    %v4216 = vadd.f32 %v4170, 1.0
    %v4217 = vadd.f32 %v4172, 1.0
    %v4218 = vadd.f32 %v4174, 1.0
    %v4219 = vadd.f32 %v4176, 1.0
    %v4220 = vadd.f32 %v4178, 1.0
    %v4221 = vadd.f32 %v4180, 1.0
    %v4222 = vadd.f32 %v4182, 1.0
    %v4223 = vadd.f32 %v4184, 1.0
    %v4224 = vadd.f32 %v4186, 1.0
    %v4225 = vadd.f32 %v4188, 1.0
    %v4226 = vadd.f32 %v4190, 1.0
    %v4227 = vadd.f32 %v4192, 1.0
    %v4228 = vadd.f32 %v4194, 1.0
    %v4229 = vadd.f32 %v4196, 1.0
    %v4230 = vadd.f32 %v4198, 1.0
    %v4231 = vadd.f32 %v4200, 1.0
    %v4232 = vadd.f32 %v4202, 1.0
    %v4233 = vadd.f32 %v4204, 1.0
    %v4234 = vadd.f32 %v4206, 1.0
    %v4235 = vadd.f32 %v4208, 1.0
    %v4236 = vadd.f32 %v4210, 1.0
    %v4237 = vadd.f32 %v4212, 1.0
    %v4238 = vadd.f32 %v4214, 1.0
    %v4239 = vrcp.pop %v4215
    %v4240 = vrcp.pop %v4216
    %v4241 = vrcp.pop %v4217
    %v4242 = vrcp.pop %v4218
    %v4243 = vrcp.pop %v4219
    %v4244 = vrcp.pop %v4220
    %v4245 = vrcp.pop %v4221
    %v4246 = vrcp.pop %v4222
    %v4247 = vrcp.pop %v4223
    %v4248 = vrcp.pop %v4224
    %v4249 = vrcp.pop %v4225
    %v4250 = vrcp.pop %v4226
    %v4251 = vrcp.pop %v4227
    %v4252 = vrcp.pop %v4228
    %v4253 = vrcp.pop %v4229
    %v4254 = vrcp.pop %v4230
    %v4255 = vrcp.pop %v4231
    %v4256 = vrcp.pop %v4232
    %v4257 = vrcp.pop %v4233
    %v4258 = vrcp.pop %v4234
    %v4259 = vrcp.pop %v4235
    %v4260 = vrcp.pop %v4236
    %v4261 = vrcp.pop %v4237
    %v4262 = vrcp.pop %v4238
    %v4263 = vmax.f32 %v4239, 0.0
    %v4264 = vmax.f32 %v4240, 0.0
    %v4265 = vmax.f32 %v4241, 0.0
    %v4266 = vmax.f32 %v4242, 0.0
    %v4267 = vmax.f32 %v4243, 0.0
    %v4268 = vmax.f32 %v4244, 0.0
    %v4269 = vmax.f32 %v4245, 0.0
    %v4270 = vmax.f32 %v4246, 0.0
    %v4271 = vmax.f32 %v4247, 0.0
    %v4272 = vmax.f32 %v4248, 0.0
    %v4273 = vmax.f32 %v4249, 0.0
    %v4274 = vmax.f32 %v4250, 0.0
    %v4275 = vmax.f32 %v4251, 0.0
    %v4276 = vmax.f32 %v4252, 0.0
    %v4277 = vmax.f32 %v4253, 0.0
    %v4278 = vmax.f32 %v4254, 0.0
    %v4279 = vmax.f32 %v4255, 0.0
    %v4280 = vmax.f32 %v4256, 0.0
    %v4281 = vmax.f32 %v4257, 0.0
    %v4282 = vmax.f32 %v4258, 0.0
    %v4283 = vmax.f32 %v4259, 0.0
    %v4284 = vmax.f32 %v4260, 0.0
    %v4285 = vmax.f32 %v4261, 0.0
    %v4286 = vmax.f32 %v4262, 0.0
    %v4287 = vmin.f32 %v4263, 1.0
    %v4288 = vmin.f32 %v4264, 1.0
    %v4289 = vmin.f32 %v4265, 1.0
    %v4290 = vmin.f32 %v4266, 1.0
    %v4291 = vmin.f32 %v4267, 1.0
    %v4292 = vmin.f32 %v4268, 1.0
    %v4293 = vmin.f32 %v4269, 1.0
    %v4294 = vmin.f32 %v4270, 1.0
    %v4295 = vmin.f32 %v4271, 1.0
    %v4296 = vmin.f32 %v4272, 1.0
    %v4297 = vmin.f32 %v4273, 1.0
    %v4298 = vmin.f32 %v4274, 1.0
    %v4299 = vmin.f32 %v4275, 1.0
    %v4300 = vmin.f32 %v4276, 1.0
    %v4301 = vmin.f32 %v4277, 1.0
    %v4302 = vmin.f32 %v4278, 1.0
    %v4303 = vmin.f32 %v4279, 1.0
    %v4304 = vmin.f32 %v4280, 1.0
    %v4305 = vmin.f32 %v4281, 1.0
    %v4306 = vmin.f32 %v4282, 1.0
    %v4307 = vmin.f32 %v4283, 1.0
    %v4308 = vmin.f32 %v4284, 1.0
    %v4309 = vmin.f32 %v4285, 1.0
    %v4310 = vmin.f32 %v4286, 1.0
    %v4311 = vpack.c.bf16 %v4287, %v4287
    %v4312 = vpack.c.bf16 %v4288, %v4288
    %v4313 = vpack.c.bf16 %v4289, %v4289
    %v4314 = vpack.c.bf16 %v4290, %v4290
    %v4315 = vpack.c.bf16 %v4291, %v4291
    %v4316 = vpack.c.bf16 %v4292, %v4292
    %v4317 = vpack.c.bf16 %v4293, %v4293
    %v4318 = vpack.c.bf16 %v4294, %v4294
    %v4319 = vpack.c.bf16 %v4295, %v4295
    %v4320 = vpack.c.bf16 %v4296, %v4296
    %v4321 = vpack.c.bf16 %v4297, %v4297
    %v4322 = vpack.c.bf16 %v4298, %v4298
    %v4323 = vpack.c.bf16 %v4299, %v4299
    %v4324 = vpack.c.bf16 %v4300, %v4300
    %v4325 = vpack.c.bf16 %v4301, %v4301
    %v4326 = vpack.c.bf16 %v4302, %v4302
    %v4327 = vpack.c.bf16 %v4303, %v4303
    %v4328 = vpack.c.bf16 %v4304, %v4304
    %v4329 = vpack.c.bf16 %v4305, %v4305
    %v4330 = vpack.c.bf16 %v4306, %v4306
    %v4331 = vpack.c.bf16 %v4307, %v4307
    %v4332 = vpack.c.bf16 %v4308, %v4308
    %v4333 = vpack.c.bf16 %v4309, %v4309
    %v4334 = vpack.c.bf16 %v4310, %v4310
    %v4359 = vunpack.c.l.b16 %v4311
    %v4360 = vunpack.c.l.b16 %v4312
    %v4361 = vunpack.c.l.b16 %v4313
    %v4362 = vunpack.c.l.b16 %v4314
    %v4363 = vunpack.c.l.b16 %v4315
    %v4364 = vunpack.c.l.b16 %v4316
    %v4365 = vunpack.c.l.b16 %v4317
    %v4366 = vunpack.c.l.b16 %v4318
    %v4367 = vunpack.c.l.b16 %v4319
    %v4368 = vunpack.c.l.b16 %v4320
    %v4369 = vunpack.c.l.b16 %v4321
    %v4370 = vunpack.c.l.b16 %v4322
    %v4371 = vunpack.c.l.b16 %v4323
    %v4372 = vunpack.c.l.b16 %v4324
    %v4373 = vunpack.c.l.b16 %v4325
    %v4374 = vunpack.c.l.b16 %v4326
    %v4375 = vunpack.c.l.b16 %v4327
    %v4376 = vunpack.c.l.b16 %v4328
    %v4377 = vunpack.c.l.b16 %v4329
    %v4378 = vunpack.c.l.b16 %v4330
    %v4379 = vunpack.c.l.b16 %v4331
    %v4380 = vunpack.c.l.b16 %v4332
    %v4381 = vunpack.c.l.b16 %v4333
    %v4382 = vunpack.c.l.b16 %v4334
    %v4383 = vpack.c.b16 %v4360, %v4359
    %v4384 = vpack.c.b16 %v4362, %v4361
    %v4385 = vpack.c.b16 %v4364, %v4363
    %v4386 = vpack.c.b16 %v4366, %v4365
    %v4387 = vpack.c.b16 %v4368, %v4367
    %v4388 = vpack.c.b16 %v4370, %v4369
    %v4389 = vpack.c.b16 %v4372, %v4371
    %v4390 = vpack.c.b16 %v4374, %v4373
    %v4391 = vpack.c.b16 %v4376, %v4375
    %v4392 = vpack.c.b16 %v4378, %v4377
    %v4393 = vpack.c.b16 %v4380, %v4379
    %v4394 = vpack.c.b16 %v4382, %v4381
    %4407 = vst [vmem:[#allocation13] sm:$0xff] %v4383
    %4408 = vst [vmem:[#allocation13 + $0x8] sm:$0xff] %v4384
    %4409 = vst [vmem:[#allocation13 + $0x10] sm:$0xff] %v4385
    %4410 = vst [vmem:[#allocation13 + $0x18] sm:$0xff] %v4386
    %4411 = vst [vmem:[#allocation13 + $0x20] sm:$0xff] %v4387
    %4412 = vst [vmem:[#allocation13 + $0x28] sm:$0xff] %v4388
    %4413 = vst [vmem:[#allocation13 + $0x30] sm:$0xff] %v4389
    %4414 = vst [vmem:[#allocation13 + $0x38] sm:$0xff] %v4390
    %4415 = vst [vmem:[#allocation13 + $0x40] sm:$0xff] %v4391
    %4416 = vst [vmem:[#allocation13 + $0x48] sm:$0xff] %v4392
    %4417 = vst [vmem:[#allocation13 + $0x50] sm:$0xff] %v4393
    %4418 = vst [vmem:[#allocation13 + $0x58] sm:$0xff] %v4394
    %4419 = vst [vmem:[%s11] sm:$0xff] %v2296
    // Predicated region
    $region66: #{vae_forward.1} parent=1 // pred_check
      _
    $region67: #{vae_forward.1} parent=1 // pred_check_branch
      %4421 = sbr.rel (0) target = $region69
    $region68: #{vae_forward.1} parent=1 // pred_region
      %s4423 = ssub.s32 1536, 1536
      %4424 = vsyncadd [#allocation4], %s4423
      %s4426 = sshll.u32 [#allocation13], 4
      %s4427 = int_to_ptr.vmem [resolvable:$true] %s4426
      %4429 = dma.vmem_to_hbm [thread:$0]  %s4427, 1536, %s10, [#allocation4]
    $region69: #{vae_forward.1} parent=1 // pred_fallthru
      _
    // Predicated region
    $region70: #{vae_forward.1} parent=1 // pred_check
      _
    $region71: #{vae_forward.1} parent=1 // pred_check_branch
      %4431 = sbr.rel (0) target = $region73
    $region72: #{vae_forward.1} parent=1 // pred_region
      _
    $region73: #{vae_forward.1} parent=1 // pred_fallthru
      _
    // Predicated region
    $region74: #{vae_forward.1} parent=1 // pred_check
      _
    $region75: #{vae_forward.1} parent=1 // pred_check_branch
      %4433 = sbr.rel (0) target = $region77
    $region76: #{vae_forward.1} parent=1 // pred_region
      %4434 = dma.done [#allocation4], 1536
    $region77: #{vae_forward.1} parent=1 // pred_fallthru
      _
    // Predicated region
    $region78: #{vae_forward.1} parent=1 // pred_check
      _
    $region79: #{vae_forward.1} parent=1 // pred_check_branch
      %4436 = sbr.rel (0) target = $region81
    $region80: #{vae_forward.1} parent=1 // pred_region
      _
    $region81: #{vae_forward.1} parent=1 // pred_fallthru
      _
    %4437 = vsyncpa [#allocation3], 1
    %4438 = vsyncpa [#allocation6], 1
    %4439 = vsyncpa [#allocation9], 1
    %4440 = vsyncpa [#allocation12], 1
    %4441 = vsyncpa [#allocation4], 1

</llo_original>
